<compile_context>
chip_gen: v6e
topology: v6e:2x2x1
jax: 0.10.0
libtpu: 0.0.40
codegen_flags: <defaults>
</compile_context>

<pallas_src>
import jax
import jax.numpy as jnp
from jax import lax
from jax.experimental import pallas as pl
from jax.experimental.pallas import tpu as pltpu

# --- constants mirroring learning_utils in the original repo (synthetic) ---
UNIVERSAL_ACTION_OFFSET = 2
PADDING_ACTION = -1

# --- synthetic model config (derived the same way __init__ does) ---
NUM_OF_RULES = 128                                   # sum(len(rules) for rules in rules_dict)
ACTION_EMBEDDING_SIZE = (NUM_OF_RULES - 1) // 4 + 1  # -> 32
HIDDEN_SIZE = ACTION_EMBEDDING_SIZE                  # -> 32
INPUT_SIZE = 2 * ACTION_EMBEDDING_SIZE               # -> 64
VOCAB = NUM_OF_RULES + UNIVERSAL_ACTION_OFFSET       # -> 130
NUM_LAYERS = 2
SEQ_LEN = 8


def tree_disc_kernel(actions_ref, parents_ref,            # SMEM int32 (T,)
                     emb_ref,                             # VMEM (V, E)
                     wih0a_ref, wih0p_ref, whh0_ref,      # layer-0 weights
                     b0gx_ref, bhn0_ref,                  # layer-0 merged biases
                     wih1_ref, whh1_ref,                  # layer-1 weights
                     b1rz_ref, bin1_ref, bhn1_ref,        # layer-1 merged biases
                     wout_ref, bout_ref,                  # output head
                     out_ref,                             # VMEM (T, 2)
                     xa_s, xp_s, gx0_s, h1all_s):         # VMEM scratch
    H = whh0_ref.shape[0]
    T = out_ref.shape[0]

    # ---- Prologue 1: gather all action/parent embeddings (off the recurrence) ----
    for t in range(T):
        a = actions_ref[t]
        p = parents_ref[t]
        xa_s[pl.ds(t, 1), :] = emb_ref[pl.ds(a, 1), :]
        xp_s[pl.ds(t, 1), :] = emb_ref[pl.ds(p, 1), :]

    # ---- Prologue 2: layer-0 input projection for all T steps at once ----
    #   gx0_all = E_a @ Wih0[:E] + E_p @ Wih0[E:] + (bih0 + [bhh0_r, bhh0_z, 0])
    gx0_s[...] = (jnp.dot(xa_s[...], wih0a_ref[...], preferred_element_type=jnp.float32)
                  + jnp.dot(xp_s[...], wih0p_ref[...], preferred_element_type=jnp.float32)
                  + b0gx_ref[...])

    # ---- Hoisted loop-invariant weight/bias loads (stay resident in vregs) ----
    whh0 = whh0_ref[...]
    bhn0 = bhn0_ref[...]
    wih1 = wih1_ref[...]
    whh1 = whh1_ref[...]
    b1rz = b1rz_ref[...]
    bin1 = bin1_ref[...]
    bhn1 = bhn1_ref[...]

    h0 = jnp.zeros((1, H), jnp.float32)
    h1 = jnp.zeros((1, H), jnp.float32)

    # ---- Recurrence: fully unrolled (T is a Python constant), hidden state in vregs ----
    # PyTorch GRU, gate order (r, z, n):
    #   r = sig(Wir x + bir + Whr h + bhr)
    #   z = sig(Wiz x + biz + Whz h + bhz)
    #   n = tanh(Win x + bin + r * (Whn h + bhn))
    #   h' = (1 - z) * n + z * h
    for t in range(T):
        # layer 0 (bih0 and bhh0 for the r/z gates already folded into gx0)
        gx0 = gx0_s[pl.ds(t, 1), :]                                    # (1, 3H)
        gh0 = jnp.dot(h0, whh0, preferred_element_type=jnp.float32)
        rz0 = jax.nn.sigmoid(gx0[:, 0:2 * H] + gh0[:, 0:2 * H])        # fused r,z sigmoid
        r0 = rz0[:, 0:H]
        z0 = rz0[:, H:2 * H]
        n0 = jnp.tanh(gx0[:, 2 * H:3 * H] + r0 * (gh0[:, 2 * H:3 * H] + bhn0))
        h0 = (1.0 - z0) * n0 + z0 * h0

        # layer 1
        gx1 = jnp.dot(h0, wih1, preferred_element_type=jnp.float32)
        gh1 = jnp.dot(h1, whh1, preferred_element_type=jnp.float32)
        rz1 = jax.nn.sigmoid(gx1[:, 0:2 * H] + gh1[:, 0:2 * H] + b1rz)
        r1 = rz1[:, 0:H]
        z1 = rz1[:, H:2 * H]
        n1 = jnp.tanh(gx1[:, 2 * H:3 * H] + bin1 + r1 * (gh1[:, 2 * H:3 * H] + bhn1))
        h1 = (1.0 - z1) * n1 + z1 * h1

        h1all_s[pl.ds(t, 1), :] = h1          # write-only here; consumed in the epilogue

    # ---- Epilogue: output head + log_softmax over all T rows at once ----
    logits = (jnp.dot(h1all_s[...], wout_ref[...], preferred_element_type=jnp.float32)
              + bout_ref[...])                                         # (T, 2)
    m = jnp.max(logits, axis=-1, keepdims=True)
    lse = m + jnp.log(jnp.sum(jnp.exp(logits - m), axis=-1, keepdims=True))
    out_ref[...] = logits - lse


def tree_discriminator_forward(actions, parent_actions, params):
    """single=True path: actions/parent_actions are (T,) int arrays; returns (T, 2) log-probs."""
    T = actions.shape[0]
    H = HIDDEN_SIZE
    E = ACTION_EMBEDDING_SIZE

    # offset + clamp (guards against unchecked OOB embedding reads inside the kernel)
    actions_i = jnp.clip(actions.astype(jnp.int32) + UNIVERSAL_ACTION_OFFSET, 0, VOCAB - 1)
    parents_i = jnp.clip(parent_actions.astype(jnp.int32) + UNIVERSAL_ACTION_OFFSET, 0, VOCAB - 1)

    # pre-merge biases:
    #   layer 0: bih0 folded into the hoisted input projection, plus bhh0 for r/z gates;
    #            bhn0 stays separate (gated by r)
    #   layer 1: (bih1 + bhh1) for r/z gates; bin1 and bhn1 separate (bhn1 gated by r)
    zeros_h = jnp.zeros((1, H), jnp.float32)
    b0gx = params["bih0"] + jnp.concatenate([params["bhh0"][:, :2 * H], zeros_h], axis=-1)
    bhn0 = params["bhh0"][:, 2 * H:3 * H]
    b1rz = params["bih1"][:, :2 * H] + params["bhh1"][:, :2 * H]
    bin1 = params["bih1"][:, 2 * H:3 * H]
    bhn1 = params["bhh1"][:, 2 * H:3 * H]
    wih0a = params["wih0"][:E, :]        # action-embedding half of Wih0
    wih0p = params["wih0"][E:, :]        # parent-embedding half of Wih0

    smem = pl.BlockSpec(memory_space=pltpu.MemorySpace.SMEM)
    vmem = pl.BlockSpec(memory_space=pltpu.MemorySpace.VMEM)

    return pl.pallas_call(
        tree_disc_kernel,
        out_shape=jax.ShapeDtypeStruct((T, 2), jnp.float32),
        in_specs=[smem, smem] + [vmem] * 13,
        out_specs=vmem,
        scratch_shapes=[pltpu.VMEM((T, E), jnp.float32),       # gathered action embeddings
                        pltpu.VMEM((T, E), jnp.float32),       # gathered parent embeddings
                        pltpu.VMEM((T, 3 * H), jnp.float32),   # hoisted layer-0 gate inputs
                        pltpu.VMEM((T, H), jnp.float32)],      # all h1_t for the epilogue
    )(actions_i, parents_i, params["emb"],
      wih0a, wih0p, params["whh0"], b0gx, bhn0,
      params["wih1"], params["whh1"], b1rz, bin1, bhn1,
      params["wout"], params["bout"])


def reference_forward(actions, parent_actions, params):
    """Pure-JAX reference of the PyTorch single=True path (correctness check)."""
    H = HIDDEN_SIZE
    hp = lax.Precision.HIGHEST
    a = jnp.clip(actions.astype(jnp.int32) + UNIVERSAL_ACTION_OFFSET, 0, VOCAB - 1)
    p = jnp.clip(parent_actions.astype(jnp.int32) + UNIVERSAL_ACTION_OFFSET, 0, VOCAB - 1)
    x = jnp.concatenate([params["emb"][a], params["emb"][p]], axis=-1)   # (T, 2E)

    def cell(xt, h, wih, whh, bih, bhh):
        gx = jnp.dot(xt, wih, precision=hp) + bih
        gh = jnp.dot(h, whh, precision=hp) + bhh
        r = jax.nn.sigmoid(gx[:, :H] + gh[:, :H])
        z = jax.nn.sigmoid(gx[:, H:2 * H] + gh[:, H:2 * H])
        n = jnp.tanh(gx[:, 2 * H:] + r * gh[:, 2 * H:])
        return (1.0 - z) * n + z * h

    h0 = jnp.zeros((1, H), jnp.float32)
    h1 = jnp.zeros((1, H), jnp.float32)
    outs = []
    for t in range(x.shape[0]):
        h0 = cell(x[t:t + 1], h0, params["wih0"], params["whh0"], params["bih0"], params["bhh0"])
        h1 = cell(h0, h1, params["wih1"], params["whh1"], params["bih1"], params["bhh1"])
        outs.append(h1)
    hs = jnp.concatenate(outs, axis=0)
    logits = jnp.dot(hs, params["wout"], precision=hp) + params["bout"]
    return jax.nn.log_softmax(logits, axis=-1)


def init_params(key):
    """Deterministic parameter init (shapes match nn.GRU / nn.Embedding / nn.Linear)."""
    ks = jax.random.split(key, 12)
    H, E, I = HIDDEN_SIZE, ACTION_EMBEDDING_SIZE, INPUT_SIZE
    k = 1.0 / jnp.sqrt(H)

    def u(rk, shape):
        return jax.random.uniform(rk, shape, jnp.float32, minval=-k, maxval=k)

    emb = jax.random.normal(ks[0], (VOCAB, E), jnp.float32)
    padding_idx = PADDING_ACTION + UNIVERSAL_ACTION_OFFSET
    emb = emb.at[padding_idx].set(0.0)                   # padding_idx row is zeroed

    params = dict(
        emb=emb,
        # GRU layer 0: weight_ih_l0 (3H, I) stored transposed -> (I, 3H), gate order (r,z,n)
        wih0=u(ks[1], (I, 3 * H)),
        whh0=u(ks[2], (H, 3 * H)),
        bih0=u(ks[3], (1, 3 * H)),
        bhh0=u(ks[4], (1, 3 * H)),
        # GRU layer 1: input is H
        wih1=u(ks[5], (H, 3 * H)),
        whh1=u(ks[6], (H, 3 * H)),
        bih1=u(ks[7], (1, 3 * H)),
        bhh1=u(ks[8], (1, 3 * H)),
        # truth_layer: Linear(H, 2) stored transposed -> (H, 2)
        wout=u(ks[9], (H, 2)),
        bout=u(ks[10], (1, 2)),
    )
    return params


if __name__ == "__main__":
    key = jax.random.PRNGKey(0)
    pkey, akey, bkey = jax.random.split(key, 3)

    params = init_params(pkey)

    # Small deterministic example inputs (single=True path, effective batch = 1).
    # parent actions may include PADDING_ACTION (-1) e.g. for the root.
    actions = jax.random.randint(akey, (SEQ_LEN,), 0, NUM_OF_RULES, dtype=jnp.int32)
    parent_actions = jax.random.randint(bkey, (SEQ_LEN,), -1, NUM_OF_RULES, dtype=jnp.int32)

    # TODO(synk): the batched (single=False) path uses pack_padded_sequence; only the
    # single-sequence path is implemented (the module docstring states batch size is 1).
    log_probs = tree_discriminator_forward(actions, parent_actions, params)
    log_probs = jax.block_until_ready(log_probs)

    ref = reference_forward(actions, parent_actions, params)

    assert log_probs.shape == (SEQ_LEN, 2)
    assert bool(jnp.all(jnp.isfinite(log_probs)))
    # rows of exp(log_softmax) must sum to 1
    assert bool(jnp.allclose(jnp.sum(jnp.exp(log_probs), axis=-1), 1.0, atol=1e-5))
    # match the pure-JAX reference of the PyTorch forward
    assert bool(jnp.allclose(log_probs, ref, atol=1e-3, rtol=1e-3))

    print("KERNEL_OK")
</pallas_src>

<mosaic_0001>
module attributes {stable_mosaic.version = 11 : i64} {
  func.func @tree_disc_kernel(%arg0: memref<8xi32, #tpu.memory_space<smem>>, %arg1: memref<8xi32, #tpu.memory_space<smem>>, %arg2: memref<130x32xf32, #tpu.memory_space<vmem>>, %arg3: memref<32x96xf32, #tpu.memory_space<vmem>>, %arg4: memref<32x96xf32, #tpu.memory_space<vmem>>, %arg5: memref<32x96xf32, #tpu.memory_space<vmem>>, %arg6: memref<1x96xf32, #tpu.memory_space<vmem>>, %arg7: memref<1x32xf32, #tpu.memory_space<vmem>>, %arg8: memref<32x96xf32, #tpu.memory_space<vmem>>, %arg9: memref<32x96xf32, #tpu.memory_space<vmem>>, %arg10: memref<1x64xf32, #tpu.memory_space<vmem>>, %arg11: memref<1x32xf32, #tpu.memory_space<vmem>>, %arg12: memref<1x32xf32, #tpu.memory_space<vmem>>, %arg13: memref<32x2xf32, #tpu.memory_space<vmem>>, %arg14: memref<1x2xf32, #tpu.memory_space<vmem>>, %arg15: memref<8x2xf32, #tpu.memory_space<vmem>>, %arg16: memref<8x32xf32, #tpu.memory_space<vmem>>, %arg17: memref<8x32xf32, #tpu.memory_space<vmem>>, %arg18: memref<8x96xf32, #tpu.memory_space<vmem>>, %arg19: memref<8x32xf32, #tpu.memory_space<vmem>>) attributes {dimension_semantics = [], scalar_prefetch = 0 : i64, scratch_operands = 4 : i64, tpu.core_type = #tpu.core_type<tc>} {
    %c0 = arith.constant 0 : index
    %0 = memref.load %arg0[%c0] : memref<8xi32, #tpu.memory_space<smem>>
    %c0_0 = arith.constant 0 : index
    %1 = memref.load %arg1[%c0_0] : memref<8xi32, #tpu.memory_space<smem>>
    %2 = arith.index_cast %0 : i32 to index
    %c0_1 = arith.constant 0 : index
    %3 = vector.load %arg2[%2, %c0_1] : memref<130x32xf32, #tpu.memory_space<vmem>>, vector<1x32xf32>
    %c0_2 = arith.constant 0 : index
    %c0_3 = arith.constant 0 : index
    %4 = vector.load %arg16[%c0_2, %c0_3] : memref<8x32xf32, #tpu.memory_space<vmem>>, vector<1x32xf32>
    tpu.vector_store %arg16[%c0_2, %c0_3], %3 {strides = array<i32>} : memref<8x32xf32, #tpu.memory_space<vmem>>, vector<1x32xf32>,
    %5 = arith.index_cast %1 : i32 to index
    %c0_4 = arith.constant 0 : index
    %6 = vector.load %arg2[%5, %c0_4] : memref<130x32xf32, #tpu.memory_space<vmem>>, vector<1x32xf32>
    %c0_5 = arith.constant 0 : index
    %c0_6 = arith.constant 0 : index
    %7 = vector.load %arg17[%c0_5, %c0_6] : memref<8x32xf32, #tpu.memory_space<vmem>>, vector<1x32xf32>
    tpu.vector_store %arg17[%c0_5, %c0_6], %6 {strides = array<i32>} : memref<8x32xf32, #tpu.memory_space<vmem>>, vector<1x32xf32>,
    %c1 = arith.constant 1 : index
    %8 = memref.load %arg0[%c1] : memref<8xi32, #tpu.memory_space<smem>>
    %c1_7 = arith.constant 1 : index
    %9 = memref.load %arg1[%c1_7] : memref<8xi32, #tpu.memory_space<smem>>
    %10 = arith.index_cast %8 : i32 to index
    %c0_8 = arith.constant 0 : index
    %11 = vector.load %arg2[%10, %c0_8] : memref<130x32xf32, #tpu.memory_space<vmem>>, vector<1x32xf32>
    %c1_9 = arith.constant 1 : index
    %c0_10 = arith.constant 0 : index
    %12 = vector.load %arg16[%c1_9, %c0_10] : memref<8x32xf32, #tpu.memory_space<vmem>>, vector<1x32xf32>
    tpu.vector_store %arg16[%c1_9, %c0_10], %11 {strides = array<i32>} : memref<8x32xf32, #tpu.memory_space<vmem>>, vector<1x32xf32>,
    %13 = arith.index_cast %9 : i32 to index
    %c0_11 = arith.constant 0 : index
    %14 = vector.load %arg2[%13, %c0_11] : memref<130x32xf32, #tpu.memory_space<vmem>>, vector<1x32xf32>
    %c1_12 = arith.constant 1 : index
    %c0_13 = arith.constant 0 : index
    %15 = vector.load %arg17[%c1_12, %c0_13] : memref<8x32xf32, #tpu.memory_space<vmem>>, vector<1x32xf32>
    tpu.vector_store %arg17[%c1_12, %c0_13], %14 {strides = array<i32>} : memref<8x32xf32, #tpu.memory_space<vmem>>, vector<1x32xf32>,
    %c2 = arith.constant 2 : index
    %16 = memref.load %arg0[%c2] : memref<8xi32, #tpu.memory_space<smem>>
    %c2_14 = arith.constant 2 : index
    %17 = memref.load %arg1[%c2_14] : memref<8xi32, #tpu.memory_space<smem>>
    %18 = arith.index_cast %16 : i32 to index
    %c0_15 = arith.constant 0 : index
    %19 = vector.load %arg2[%18, %c0_15] : memref<130x32xf32, #tpu.memory_space<vmem>>, vector<1x32xf32>
    %c2_16 = arith.constant 2 : index
    %c0_17 = arith.constant 0 : index
    %20 = vector.load %arg16[%c2_16, %c0_17] : memref<8x32xf32, #tpu.memory_space<vmem>>, vector<1x32xf32>
    tpu.vector_store %arg16[%c2_16, %c0_17], %19 {strides = array<i32>} : memref<8x32xf32, #tpu.memory_space<vmem>>, vector<1x32xf32>,
    %21 = arith.index_cast %17 : i32 to index
    %c0_18 = arith.constant 0 : index
    %22 = vector.load %arg2[%21, %c0_18] : memref<130x32xf32, #tpu.memory_space<vmem>>, vector<1x32xf32>
    %c2_19 = arith.constant 2 : index
    %c0_20 = arith.constant 0 : index
    %23 = vector.load %arg17[%c2_19, %c0_20] : memref<8x32xf32, #tpu.memory_space<vmem>>, vector<1x32xf32>
    tpu.vector_store %arg17[%c2_19, %c0_20], %22 {strides = array<i32>} : memref<8x32xf32, #tpu.memory_space<vmem>>, vector<1x32xf32>,
    %c3 = arith.constant 3 : index
    %24 = memref.load %arg0[%c3] : memref<8xi32, #tpu.memory_space<smem>>
    %c3_21 = arith.constant 3 : index
    %25 = memref.load %arg1[%c3_21] : memref<8xi32, #tpu.memory_space<smem>>
    %26 = arith.index_cast %24 : i32 to index
    %c0_22 = arith.constant 0 : index
    %27 = vector.load %arg2[%26, %c0_22] : memref<130x32xf32, #tpu.memory_space<vmem>>, vector<1x32xf32>
    %c3_23 = arith.constant 3 : index
    %c0_24 = arith.constant 0 : index
    %28 = vector.load %arg16[%c3_23, %c0_24] : memref<8x32xf32, #tpu.memory_space<vmem>>, vector<1x32xf32>
    tpu.vector_store %arg16[%c3_23, %c0_24], %27 {strides = array<i32>} : memref<8x32xf32, #tpu.memory_space<vmem>>, vector<1x32xf32>,
    %29 = arith.index_cast %25 : i32 to index
    %c0_25 = arith.constant 0 : index
    %30 = vector.load %arg2[%29, %c0_25] : memref<130x32xf32, #tpu.memory_space<vmem>>, vector<1x32xf32>
    %c3_26 = arith.constant 3 : index
    %c0_27 = arith.constant 0 : index
    %31 = vector.load %arg17[%c3_26, %c0_27] : memref<8x32xf32, #tpu.memory_space<vmem>>, vector<1x32xf32>
    tpu.vector_store %arg17[%c3_26, %c0_27], %30 {strides = array<i32>} : memref<8x32xf32, #tpu.memory_space<vmem>>, vector<1x32xf32>,
    %c4 = arith.constant 4 : index
    %32 = memref.load %arg0[%c4] : memref<8xi32, #tpu.memory_space<smem>>
    %c4_28 = arith.constant 4 : index
    %33 = memref.load %arg1[%c4_28] : memref<8xi32, #tpu.memory_space<smem>>
    %34 = arith.index_cast %32 : i32 to index
    %c0_29 = arith.constant 0 : index
    %35 = vector.load %arg2[%34, %c0_29] : memref<130x32xf32, #tpu.memory_space<vmem>>, vector<1x32xf32>
    %c4_30 = arith.constant 4 : index
    %c0_31 = arith.constant 0 : index
    %36 = vector.load %arg16[%c4_30, %c0_31] : memref<8x32xf32, #tpu.memory_space<vmem>>, vector<1x32xf32>
    tpu.vector_store %arg16[%c4_30, %c0_31], %35 {strides = array<i32>} : memref<8x32xf32, #tpu.memory_space<vmem>>, vector<1x32xf32>,
    %37 = arith.index_cast %33 : i32 to index
    %c0_32 = arith.constant 0 : index
    %38 = vector.load %arg2[%37, %c0_32] : memref<130x32xf32, #tpu.memory_space<vmem>>, vector<1x32xf32>
    %c4_33 = arith.constant 4 : index
    %c0_34 = arith.constant 0 : index
    %39 = vector.load %arg17[%c4_33, %c0_34] : memref<8x32xf32, #tpu.memory_space<vmem>>, vector<1x32xf32>
    tpu.vector_store %arg17[%c4_33, %c0_34], %38 {strides = array<i32>} : memref<8x32xf32, #tpu.memory_space<vmem>>, vector<1x32xf32>,
    %c5 = arith.constant 5 : index
    %40 = memref.load %arg0[%c5] : memref<8xi32, #tpu.memory_space<smem>>
    %c5_35 = arith.constant 5 : index
    %41 = memref.load %arg1[%c5_35] : memref<8xi32, #tpu.memory_space<smem>>
    %42 = arith.index_cast %40 : i32 to index
    %c0_36 = arith.constant 0 : index
    %43 = vector.load %arg2[%42, %c0_36] : memref<130x32xf32, #tpu.memory_space<vmem>>, vector<1x32xf32>
    %c5_37 = arith.constant 5 : index
    %c0_38 = arith.constant 0 : index
    %44 = vector.load %arg16[%c5_37, %c0_38] : memref<8x32xf32, #tpu.memory_space<vmem>>, vector<1x32xf32>
    tpu.vector_store %arg16[%c5_37, %c0_38], %43 {strides = array<i32>} : memref<8x32xf32, #tpu.memory_space<vmem>>, vector<1x32xf32>,
    %45 = arith.index_cast %41 : i32 to index
    %c0_39 = arith.constant 0 : index
    %46 = vector.load %arg2[%45, %c0_39] : memref<130x32xf32, #tpu.memory_space<vmem>>, vector<1x32xf32>
    %c5_40 = arith.constant 5 : index
    %c0_41 = arith.constant 0 : index
    %47 = vector.load %arg17[%c5_40, %c0_41] : memref<8x32xf32, #tpu.memory_space<vmem>>, vector<1x32xf32>
    tpu.vector_store %arg17[%c5_40, %c0_41], %46 {strides = array<i32>} : memref<8x32xf32, #tpu.memory_space<vmem>>, vector<1x32xf32>,
    %c6 = arith.constant 6 : index
    %48 = memref.load %arg0[%c6] : memref<8xi32, #tpu.memory_space<smem>>
    %c6_42 = arith.constant 6 : index
    %49 = memref.load %arg1[%c6_42] : memref<8xi32, #tpu.memory_space<smem>>
    %50 = arith.index_cast %48 : i32 to index
    %c0_43 = arith.constant 0 : index
    %51 = vector.load %arg2[%50, %c0_43] : memref<130x32xf32, #tpu.memory_space<vmem>>, vector<1x32xf32>
    %c6_44 = arith.constant 6 : index
    %c0_45 = arith.constant 0 : index
    %52 = vector.load %arg16[%c6_44, %c0_45] : memref<8x32xf32, #tpu.memory_space<vmem>>, vector<1x32xf32>
    tpu.vector_store %arg16[%c6_44, %c0_45], %51 {strides = array<i32>} : memref<8x32xf32, #tpu.memory_space<vmem>>, vector<1x32xf32>,
    %53 = arith.index_cast %49 : i32 to index
    %c0_46 = arith.constant 0 : index
    %54 = vector.load %arg2[%53, %c0_46] : memref<130x32xf32, #tpu.memory_space<vmem>>, vector<1x32xf32>
    %c6_47 = arith.constant 6 : index
    %c0_48 = arith.constant 0 : index
    %55 = vector.load %arg17[%c6_47, %c0_48] : memref<8x32xf32, #tpu.memory_space<vmem>>, vector<1x32xf32>
    tpu.vector_store %arg17[%c6_47, %c0_48], %54 {strides = array<i32>} : memref<8x32xf32, #tpu.memory_space<vmem>>, vector<1x32xf32>,
    %c7 = arith.constant 7 : index
    %56 = memref.load %arg0[%c7] : memref<8xi32, #tpu.memory_space<smem>>
    %c7_49 = arith.constant 7 : index
    %57 = memref.load %arg1[%c7_49] : memref<8xi32, #tpu.memory_space<smem>>
    %58 = arith.index_cast %56 : i32 to index
    %c0_50 = arith.constant 0 : index
    %59 = vector.load %arg2[%58, %c0_50] : memref<130x32xf32, #tpu.memory_space<vmem>>, vector<1x32xf32>
    %c7_51 = arith.constant 7 : index
    %c0_52 = arith.constant 0 : index
    %60 = vector.load %arg16[%c7_51, %c0_52] : memref<8x32xf32, #tpu.memory_space<vmem>>, vector<1x32xf32>
    tpu.vector_store %arg16[%c7_51, %c0_52], %59 {strides = array<i32>} : memref<8x32xf32, #tpu.memory_space<vmem>>, vector<1x32xf32>,
    %61 = arith.index_cast %57 : i32 to index
    %c0_53 = arith.constant 0 : index
    %62 = vector.load %arg2[%61, %c0_53] : memref<130x32xf32, #tpu.memory_space<vmem>>, vector<1x32xf32>
    %c7_54 = arith.constant 7 : index
    %c0_55 = arith.constant 0 : index
    %63 = vector.load %arg17[%c7_54, %c0_55] : memref<8x32xf32, #tpu.memory_space<vmem>>, vector<1x32xf32>
    tpu.vector_store %arg17[%c7_54, %c0_55], %62 {strides = array<i32>} : memref<8x32xf32, #tpu.memory_space<vmem>>, vector<1x32xf32>,
    %c0_56 = arith.constant 0 : index
    %c0_57 = arith.constant 0 : index
    %64 = vector.load %arg16[%c0_56, %c0_57] : memref<8x32xf32, #tpu.memory_space<vmem>>, vector<8x32xf32>
    %c0_58 = arith.constant 0 : index
    %c0_59 = arith.constant 0 : index
    %65 = vector.load %arg3[%c0_58, %c0_59] : memref<32x96xf32, #tpu.memory_space<vmem>>, vector<32x96xf32>
    %cst = arith.constant dense<0.000000e+00> : vector<8x96xf32>
    %66 = tpu.matmul %64, %65, %cst {dimension_numbers = #tpu.dot_dimension_numbers<[1], [0], [0], [1], [0, 0, 1, 1], [], []>} : vector<8x32xf32>, vector<32x96xf32>, vector<8x96xf32> -> vector<8x96xf32>
    %c0_60 = arith.constant 0 : index
    %c0_61 = arith.constant 0 : index
    %67 = vector.load %arg17[%c0_60, %c0_61] : memref<8x32xf32, #tpu.memory_space<vmem>>, vector<8x32xf32>
    %c0_62 = arith.constant 0 : index
    %c0_63 = arith.constant 0 : index
    %68 = vector.load %arg4[%c0_62, %c0_63] : memref<32x96xf32, #tpu.memory_space<vmem>>, vector<32x96xf32>
    %cst_64 = arith.constant dense<0.000000e+00> : vector<8x96xf32>
    %69 = tpu.matmul %67, %68, %cst_64 {dimension_numbers = #tpu.dot_dimension_numbers<[1], [0], [0], [1], [0, 0, 1, 1], [], []>} : vector<8x32xf32>, vector<32x96xf32>, vector<8x96xf32> -> vector<8x96xf32>
    %70 = arith.addf %66, %69 : vector<8x96xf32>
    %c0_65 = arith.constant 0 : index
    %c0_66 = arith.constant 0 : index
    %71 = vector.load %arg6[%c0_65, %c0_66] : memref<1x96xf32, #tpu.memory_space<vmem>>, vector<1x96xf32>
    %72 = vector.broadcast %71 : vector<1x96xf32> to vector<8x96xf32>
    %73 = arith.addf %70, %72 : vector<8x96xf32>
    %c0_67 = arith.constant 0 : index
    %c0_68 = arith.constant 0 : index
    %74 = vector.load %arg18[%c0_67, %c0_68] : memref<8x96xf32, #tpu.memory_space<vmem>>, vector<8x96xf32>
    tpu.vector_store %arg18[%c0_67, %c0_68], %73 {strides = array<i32>} : memref<8x96xf32, #tpu.memory_space<vmem>>, vector<8x96xf32>,
    %c0_69 = arith.constant 0 : index
    %c0_70 = arith.constant 0 : index
    %75 = vector.load %arg5[%c0_69, %c0_70] : memref<32x96xf32, #tpu.memory_space<vmem>>, vector<32x96xf32>
    %c0_71 = arith.constant 0 : index
    %c0_72 = arith.constant 0 : index
    %76 = vector.load %arg7[%c0_71, %c0_72] : memref<1x32xf32, #tpu.memory_space<vmem>>, vector<1x32xf32>
    %c0_73 = arith.constant 0 : index
    %c0_74 = arith.constant 0 : index
    %77 = vector.load %arg8[%c0_73, %c0_74] : memref<32x96xf32, #tpu.memory_space<vmem>>, vector<32x96xf32>
    %c0_75 = arith.constant 0 : index
    %c0_76 = arith.constant 0 : index
    %78 = vector.load %arg9[%c0_75, %c0_76] : memref<32x96xf32, #tpu.memory_space<vmem>>, vector<32x96xf32>
    %c0_77 = arith.constant 0 : index
    %c0_78 = arith.constant 0 : index
    %79 = vector.load %arg10[%c0_77, %c0_78] : memref<1x64xf32, #tpu.memory_space<vmem>>, vector<1x64xf32>
    %c0_79 = arith.constant 0 : index
    %c0_80 = arith.constant 0 : index
    %80 = vector.load %arg11[%c0_79, %c0_80] : memref<1x32xf32, #tpu.memory_space<vmem>>, vector<1x32xf32>
    %c0_81 = arith.constant 0 : index
    %c0_82 = arith.constant 0 : index
    %81 = vector.load %arg12[%c0_81, %c0_82] : memref<1x32xf32, #tpu.memory_space<vmem>>, vector<1x32xf32>
    %cst_83 = arith.constant 0.000000e+00 : f32
    %82 = vector.broadcast %cst_83 : f32 to vector<1x32xf32>
    %cst_84 = arith.constant 0.000000e+00 : f32
    %83 = vector.broadcast %cst_84 : f32 to vector<1x32xf32>
    %c0_85 = arith.constant 0 : index
    %c0_86 = arith.constant 0 : index
    %84 = vector.load %arg18[%c0_85, %c0_86] : memref<8x96xf32, #tpu.memory_space<vmem>>, vector<1x96xf32>
    %cst_87 = arith.constant dense<0.000000e+00> : vector<1x96xf32>
    %85 = tpu.matmul %82, %75, %cst_87 {dimension_numbers = #tpu.dot_dimension_numbers<[1], [0], [0], [1], [0, 0, 1, 1], [], []>} : vector<1x32xf32>, vector<32x96xf32>, vector<1x96xf32> -> vector<1x96xf32>
    %86 = vector.extract_strided_slice %84 {offsets = [0, 0], sizes = [1, 64], strides = [1, 1]} : vector<1x96xf32> to vector<1x64xf32>
    %87 = vector.extract_strided_slice %85 {offsets = [0, 0], sizes = [1, 64], strides = [1, 1]} : vector<1x96xf32> to vector<1x64xf32>
    %88 = arith.addf %86, %87 : vector<1x64xf32>
    %89 = arith.negf %88 : vector<1x64xf32>
    %90 = math.exp %89 : vector<1x64xf32>
    %cst_88 = arith.constant 1.000000e+00 : f32
    %91 = vector.broadcast %cst_88 : f32 to vector<1x64xf32>
    %92 = arith.addf %91, %90 : vector<1x64xf32>
    %93 = arith.divf %91, %92 : vector<1x64xf32>
    %94 = vector.extract_strided_slice %93 {offsets = [0, 0], sizes = [1, 32], strides = [1, 1]} : vector<1x64xf32> to vector<1x32xf32>
    %95 = vector.extract_strided_slice %93 {offsets = [0, 32], sizes = [1, 32], strides = [1, 1]} : vector<1x64xf32> to vector<1x32xf32>
    %96 = vector.extract_strided_slice %84 {offsets = [0, 64], sizes = [1, 32], strides = [1, 1]} : vector<1x96xf32> to vector<1x32xf32>
    %97 = vector.extract_strided_slice %85 {offsets = [0, 64], sizes = [1, 32], strides = [1, 1]} : vector<1x96xf32> to vector<1x32xf32>
    %98 = arith.addf %97, %76 : vector<1x32xf32>
    %99 = arith.mulf %94, %98 : vector<1x32xf32>
    %100 = arith.addf %96, %99 : vector<1x32xf32>
    %101 = math.tanh %100 : vector<1x32xf32>
    %cst_89 = arith.constant 1.000000e+00 : f32
    %102 = vector.broadcast %cst_89 : f32 to vector<1x32xf32>
    %103 = arith.subf %102, %95 : vector<1x32xf32>
    %104 = arith.mulf %103, %101 : vector<1x32xf32>
    %105 = arith.mulf %95, %82 : vector<1x32xf32>
    %106 = arith.addf %104, %105 : vector<1x32xf32>
    %cst_90 = arith.constant dense<0.000000e+00> : vector<1x96xf32>
    %107 = tpu.matmul %106, %77, %cst_90 {dimension_numbers = #tpu.dot_dimension_numbers<[1], [0], [0], [1], [0, 0, 1, 1], [], []>} : vector<1x32xf32>, vector<32x96xf32>, vector<1x96xf32> -> vector<1x96xf32>
    %cst_91 = arith.constant dense<0.000000e+00> : vector<1x96xf32>
    %108 = tpu.matmul %83, %78, %cst_91 {dimension_numbers = #tpu.dot_dimension_numbers<[1], [0], [0], [1], [0, 0, 1, 1], [], []>} : vector<1x32xf32>, vector<32x96xf32>, vector<1x96xf32> -> vector<1x96xf32>
    %109 = vector.extract_strided_slice %107 {offsets = [0, 0], sizes = [1, 64], strides = [1, 1]} : vector<1x96xf32> to vector<1x64xf32>
    %110 = vector.extract_strided_slice %108 {offsets = [0, 0], sizes = [1, 64], strides = [1, 1]} : vector<1x96xf32> to vector<1x64xf32>
    %111 = arith.addf %109, %110 : vector<1x64xf32>
    %112 = arith.addf %111, %79 : vector<1x64xf32>
    %113 = arith.negf %112 : vector<1x64xf32>
    %114 = math.exp %113 : vector<1x64xf32>
    %cst_92 = arith.constant 1.000000e+00 : f32
    %115 = vector.broadcast %cst_92 : f32 to vector<1x64xf32>
    %116 = arith.addf %115, %114 : vector<1x64xf32>
    %117 = arith.divf %115, %116 : vector<1x64xf32>
    %118 = vector.extract_strided_slice %117 {offsets = [0, 0], sizes = [1, 32], strides = [1, 1]} : vector<1x64xf32> to vector<1x32xf32>
    %119 = vector.extract_strided_slice %117 {offsets = [0, 32], sizes = [1, 32], strides = [1, 1]} : vector<1x64xf32> to vector<1x32xf32>
    %120 = vector.extract_strided_slice %107 {offsets = [0, 64], sizes = [1, 32], strides = [1, 1]} : vector<1x96xf32> to vector<1x32xf32>
    %121 = arith.addf %120, %80 : vector<1x32xf32>
    %122 = vector.extract_strided_slice %108 {offsets = [0, 64], sizes = [1, 32], strides = [1, 1]} : vector<1x96xf32> to vector<1x32xf32>
    %123 = arith.addf %122, %81 : vector<1x32xf32>
    %124 = arith.mulf %118, %123 : vector<1x32xf32>
    %125 = arith.addf %121, %124 : vector<1x32xf32>
    %126 = math.tanh %125 : vector<1x32xf32>
    %cst_93 = arith.constant 1.000000e+00 : f32
    %127 = vector.broadcast %cst_93 : f32 to vector<1x32xf32>
    %128 = arith.subf %127, %119 : vector<1x32xf32>
    %129 = arith.mulf %128, %126 : vector<1x32xf32>
    %130 = arith.mulf %119, %83 : vector<1x32xf32>
    %131 = arith.addf %129, %130 : vector<1x32xf32>
    %c0_94 = arith.constant 0 : index
    %c0_95 = arith.constant 0 : index
    %132 = vector.load %arg19[%c0_94, %c0_95] : memref<8x32xf32, #tpu.memory_space<vmem>>, vector<1x32xf32>
    tpu.vector_store %arg19[%c0_94, %c0_95], %131 {strides = array<i32>} : memref<8x32xf32, #tpu.memory_space<vmem>>, vector<1x32xf32>,
    %c1_96 = arith.constant 1 : index
    %c0_97 = arith.constant 0 : index
    %133 = vector.load %arg18[%c1_96, %c0_97] : memref<8x96xf32, #tpu.memory_space<vmem>>, vector<1x96xf32>
    %cst_98 = arith.constant dense<0.000000e+00> : vector<1x96xf32>
    %134 = tpu.matmul %106, %75, %cst_98 {dimension_numbers = #tpu.dot_dimension_numbers<[1], [0], [0], [1], [0, 0, 1, 1], [], []>} : vector<1x32xf32>, vector<32x96xf32>, vector<1x96xf32> -> vector<1x96xf32>
    %135 = vector.extract_strided_slice %133 {offsets = [0, 0], sizes = [1, 64], strides = [1, 1]} : vector<1x96xf32> to vector<1x64xf32>
    %136 = vector.extract_strided_slice %134 {offsets = [0, 0], sizes = [1, 64], strides = [1, 1]} : vector<1x96xf32> to vector<1x64xf32>
    %137 = arith.addf %135, %136 : vector<1x64xf32>
    %138 = arith.negf %137 : vector<1x64xf32>
    %139 = math.exp %138 : vector<1x64xf32>
    %cst_99 = arith.constant 1.000000e+00 : f32
    %140 = vector.broadcast %cst_99 : f32 to vector<1x64xf32>
    %141 = arith.addf %140, %139 : vector<1x64xf32>
    %142 = arith.divf %140, %141 : vector<1x64xf32>
    %143 = vector.extract_strided_slice %142 {offsets = [0, 0], sizes = [1, 32], strides = [1, 1]} : vector<1x64xf32> to vector<1x32xf32>
    %144 = vector.extract_strided_slice %142 {offsets = [0, 32], sizes = [1, 32], strides = [1, 1]} : vector<1x64xf32> to vector<1x32xf32>
    %145 = vector.extract_strided_slice %133 {offsets = [0, 64], sizes = [1, 32], strides = [1, 1]} : vector<1x96xf32> to vector<1x32xf32>
    %146 = vector.extract_strided_slice %134 {offsets = [0, 64], sizes = [1, 32], strides = [1, 1]} : vector<1x96xf32> to vector<1x32xf32>
    %147 = arith.addf %146, %76 : vector<1x32xf32>
    %148 = arith.mulf %143, %147 : vector<1x32xf32>
    %149 = arith.addf %145, %148 : vector<1x32xf32>
    %150 = math.tanh %149 : vector<1x32xf32>
    %cst_100 = arith.constant 1.000000e+00 : f32
    %151 = vector.broadcast %cst_100 : f32 to vector<1x32xf32>
    %152 = arith.subf %151, %144 : vector<1x32xf32>
    %153 = arith.mulf %152, %150 : vector<1x32xf32>
    %154 = arith.mulf %144, %106 : vector<1x32xf32>
    %155 = arith.addf %153, %154 : vector<1x32xf32>
    %cst_101 = arith.constant dense<0.000000e+00> : vector<1x96xf32>
    %156 = tpu.matmul %155, %77, %cst_101 {dimension_numbers = #tpu.dot_dimension_numbers<[1], [0], [0], [1], [0, 0, 1, 1], [], []>} : vector<1x32xf32>, vector<32x96xf32>, vector<1x96xf32> -> vector<1x96xf32>
    %cst_102 = arith.constant dense<0.000000e+00> : vector<1x96xf32>
    %157 = tpu.matmul %131, %78, %cst_102 {dimension_numbers = #tpu.dot_dimension_numbers<[1], [0], [0], [1], [0, 0, 1, 1], [], []>} : vector<1x32xf32>, vector<32x96xf32>, vector<1x96xf32> -> vector<1x96xf32>
    %158 = vector.extract_strided_slice %156 {offsets = [0, 0], sizes = [1, 64], strides = [1, 1]} : vector<1x96xf32> to vector<1x64xf32>
    %159 = vector.extract_strided_slice %157 {offsets = [0, 0], sizes = [1, 64], strides = [1, 1]} : vector<1x96xf32> to vector<1x64xf32>
    %160 = arith.addf %158, %159 : vector<1x64xf32>
    %161 = arith.addf %160, %79 : vector<1x64xf32>
    %162 = arith.negf %161 : vector<1x64xf32>
    %163 = math.exp %162 : vector<1x64xf32>
    %cst_103 = arith.constant 1.000000e+00 : f32
    %164 = vector.broadcast %cst_103 : f32 to vector<1x64xf32>
    %165 = arith.addf %164, %163 : vector<1x64xf32>
    %166 = arith.divf %164, %165 : vector<1x64xf32>
    %167 = vector.extract_strided_slice %166 {offsets = [0, 0], sizes = [1, 32], strides = [1, 1]} : vector<1x64xf32> to vector<1x32xf32>
    %168 = vector.extract_strided_slice %166 {offsets = [0, 32], sizes = [1, 32], strides = [1, 1]} : vector<1x64xf32> to vector<1x32xf32>
    %169 = vector.extract_strided_slice %156 {offsets = [0, 64], sizes = [1, 32], strides = [1, 1]} : vector<1x96xf32> to vector<1x32xf32>
    %170 = arith.addf %169, %80 : vector<1x32xf32>
    %171 = vector.extract_strided_slice %157 {offsets = [0, 64], sizes = [1, 32], strides = [1, 1]} : vector<1x96xf32> to vector<1x32xf32>
    %172 = arith.addf %171, %81 : vector<1x32xf32>
    %173 = arith.mulf %167, %172 : vector<1x32xf32>
    %174 = arith.addf %170, %173 : vector<1x32xf32>
    %175 = math.tanh %174 : vector<1x32xf32>
    %cst_104 = arith.constant 1.000000e+00 : f32
    %176 = vector.broadcast %cst_104 : f32 to vector<1x32xf32>
    %177 = arith.subf %176, %168 : vector<1x32xf32>
    %178 = arith.mulf %177, %175 : vector<1x32xf32>
    %179 = arith.mulf %168, %131 : vector<1x32xf32>
    %180 = arith.addf %178, %179 : vector<1x32xf32>
    %c1_105 = arith.constant 1 : index
    %c0_106 = arith.constant 0 : index
    %181 = vector.load %arg19[%c1_105, %c0_106] : memref<8x32xf32, #tpu.memory_space<vmem>>, vector<1x32xf32>
    tpu.vector_store %arg19[%c1_105, %c0_106], %180 {strides = array<i32>} : memref<8x32xf32, #tpu.memory_space<vmem>>, vector<1x32xf32>,
    %c2_107 = arith.constant 2 : index
    %c0_108 = arith.constant 0 : index
    %182 = vector.load %arg18[%c2_107, %c0_108] : memref<8x96xf32, #tpu.memory_space<vmem>>, vector<1x96xf32>
    %cst_109 = arith.constant dense<0.000000e+00> : vector<1x96xf32>
    %183 = tpu.matmul %155, %75, %cst_109 {dimension_numbers = #tpu.dot_dimension_numbers<[1], [0], [0], [1], [0, 0, 1, 1], [], []>} : vector<1x32xf32>, vector<32x96xf32>, vector<1x96xf32> -> vector<1x96xf32>
    %184 = vector.extract_strided_slice %182 {offsets = [0, 0], sizes = [1, 64], strides = [1, 1]} : vector<1x96xf32> to vector<1x64xf32>
    %185 = vector.extract_strided_slice %183 {offsets = [0, 0], sizes = [1, 64], strides = [1, 1]} : vector<1x96xf32> to vector<1x64xf32>
    %186 = arith.addf %184, %185 : vector<1x64xf32>
    %187 = arith.negf %186 : vector<1x64xf32>
    %188 = math.exp %187 : vector<1x64xf32>
    %cst_110 = arith.constant 1.000000e+00 : f32
    %189 = vector.broadcast %cst_110 : f32 to vector<1x64xf32>
    %190 = arith.addf %189, %188 : vector<1x64xf32>
    %191 = arith.divf %189, %190 : vector<1x64xf32>
    %192 = vector.extract_strided_slice %191 {offsets = [0, 0], sizes = [1, 32], strides = [1, 1]} : vector<1x64xf32> to vector<1x32xf32>
    %193 = vector.extract_strided_slice %191 {offsets = [0, 32], sizes = [1, 32], strides = [1, 1]} : vector<1x64xf32> to vector<1x32xf32>
    %194 = vector.extract_strided_slice %182 {offsets = [0, 64], sizes = [1, 32], strides = [1, 1]} : vector<1x96xf32> to vector<1x32xf32>
    %195 = vector.extract_strided_slice %183 {offsets = [0, 64], sizes = [1, 32], strides = [1, 1]} : vector<1x96xf32> to vector<1x32xf32>
    %196 = arith.addf %195, %76 : vector<1x32xf32>
    %197 = arith.mulf %192, %196 : vector<1x32xf32>
    %198 = arith.addf %194, %197 : vector<1x32xf32>
    %199 = math.tanh %198 : vector<1x32xf32>
    %cst_111 = arith.constant 1.000000e+00 : f32
    %200 = vector.broadcast %cst_111 : f32 to vector<1x32xf32>
    %201 = arith.subf %200, %193 : vector<1x32xf32>
    %202 = arith.mulf %201, %199 : vector<1x32xf32>
    %203 = arith.mulf %193, %155 : vector<1x32xf32>
    %204 = arith.addf %202, %203 : vector<1x32xf32>
    %cst_112 = arith.constant dense<0.000000e+00> : vector<1x96xf32>
    %205 = tpu.matmul %204, %77, %cst_112 {dimension_numbers = #tpu.dot_dimension_numbers<[1], [0], [0], [1], [0, 0, 1, 1], [], []>} : vector<1x32xf32>, vector<32x96xf32>, vector<1x96xf32> -> vector<1x96xf32>
    %cst_113 = arith.constant dense<0.000000e+00> : vector<1x96xf32>
    %206 = tpu.matmul %180, %78, %cst_113 {dimension_numbers = #tpu.dot_dimension_numbers<[1], [0], [0], [1], [0, 0, 1, 1], [], []>} : vector<1x32xf32>, vector<32x96xf32>, vector<1x96xf32> -> vector<1x96xf32>
    %207 = vector.extract_strided_slice %205 {offsets = [0, 0], sizes = [1, 64], strides = [1, 1]} : vector<1x96xf32> to vector<1x64xf32>
    %208 = vector.extract_strided_slice %206 {offsets = [0, 0], sizes = [1, 64], strides = [1, 1]} : vector<1x96xf32> to vector<1x64xf32>
    %209 = arith.addf %207, %208 : vector<1x64xf32>
    %210 = arith.addf %209, %79 : vector<1x64xf32>
    %211 = arith.negf %210 : vector<1x64xf32>
    %212 = math.exp %211 : vector<1x64xf32>
    %cst_114 = arith.constant 1.000000e+00 : f32
    %213 = vector.broadcast %cst_114 : f32 to vector<1x64xf32>
    %214 = arith.addf %213, %212 : vector<1x64xf32>
    %215 = arith.divf %213, %214 : vector<1x64xf32>
    %216 = vector.extract_strided_slice %215 {offsets = [0, 0], sizes = [1, 32], strides = [1, 1]} : vector<1x64xf32> to vector<1x32xf32>
    %217 = vector.extract_strided_slice %215 {offsets = [0, 32], sizes = [1, 32], strides = [1, 1]} : vector<1x64xf32> to vector<1x32xf32>
    %218 = vector.extract_strided_slice %205 {offsets = [0, 64], sizes = [1, 32], strides = [1, 1]} : vector<1x96xf32> to vector<1x32xf32>
    %219 = arith.addf %218, %80 : vector<1x32xf32>
    %220 = vector.extract_strided_slice %206 {offsets = [0, 64], sizes = [1, 32], strides = [1, 1]} : vector<1x96xf32> to vector<1x32xf32>
    %221 = arith.addf %220, %81 : vector<1x32xf32>
    %222 = arith.mulf %216, %221 : vector<1x32xf32>
    %223 = arith.addf %219, %222 : vector<1x32xf32>
    %224 = math.tanh %223 : vector<1x32xf32>
    %cst_115 = arith.constant 1.000000e+00 : f32
    %225 = vector.broadcast %cst_115 : f32 to vector<1x32xf32>
    %226 = arith.subf %225, %217 : vector<1x32xf32>
    %227 = arith.mulf %226, %224 : vector<1x32xf32>
    %228 = arith.mulf %217, %180 : vector<1x32xf32>
    %229 = arith.addf %227, %228 : vector<1x32xf32>
    %c2_116 = arith.constant 2 : index
    %c0_117 = arith.constant 0 : index
    %230 = vector.load %arg19[%c2_116, %c0_117] : memref<8x32xf32, #tpu.memory_space<vmem>>, vector<1x32xf32>
    tpu.vector_store %arg19[%c2_116, %c0_117], %229 {strides = array<i32>} : memref<8x32xf32, #tpu.memory_space<vmem>>, vector<1x32xf32>,
    %c3_118 = arith.constant 3 : index
    %c0_119 = arith.constant 0 : index
    %231 = vector.load %arg18[%c3_118, %c0_119] : memref<8x96xf32, #tpu.memory_space<vmem>>, vector<1x96xf32>
    %cst_120 = arith.constant dense<0.000000e+00> : vector<1x96xf32>
    %232 = tpu.matmul %204, %75, %cst_120 {dimension_numbers = #tpu.dot_dimension_numbers<[1], [0], [0], [1], [0, 0, 1, 1], [], []>} : vector<1x32xf32>, vector<32x96xf32>, vector<1x96xf32> -> vector<1x96xf32>
    %233 = vector.extract_strided_slice %231 {offsets = [0, 0], sizes = [1, 64], strides = [1, 1]} : vector<1x96xf32> to vector<1x64xf32>
    %234 = vector.extract_strided_slice %232 {offsets = [0, 0], sizes = [1, 64], strides = [1, 1]} : vector<1x96xf32> to vector<1x64xf32>
    %235 = arith.addf %233, %234 : vector<1x64xf32>
    %236 = arith.negf %235 : vector<1x64xf32>
    %237 = math.exp %236 : vector<1x64xf32>
    %cst_121 = arith.constant 1.000000e+00 : f32
    %238 = vector.broadcast %cst_121 : f32 to vector<1x64xf32>
    %239 = arith.addf %238, %237 : vector<1x64xf32>
    %240 = arith.divf %238, %239 : vector<1x64xf32>
    %241 = vector.extract_strided_slice %240 {offsets = [0, 0], sizes = [1, 32], strides = [1, 1]} : vector<1x64xf32> to vector<1x32xf32>
    %242 = vector.extract_strided_slice %240 {offsets = [0, 32], sizes = [1, 32], strides = [1, 1]} : vector<1x64xf32> to vector<1x32xf32>
    %243 = vector.extract_strided_slice %231 {offsets = [0, 64], sizes = [1, 32], strides = [1, 1]} : vector<1x96xf32> to vector<1x32xf32>
    %244 = vector.extract_strided_slice %232 {offsets = [0, 64], sizes = [1, 32], strides = [1, 1]} : vector<1x96xf32> to vector<1x32xf32>
    %245 = arith.addf %244, %76 : vector<1x32xf32>
    %246 = arith.mulf %241, %245 : vector<1x32xf32>
    %247 = arith.addf %243, %246 : vector<1x32xf32>
    %248 = math.tanh %247 : vector<1x32xf32>
    %cst_122 = arith.constant 1.000000e+00 : f32
    %249 = vector.broadcast %cst_122 : f32 to vector<1x32xf32>
    %250 = arith.subf %249, %242 : vector<1x32xf32>
    %251 = arith.mulf %250, %248 : vector<1x32xf32>
    %252 = arith.mulf %242, %204 : vector<1x32xf32>
    %253 = arith.addf %251, %252 : vector<1x32xf32>
    %cst_123 = arith.constant dense<0.000000e+00> : vector<1x96xf32>
    %254 = tpu.matmul %253, %77, %cst_123 {dimension_numbers = #tpu.dot_dimension_numbers<[1], [0], [0], [1], [0, 0, 1, 1], [], []>} : vector<1x32xf32>, vector<32x96xf32>, vector<1x96xf32> -> vector<1x96xf32>
    %cst_124 = arith.constant dense<0.000000e+00> : vector<1x96xf32>
    %255 = tpu.matmul %229, %78, %cst_124 {dimension_numbers = #tpu.dot_dimension_numbers<[1], [0], [0], [1], [0, 0, 1, 1], [], []>} : vector<1x32xf32>, vector<32x96xf32>, vector<1x96xf32> -> vector<1x96xf32>
    %256 = vector.extract_strided_slice %254 {offsets = [0, 0], sizes = [1, 64], strides = [1, 1]} : vector<1x96xf32> to vector<1x64xf32>
    %257 = vector.extract_strided_slice %255 {offsets = [0, 0], sizes = [1, 64], strides = [1, 1]} : vector<1x96xf32> to vector<1x64xf32>
    %258 = arith.addf %256, %257 : vector<1x64xf32>
    %259 = arith.addf %258, %79 : vector<1x64xf32>
    %260 = arith.negf %259 : vector<1x64xf32>
    %261 = math.exp %260 : vector<1x64xf32>
    %cst_125 = arith.constant 1.000000e+00 : f32
    %262 = vector.broadcast %cst_125 : f32 to vector<1x64xf32>
    %263 = arith.addf %262, %261 : vector<1x64xf32>
    %264 = arith.divf %262, %263 : vector<1x64xf32>
    %265 = vector.extract_strided_slice %264 {offsets = [0, 0], sizes = [1, 32], strides = [1, 1]} : vector<1x64xf32> to vector<1x32xf32>
    %266 = vector.extract_strided_slice %264 {offsets = [0, 32], sizes = [1, 32], strides = [1, 1]} : vector<1x64xf32> to vector<1x32xf32>
    %267 = vector.extract_strided_slice %254 {offsets = [0, 64], sizes = [1, 32], strides = [1, 1]} : vector<1x96xf32> to vector<1x32xf32>
    %268 = arith.addf %267, %80 : vector<1x32xf32>
    %269 = vector.extract_strided_slice %255 {offsets = [0, 64], sizes = [1, 32], strides = [1, 1]} : vector<1x96xf32> to vector<1x32xf32>
    %270 = arith.addf %269, %81 : vector<1x32xf32>
    %271 = arith.mulf %265, %270 : vector<1x32xf32>
    %272 = arith.addf %268, %271 : vector<1x32xf32>
    %273 = math.tanh %272 : vector<1x32xf32>
    %cst_126 = arith.constant 1.000000e+00 : f32
    %274 = vector.broadcast %cst_126 : f32 to vector<1x32xf32>
    %275 = arith.subf %274, %266 : vector<1x32xf32>
    %276 = arith.mulf %275, %273 : vector<1x32xf32>
    %277 = arith.mulf %266, %229 : vector<1x32xf32>
    %278 = arith.addf %276, %277 : vector<1x32xf32>
    %c3_127 = arith.constant 3 : index
    %c0_128 = arith.constant 0 : index
    %279 = vector.load %arg19[%c3_127, %c0_128] : memref<8x32xf32, #tpu.memory_space<vmem>>, vector<1x32xf32>
    tpu.vector_store %arg19[%c3_127, %c0_128], %278 {strides = array<i32>} : memref<8x32xf32, #tpu.memory_space<vmem>>, vector<1x32xf32>,
    %c4_129 = arith.constant 4 : index
    %c0_130 = arith.constant 0 : index
    %280 = vector.load %arg18[%c4_129, %c0_130] : memref<8x96xf32, #tpu.memory_space<vmem>>, vector<1x96xf32>
    %cst_131 = arith.constant dense<0.000000e+00> : vector<1x96xf32>
    %281 = tpu.matmul %253, %75, %cst_131 {dimension_numbers = #tpu.dot_dimension_numbers<[1], [0], [0], [1], [0, 0, 1, 1], [], []>} : vector<1x32xf32>, vector<32x96xf32>, vector<1x96xf32> -> vector<1x96xf32>
    %282 = vector.extract_strided_slice %280 {offsets = [0, 0], sizes = [1, 64], strides = [1, 1]} : vector<1x96xf32> to vector<1x64xf32>
    %283 = vector.extract_strided_slice %281 {offsets = [0, 0], sizes = [1, 64], strides = [1, 1]} : vector<1x96xf32> to vector<1x64xf32>
    %284 = arith.addf %282, %283 : vector<1x64xf32>
    %285 = arith.negf %284 : vector<1x64xf32>
    %286 = math.exp %285 : vector<1x64xf32>
    %cst_132 = arith.constant 1.000000e+00 : f32
    %287 = vector.broadcast %cst_132 : f32 to vector<1x64xf32>
    %288 = arith.addf %287, %286 : vector<1x64xf32>
    %289 = arith.divf %287, %288 : vector<1x64xf32>
    %290 = vector.extract_strided_slice %289 {offsets = [0, 0], sizes = [1, 32], strides = [1, 1]} : vector<1x64xf32> to vector<1x32xf32>
    %291 = vector.extract_strided_slice %289 {offsets = [0, 32], sizes = [1, 32], strides = [1, 1]} : vector<1x64xf32> to vector<1x32xf32>
    %292 = vector.extract_strided_slice %280 {offsets = [0, 64], sizes = [1, 32], strides = [1, 1]} : vector<1x96xf32> to vector<1x32xf32>
    %293 = vector.extract_strided_slice %281 {offsets = [0, 64], sizes = [1, 32], strides = [1, 1]} : vector<1x96xf32> to vector<1x32xf32>
    %294 = arith.addf %293, %76 : vector<1x32xf32>
    %295 = arith.mulf %290, %294 : vector<1x32xf32>
    %296 = arith.addf %292, %295 : vector<1x32xf32>
    %297 = math.tanh %296 : vector<1x32xf32>
    %cst_133 = arith.constant 1.000000e+00 : f32
    %298 = vector.broadcast %cst_133 : f32 to vector<1x32xf32>
    %299 = arith.subf %298, %291 : vector<1x32xf32>
    %300 = arith.mulf %299, %297 : vector<1x32xf32>
    %301 = arith.mulf %291, %253 : vector<1x32xf32>
    %302 = arith.addf %300, %301 : vector<1x32xf32>
    %cst_134 = arith.constant dense<0.000000e+00> : vector<1x96xf32>
    %303 = tpu.matmul %302, %77, %cst_134 {dimension_numbers = #tpu.dot_dimension_numbers<[1], [0], [0], [1], [0, 0, 1, 1], [], []>} : vector<1x32xf32>, vector<32x96xf32>, vector<1x96xf32> -> vector<1x96xf32>
    %cst_135 = arith.constant dense<0.000000e+00> : vector<1x96xf32>
    %304 = tpu.matmul %278, %78, %cst_135 {dimension_numbers = #tpu.dot_dimension_numbers<[1], [0], [0], [1], [0, 0, 1, 1], [], []>} : vector<1x32xf32>, vector<32x96xf32>, vector<1x96xf32> -> vector<1x96xf32>
    %305 = vector.extract_strided_slice %303 {offsets = [0, 0], sizes = [1, 64], strides = [1, 1]} : vector<1x96xf32> to vector<1x64xf32>
    %306 = vector.extract_strided_slice %304 {offsets = [0, 0], sizes = [1, 64], strides = [1, 1]} : vector<1x96xf32> to vector<1x64xf32>
    %307 = arith.addf %305, %306 : vector<1x64xf32>
    %308 = arith.addf %307, %79 : vector<1x64xf32>
    %309 = arith.negf %308 : vector<1x64xf32>
    %310 = math.exp %309 : vector<1x64xf32>
    %cst_136 = arith.constant 1.000000e+00 : f32
    %311 = vector.broadcast %cst_136 : f32 to vector<1x64xf32>
    %312 = arith.addf %311, %310 : vector<1x64xf32>
    %313 = arith.divf %311, %312 : vector<1x64xf32>
    %314 = vector.extract_strided_slice %313 {offsets = [0, 0], sizes = [1, 32], strides = [1, 1]} : vector<1x64xf32> to vector<1x32xf32>
    %315 = vector.extract_strided_slice %313 {offsets = [0, 32], sizes = [1, 32], strides = [1, 1]} : vector<1x64xf32> to vector<1x32xf32>
    %316 = vector.extract_strided_slice %303 {offsets = [0, 64], sizes = [1, 32], strides = [1, 1]} : vector<1x96xf32> to vector<1x32xf32>
    %317 = arith.addf %316, %80 : vector<1x32xf32>
    %318 = vector.extract_strided_slice %304 {offsets = [0, 64], sizes = [1, 32], strides = [1, 1]} : vector<1x96xf32> to vector<1x32xf32>
    %319 = arith.addf %318, %81 : vector<1x32xf32>
    %320 = arith.mulf %314, %319 : vector<1x32xf32>
    %321 = arith.addf %317, %320 : vector<1x32xf32>
    %322 = math.tanh %321 : vector<1x32xf32>
    %cst_137 = arith.constant 1.000000e+00 : f32
    %323 = vector.broadcast %cst_137 : f32 to vector<1x32xf32>
    %324 = arith.subf %323, %315 : vector<1x32xf32>
    %325 = arith.mulf %324, %322 : vector<1x32xf32>
    %326 = arith.mulf %315, %278 : vector<1x32xf32>
    %327 = arith.addf %325, %326 : vector<1x32xf32>
    %c4_138 = arith.constant 4 : index
    %c0_139 = arith.constant 0 : index
    %328 = vector.load %arg19[%c4_138, %c0_139] : memref<8x32xf32, #tpu.memory_space<vmem>>, vector<1x32xf32>
    tpu.vector_store %arg19[%c4_138, %c0_139], %327 {strides = array<i32>} : memref<8x32xf32, #tpu.memory_space<vmem>>, vector<1x32xf32>,
    %c5_140 = arith.constant 5 : index
    %c0_141 = arith.constant 0 : index
    %329 = vector.load %arg18[%c5_140, %c0_141] : memref<8x96xf32, #tpu.memory_space<vmem>>, vector<1x96xf32>
    %cst_142 = arith.constant dense<0.000000e+00> : vector<1x96xf32>
    %330 = tpu.matmul %302, %75, %cst_142 {dimension_numbers = #tpu.dot_dimension_numbers<[1], [0], [0], [1], [0, 0, 1, 1], [], []>} : vector<1x32xf32>, vector<32x96xf32>, vector<1x96xf32> -> vector<1x96xf32>
    %331 = vector.extract_strided_slice %329 {offsets = [0, 0], sizes = [1, 64], strides = [1, 1]} : vector<1x96xf32> to vector<1x64xf32>
    %332 = vector.extract_strided_slice %330 {offsets = [0, 0], sizes = [1, 64], strides = [1, 1]} : vector<1x96xf32> to vector<1x64xf32>
    %333 = arith.addf %331, %332 : vector<1x64xf32>
    %334 = arith.negf %333 : vector<1x64xf32>
    %335 = math.exp %334 : vector<1x64xf32>
    %cst_143 = arith.constant 1.000000e+00 : f32
    %336 = vector.broadcast %cst_143 : f32 to vector<1x64xf32>
    %337 = arith.addf %336, %335 : vector<1x64xf32>
    %338 = arith.divf %336, %337 : vector<1x64xf32>
    %339 = vector.extract_strided_slice %338 {offsets = [0, 0], sizes = [1, 32], strides = [1, 1]} : vector<1x64xf32> to vector<1x32xf32>
    %340 = vector.extract_strided_slice %338 {offsets = [0, 32], sizes = [1, 32], strides = [1, 1]} : vector<1x64xf32> to vector<1x32xf32>
    %341 = vector.extract_strided_slice %329 {offsets = [0, 64], sizes = [1, 32], strides = [1, 1]} : vector<1x96xf32> to vector<1x32xf32>
    %342 = vector.extract_strided_slice %330 {offsets = [0, 64], sizes = [1, 32], strides = [1, 1]} : vector<1x96xf32> to vector<1x32xf32>
    %343 = arith.addf %342, %76 : vector<1x32xf32>
    %344 = arith.mulf %339, %343 : vector<1x32xf32>
    %345 = arith.addf %341, %344 : vector<1x32xf32>
    %346 = math.tanh %345 : vector<1x32xf32>
    %cst_144 = arith.constant 1.000000e+00 : f32
    %347 = vector.broadcast %cst_144 : f32 to vector<1x32xf32>
    %348 = arith.subf %347, %340 : vector<1x32xf32>
    %349 = arith.mulf %348, %346 : vector<1x32xf32>
    %350 = arith.mulf %340, %302 : vector<1x32xf32>
    %351 = arith.addf %349, %350 : vector<1x32xf32>
    %cst_145 = arith.constant dense<0.000000e+00> : vector<1x96xf32>
    %352 = tpu.matmul %351, %77, %cst_145 {dimension_numbers = #tpu.dot_dimension_numbers<[1], [0], [0], [1], [0, 0, 1, 1], [], []>} : vector<1x32xf32>, vector<32x96xf32>, vector<1x96xf32> -> vector<1x96xf32>
    %cst_146 = arith.constant dense<0.000000e+00> : vector<1x96xf32>
    %353 = tpu.matmul %327, %78, %cst_146 {dimension_numbers = #tpu.dot_dimension_numbers<[1], [0], [0], [1], [0, 0, 1, 1], [], []>} : vector<1x32xf32>, vector<32x96xf32>, vector<1x96xf32> -> vector<1x96xf32>
    %354 = vector.extract_strided_slice %352 {offsets = [0, 0], sizes = [1, 64], strides = [1, 1]} : vector<1x96xf32> to vector<1x64xf32>
    %355 = vector.extract_strided_slice %353 {offsets = [0, 0], sizes = [1, 64], strides = [1, 1]} : vector<1x96xf32> to vector<1x64xf32>
    %356 = arith.addf %354, %355 : vector<1x64xf32>
    %357 = arith.addf %356, %79 : vector<1x64xf32>
    %358 = arith.negf %357 : vector<1x64xf32>
    %359 = math.exp %358 : vector<1x64xf32>
    %cst_147 = arith.constant 1.000000e+00 : f32
    %360 = vector.broadcast %cst_147 : f32 to vector<1x64xf32>
    %361 = arith.addf %360, %359 : vector<1x64xf32>
    %362 = arith.divf %360, %361 : vector<1x64xf32>
    %363 = vector.extract_strided_slice %362 {offsets = [0, 0], sizes = [1, 32], strides = [1, 1]} : vector<1x64xf32> to vector<1x32xf32>
    %364 = vector.extract_strided_slice %362 {offsets = [0, 32], sizes = [1, 32], strides = [1, 1]} : vector<1x64xf32> to vector<1x32xf32>
    %365 = vector.extract_strided_slice %352 {offsets = [0, 64], sizes = [1, 32], strides = [1, 1]} : vector<1x96xf32> to vector<1x32xf32>
    %366 = arith.addf %365, %80 : vector<1x32xf32>
    %367 = vector.extract_strided_slice %353 {offsets = [0, 64], sizes = [1, 32], strides = [1, 1]} : vector<1x96xf32> to vector<1x32xf32>
    %368 = arith.addf %367, %81 : vector<1x32xf32>
    %369 = arith.mulf %363, %368 : vector<1x32xf32>
    %370 = arith.addf %366, %369 : vector<1x32xf32>
    %371 = math.tanh %370 : vector<1x32xf32>
    %cst_148 = arith.constant 1.000000e+00 : f32
    %372 = vector.broadcast %cst_148 : f32 to vector<1x32xf32>
    %373 = arith.subf %372, %364 : vector<1x32xf32>
    %374 = arith.mulf %373, %371 : vector<1x32xf32>
    %375 = arith.mulf %364, %327 : vector<1x32xf32>
    %376 = arith.addf %374, %375 : vector<1x32xf32>
    %c5_149 = arith.constant 5 : index
    %c0_150 = arith.constant 0 : index
    %377 = vector.load %arg19[%c5_149, %c0_150] : memref<8x32xf32, #tpu.memory_space<vmem>>, vector<1x32xf32>
    tpu.vector_store %arg19[%c5_149, %c0_150], %376 {strides = array<i32>} : memref<8x32xf32, #tpu.memory_space<vmem>>, vector<1x32xf32>,
    %c6_151 = arith.constant 6 : index
    %c0_152 = arith.constant 0 : index
    %378 = vector.load %arg18[%c6_151, %c0_152] : memref<8x96xf32, #tpu.memory_space<vmem>>, vector<1x96xf32>
    %cst_153 = arith.constant dense<0.000000e+00> : vector<1x96xf32>
    %379 = tpu.matmul %351, %75, %cst_153 {dimension_numbers = #tpu.dot_dimension_numbers<[1], [0], [0], [1], [0, 0, 1, 1], [], []>} : vector<1x32xf32>, vector<32x96xf32>, vector<1x96xf32> -> vector<1x96xf32>
    %380 = vector.extract_strided_slice %378 {offsets = [0, 0], sizes = [1, 64], strides = [1, 1]} : vector<1x96xf32> to vector<1x64xf32>
    %381 = vector.extract_strided_slice %379 {offsets = [0, 0], sizes = [1, 64], strides = [1, 1]} : vector<1x96xf32> to vector<1x64xf32>
    %382 = arith.addf %380, %381 : vector<1x64xf32>
    %383 = arith.negf %382 : vector<1x64xf32>
    %384 = math.exp %383 : vector<1x64xf32>
    %cst_154 = arith.constant 1.000000e+00 : f32
    %385 = vector.broadcast %cst_154 : f32 to vector<1x64xf32>
    %386 = arith.addf %385, %384 : vector<1x64xf32>
    %387 = arith.divf %385, %386 : vector<1x64xf32>
    %388 = vector.extract_strided_slice %387 {offsets = [0, 0], sizes = [1, 32], strides = [1, 1]} : vector<1x64xf32> to vector<1x32xf32>
    %389 = vector.extract_strided_slice %387 {offsets = [0, 32], sizes = [1, 32], strides = [1, 1]} : vector<1x64xf32> to vector<1x32xf32>
    %390 = vector.extract_strided_slice %378 {offsets = [0, 64], sizes = [1, 32], strides = [1, 1]} : vector<1x96xf32> to vector<1x32xf32>
    %391 = vector.extract_strided_slice %379 {offsets = [0, 64], sizes = [1, 32], strides = [1, 1]} : vector<1x96xf32> to vector<1x32xf32>
    %392 = arith.addf %391, %76 : vector<1x32xf32>
    %393 = arith.mulf %388, %392 : vector<1x32xf32>
    %394 = arith.addf %390, %393 : vector<1x32xf32>
    %395 = math.tanh %394 : vector<1x32xf32>
    %cst_155 = arith.constant 1.000000e+00 : f32
    %396 = vector.broadcast %cst_155 : f32 to vector<1x32xf32>
    %397 = arith.subf %396, %389 : vector<1x32xf32>
    %398 = arith.mulf %397, %395 : vector<1x32xf32>
    %399 = arith.mulf %389, %351 : vector<1x32xf32>
    %400 = arith.addf %398, %399 : vector<1x32xf32>
    %cst_156 = arith.constant dense<0.000000e+00> : vector<1x96xf32>
    %401 = tpu.matmul %400, %77, %cst_156 {dimension_numbers = #tpu.dot_dimension_numbers<[1], [0], [0], [1], [0, 0, 1, 1], [], []>} : vector<1x32xf32>, vector<32x96xf32>, vector<1x96xf32> -> vector<1x96xf32>
    %cst_157 = arith.constant dense<0.000000e+00> : vector<1x96xf32>
    %402 = tpu.matmul %376, %78, %cst_157 {dimension_numbers = #tpu.dot_dimension_numbers<[1], [0], [0], [1], [0, 0, 1, 1], [], []>} : vector<1x32xf32>, vector<32x96xf32>, vector<1x96xf32> -> vector<1x96xf32>
    %403 = vector.extract_strided_slice %401 {offsets = [0, 0], sizes = [1, 64], strides = [1, 1]} : vector<1x96xf32> to vector<1x64xf32>
    %404 = vector.extract_strided_slice %402 {offsets = [0, 0], sizes = [1, 64], strides = [1, 1]} : vector<1x96xf32> to vector<1x64xf32>
    %405 = arith.addf %403, %404 : vector<1x64xf32>
    %406 = arith.addf %405, %79 : vector<1x64xf32>
    %407 = arith.negf %406 : vector<1x64xf32>
    %408 = math.exp %407 : vector<1x64xf32>
    %cst_158 = arith.constant 1.000000e+00 : f32
    %409 = vector.broadcast %cst_158 : f32 to vector<1x64xf32>
    %410 = arith.addf %409, %408 : vector<1x64xf32>
    %411 = arith.divf %409, %410 : vector<1x64xf32>
    %412 = vector.extract_strided_slice %411 {offsets = [0, 0], sizes = [1, 32], strides = [1, 1]} : vector<1x64xf32> to vector<1x32xf32>
    %413 = vector.extract_strided_slice %411 {offsets = [0, 32], sizes = [1, 32], strides = [1, 1]} : vector<1x64xf32> to vector<1x32xf32>
    %414 = vector.extract_strided_slice %401 {offsets = [0, 64], sizes = [1, 32], strides = [1, 1]} : vector<1x96xf32> to vector<1x32xf32>
    %415 = arith.addf %414, %80 : vector<1x32xf32>
    %416 = vector.extract_strided_slice %402 {offsets = [0, 64], sizes = [1, 32], strides = [1, 1]} : vector<1x96xf32> to vector<1x32xf32>
    %417 = arith.addf %416, %81 : vector<1x32xf32>
    %418 = arith.mulf %412, %417 : vector<1x32xf32>
    %419 = arith.addf %415, %418 : vector<1x32xf32>
    %420 = math.tanh %419 : vector<1x32xf32>
    %cst_159 = arith.constant 1.000000e+00 : f32
    %421 = vector.broadcast %cst_159 : f32 to vector<1x32xf32>
    %422 = arith.subf %421, %413 : vector<1x32xf32>
    %423 = arith.mulf %422, %420 : vector<1x32xf32>
    %424 = arith.mulf %413, %376 : vector<1x32xf32>
    %425 = arith.addf %423, %424 : vector<1x32xf32>
    %c6_160 = arith.constant 6 : index
    %c0_161 = arith.constant 0 : index
    %426 = vector.load %arg19[%c6_160, %c0_161] : memref<8x32xf32, #tpu.memory_space<vmem>>, vector<1x32xf32>
    tpu.vector_store %arg19[%c6_160, %c0_161], %425 {strides = array<i32>} : memref<8x32xf32, #tpu.memory_space<vmem>>, vector<1x32xf32>,
    %c7_162 = arith.constant 7 : index
    %c0_163 = arith.constant 0 : index
    %427 = vector.load %arg18[%c7_162, %c0_163] : memref<8x96xf32, #tpu.memory_space<vmem>>, vector<1x96xf32>
    %cst_164 = arith.constant dense<0.000000e+00> : vector<1x96xf32>
    %428 = tpu.matmul %400, %75, %cst_164 {dimension_numbers = #tpu.dot_dimension_numbers<[1], [0], [0], [1], [0, 0, 1, 1], [], []>} : vector<1x32xf32>, vector<32x96xf32>, vector<1x96xf32> -> vector<1x96xf32>
    %429 = vector.extract_strided_slice %427 {offsets = [0, 0], sizes = [1, 64], strides = [1, 1]} : vector<1x96xf32> to vector<1x64xf32>
    %430 = vector.extract_strided_slice %428 {offsets = [0, 0], sizes = [1, 64], strides = [1, 1]} : vector<1x96xf32> to vector<1x64xf32>
    %431 = arith.addf %429, %430 : vector<1x64xf32>
    %432 = arith.negf %431 : vector<1x64xf32>
    %433 = math.exp %432 : vector<1x64xf32>
    %cst_165 = arith.constant 1.000000e+00 : f32
    %434 = vector.broadcast %cst_165 : f32 to vector<1x64xf32>
    %435 = arith.addf %434, %433 : vector<1x64xf32>
    %436 = arith.divf %434, %435 : vector<1x64xf32>
    %437 = vector.extract_strided_slice %436 {offsets = [0, 0], sizes = [1, 32], strides = [1, 1]} : vector<1x64xf32> to vector<1x32xf32>
    %438 = vector.extract_strided_slice %436 {offsets = [0, 32], sizes = [1, 32], strides = [1, 1]} : vector<1x64xf32> to vector<1x32xf32>
    %439 = vector.extract_strided_slice %427 {offsets = [0, 64], sizes = [1, 32], strides = [1, 1]} : vector<1x96xf32> to vector<1x32xf32>
    %440 = vector.extract_strided_slice %428 {offsets = [0, 64], sizes = [1, 32], strides = [1, 1]} : vector<1x96xf32> to vector<1x32xf32>
    %441 = arith.addf %440, %76 : vector<1x32xf32>
    %442 = arith.mulf %437, %441 : vector<1x32xf32>
    %443 = arith.addf %439, %442 : vector<1x32xf32>
    %444 = math.tanh %443 : vector<1x32xf32>
    %cst_166 = arith.constant 1.000000e+00 : f32
    %445 = vector.broadcast %cst_166 : f32 to vector<1x32xf32>
    %446 = arith.subf %445, %438 : vector<1x32xf32>
    %447 = arith.mulf %446, %444 : vector<1x32xf32>
    %448 = arith.mulf %438, %400 : vector<1x32xf32>
    %449 = arith.addf %447, %448 : vector<1x32xf32>
    %cst_167 = arith.constant dense<0.000000e+00> : vector<1x96xf32>
    %450 = tpu.matmul %449, %77, %cst_167 {dimension_numbers = #tpu.dot_dimension_numbers<[1], [0], [0], [1], [0, 0, 1, 1], [], []>} : vector<1x32xf32>, vector<32x96xf32>, vector<1x96xf32> -> vector<1x96xf32>
    %cst_168 = arith.constant dense<0.000000e+00> : vector<1x96xf32>
    %451 = tpu.matmul %425, %78, %cst_168 {dimension_numbers = #tpu.dot_dimension_numbers<[1], [0], [0], [1], [0, 0, 1, 1], [], []>} : vector<1x32xf32>, vector<32x96xf32>, vector<1x96xf32> -> vector<1x96xf32>
    %452 = vector.extract_strided_slice %450 {offsets = [0, 0], sizes = [1, 64], strides = [1, 1]} : vector<1x96xf32> to vector<1x64xf32>
    %453 = vector.extract_strided_slice %451 {offsets = [0, 0], sizes = [1, 64], strides = [1, 1]} : vector<1x96xf32> to vector<1x64xf32>
    %454 = arith.addf %452, %453 : vector<1x64xf32>
    %455 = arith.addf %454, %79 : vector<1x64xf32>
    %456 = arith.negf %455 : vector<1x64xf32>
    %457 = math.exp %456 : vector<1x64xf32>
    %cst_169 = arith.constant 1.000000e+00 : f32
    %458 = vector.broadcast %cst_169 : f32 to vector<1x64xf32>
    %459 = arith.addf %458, %457 : vector<1x64xf32>
    %460 = arith.divf %458, %459 : vector<1x64xf32>
    %461 = vector.extract_strided_slice %460 {offsets = [0, 0], sizes = [1, 32], strides = [1, 1]} : vector<1x64xf32> to vector<1x32xf32>
    %462 = vector.extract_strided_slice %460 {offsets = [0, 32], sizes = [1, 32], strides = [1, 1]} : vector<1x64xf32> to vector<1x32xf32>
    %463 = vector.extract_strided_slice %450 {offsets = [0, 64], sizes = [1, 32], strides = [1, 1]} : vector<1x96xf32> to vector<1x32xf32>
    %464 = arith.addf %463, %80 : vector<1x32xf32>
    %465 = vector.extract_strided_slice %451 {offsets = [0, 64], sizes = [1, 32], strides = [1, 1]} : vector<1x96xf32> to vector<1x32xf32>
    %466 = arith.addf %465, %81 : vector<1x32xf32>
    %467 = arith.mulf %461, %466 : vector<1x32xf32>
    %468 = arith.addf %464, %467 : vector<1x32xf32>
    %469 = math.tanh %468 : vector<1x32xf32>
    %cst_170 = arith.constant 1.000000e+00 : f32
    %470 = vector.broadcast %cst_170 : f32 to vector<1x32xf32>
    %471 = arith.subf %470, %462 : vector<1x32xf32>
    %472 = arith.mulf %471, %469 : vector<1x32xf32>
    %473 = arith.mulf %462, %425 : vector<1x32xf32>
    %474 = arith.addf %472, %473 : vector<1x32xf32>
    %c7_171 = arith.constant 7 : index
    %c0_172 = arith.constant 0 : index
    %475 = vector.load %arg19[%c7_171, %c0_172] : memref<8x32xf32, #tpu.memory_space<vmem>>, vector<1x32xf32>
    tpu.vector_store %arg19[%c7_171, %c0_172], %474 {strides = array<i32>} : memref<8x32xf32, #tpu.memory_space<vmem>>, vector<1x32xf32>,
    %c0_173 = arith.constant 0 : index
    %c0_174 = arith.constant 0 : index
    %476 = vector.load %arg19[%c0_173, %c0_174] : memref<8x32xf32, #tpu.memory_space<vmem>>, vector<8x32xf32>
    %c0_175 = arith.constant 0 : index
    %c0_176 = arith.constant 0 : index
    %477 = vector.load %arg13[%c0_175, %c0_176] : memref<32x2xf32, #tpu.memory_space<vmem>>, vector<32x2xf32>
    %cst_177 = arith.constant dense<0.000000e+00> : vector<8x2xf32>
    %478 = tpu.matmul %476, %477, %cst_177 {dimension_numbers = #tpu.dot_dimension_numbers<[1], [0], [0], [1], [0, 0, 1, 1], [], []>} : vector<8x32xf32>, vector<32x2xf32>, vector<8x2xf32> -> vector<8x2xf32>
    %c0_178 = arith.constant 0 : index
    %c0_179 = arith.constant 0 : index
    %479 = vector.load %arg14[%c0_178, %c0_179] : memref<1x2xf32, #tpu.memory_space<vmem>>, vector<1x2xf32>
    %480 = vector.broadcast %479 : vector<1x2xf32> to vector<8x2xf32>
    %481 = arith.addf %478, %480 : vector<8x2xf32>
    %cst_180 = arith.constant dense<0xFF800000> : vector<8xf32>
    %482 = vector.multi_reduction <maximumf>, %481, %cst_180 [1] : vector<8x2xf32> to vector<8xf32>
    %483 = vector.shape_cast %482 : vector<8xf32> to vector<8x1xf32>
    %484 = vector.broadcast %483 : vector<8x1xf32> to vector<8x2xf32>
    %485 = arith.subf %481, %484 : vector<8x2xf32>
    %486 = math.exp %485 : vector<8x2xf32>
    %cst_181 = arith.constant dense<0.000000e+00> : vector<8xf32>
    %487 = vector.multi_reduction <add>, %486, %cst_181 [1] : vector<8x2xf32> to vector<8xf32>
    %488 = vector.shape_cast %487 : vector<8xf32> to vector<8x1xf32>
    %489 = math.log %488 : vector<8x1xf32>
    %490 = arith.addf %483, %489 : vector<8x1xf32>
    %491 = vector.broadcast %490 : vector<8x1xf32> to vector<8x2xf32>
    %492 = arith.subf %481, %491 : vector<8x2xf32>
    %c0_182 = arith.constant 0 : index
    %c0_183 = arith.constant 0 : index
    %493 = vector.load %arg15[%c0_182, %c0_183] : memref<8x2xf32, #tpu.memory_space<vmem>>, vector<8x2xf32>
    tpu.vector_store %arg15[%c0_182, %c0_183], %492 {strides = array<i32>} : memref<8x2xf32, #tpu.memory_space<vmem>>, vector<8x2xf32>,
    return
  }
}

</mosaic_0001>

<llo_original>
// kernel: tpu_custom_call.1
$region0: #{tpu_custom_call.1}
  #allocation0 [shape = 'u32[]', space=smem, size = 0x4, offset = 0x4, fixed_abs, tag = 'smem constant byte address 0x4 - core index']
  #allocation1 [shape = 'u32[144,128]{1,0:T(1,128)}', space=vmem, size = 0x12000, scoped, tag = 'internal scratch']
  #allocation2 [shape = 'f32[8,32]{1,0:T(8,128)}', space=vmem, size = 0x1000, scoped, tag = 'scratch operand']
  #allocation3 [shape = 'f32[8,32]{1,0:T(8,128)}', space=vmem, size = 0x1000, scoped, tag = 'scratch operand']
  #allocation4 [shape = 'f32[8,96]{1,0:T(8,128)}', space=vmem, size = 0x1000, scoped, tag = 'scratch operand']
  #allocation5 [shape = 'f32[8,32]{1,0:T(8,128)}', space=vmem, size = 0x1000, scoped, tag = 'scratch operand']
  %s0 = inlined_call_operand.vmem [shape: s32[8], index: 0, kind: input, shape index: {}]
  %s1 = inlined_call_operand.vmem [shape: s32[8], index: 1, kind: input, shape index: {}]
  %s2 = inlined_call_operand.vmem [shape: f32[130,32], index: 2, kind: input, shape index: {}]
  %s3 = inlined_call_operand.vmem [shape: f32[32,96], index: 3, kind: input, shape index: {}]
  %s4 = inlined_call_operand.vmem [shape: f32[32,96], index: 4, kind: input, shape index: {}]
  %s5 = inlined_call_operand.vmem [shape: f32[32,96], index: 5, kind: input, shape index: {}]
  %s6 = inlined_call_operand.vmem [shape: f32[1,96], index: 6, kind: input, shape index: {}]
  %s7 = inlined_call_operand.vmem [shape: f32[1,32], index: 7, kind: input, shape index: {}]
  %s8 = inlined_call_operand.vmem [shape: f32[32,96], index: 8, kind: input, shape index: {}]
  %s9 = inlined_call_operand.vmem [shape: f32[32,96], index: 9, kind: input, shape index: {}]
  %s10 = inlined_call_operand.vmem [shape: f32[1,64], index: 10, kind: input, shape index: {}]
  %s11 = inlined_call_operand.vmem [shape: f32[1,32], index: 11, kind: input, shape index: {}]
  %s12 = inlined_call_operand.vmem [shape: f32[1,32], index: 12, kind: input, shape index: {}]
  %s13 = inlined_call_operand.vmem [shape: f32[32,2], index: 13, kind: input, shape index: {}]
  %s14 = inlined_call_operand.vmem [shape: f32[1,2], index: 14, kind: input, shape index: {}]
  %s15 = inlined_call_operand.vmem [shape: f32[8,2], index: 15, kind: output, shape index: {}]
  %s16 = sld [smem:[#allocation0]]
  $region78: #{tpu_custom_call.1} parent=0
    _
  %s18 = ssub.s32 1, %s16
  %s19 = scalar_select 0, %s18, %s16
  $region1: #{tpu_custom_call.1} parent=0
    #allocation6 [shape = 'u8[512]{0}', space=smem, size = 0x200, scoped, tag = 'input window, operand 0, single buffered']
    #allocation7 [shape = 's32[1]{0}', space=sflag, size = 0x4, scoped, tag = 'scoped memory for tpu_custom_call.1']
    #allocation8 [shape = 'u8[512]{0}', space=smem, size = 0x200, scoped, tag = 'input window, operand 1, single buffered']
    #allocation9 [shape = 's32[1]{0}', space=sflag, size = 0x4, scoped, tag = 'scoped memory for tpu_custom_call.1']
    %20 = vsyncpa [#allocation7], 0
    %21 = vsyncpa [#allocation9], 0
    // Predicated region
    $region2: #{tpu_custom_call.1} parent=1 // pred_check
      _
    $region3: #{tpu_custom_call.1} parent=1 // pred_check_branch
      %23 = sbr.rel (0) target = $region5
    $region4: #{tpu_custom_call.1} parent=1 // pred_region
      %s25 = ssub.s32 16, 16
      %26 = vsyncadd [#allocation7], %s25
      %s28 = sshll.u32 %s0, 4
      %s29 = int_to_ptr.vmem [resolvable:$true] %s28
      %31 = dma.vmem_to_smem %s29, 16, [#allocation6], [#allocation7]
    $region5: #{tpu_custom_call.1} parent=1 // pred_fallthru
      _
    // Predicated region
    $region6: #{tpu_custom_call.1} parent=1 // pred_check
      _
    $region7: #{tpu_custom_call.1} parent=1 // pred_check_branch
      %33 = sbr.rel (0) target = $region9
    $region8: #{tpu_custom_call.1} parent=1 // pred_region
      %s35 = ssub.s32 16, 16
      %36 = vsyncadd [#allocation9], %s35
      %s38 = sshll.u32 %s1, 4
      %s39 = int_to_ptr.vmem [resolvable:$true] %s38
      %41 = dma.vmem_to_smem %s39, 16, [#allocation8], [#allocation9]
    $region9: #{tpu_custom_call.1} parent=1 // pred_fallthru
      _
    // Predicated region
    $region10: #{tpu_custom_call.1} parent=1 // pred_check
      _
    $region11: #{tpu_custom_call.1} parent=1 // pred_check_branch
      %43 = sbr.rel (0) target = $region13
    $region12: #{tpu_custom_call.1} parent=1 // pred_region
      _
    $region13: #{tpu_custom_call.1} parent=1 // pred_fallthru
      _
    // Predicated region
    $region14: #{tpu_custom_call.1} parent=1 // pred_check
      _
    $region15: #{tpu_custom_call.1} parent=1 // pred_check_branch
      %45 = sbr.rel (0) target = $region17
    $region16: #{tpu_custom_call.1} parent=1 // pred_region
      _
    $region17: #{tpu_custom_call.1} parent=1 // pred_fallthru
      _
    // Predicated region
    $region18: #{tpu_custom_call.1} parent=1 // pred_check
      _
    $region19: #{tpu_custom_call.1} parent=1 // pred_check_branch
      %47 = sbr.rel (0) target = $region21
    $region20: #{tpu_custom_call.1} parent=1 // pred_region
      _
    $region21: #{tpu_custom_call.1} parent=1 // pred_fallthru
      _
    // Predicated region
    $region22: #{tpu_custom_call.1} parent=1 // pred_check
      _
    $region23: #{tpu_custom_call.1} parent=1 // pred_check_branch
      %49 = sbr.rel (0) target = $region25
    $region24: #{tpu_custom_call.1} parent=1 // pred_region
      _
    $region25: #{tpu_custom_call.1} parent=1 // pred_fallthru
      _
    // Predicated region
    $region26: #{tpu_custom_call.1} parent=1 // pred_check
      _
    $region27: #{tpu_custom_call.1} parent=1 // pred_check_branch
      %51 = sbr.rel (0) target = $region29
    $region28: #{tpu_custom_call.1} parent=1 // pred_region
      _
    $region29: #{tpu_custom_call.1} parent=1 // pred_fallthru
      _
    // Predicated region
    $region30: #{tpu_custom_call.1} parent=1 // pred_check
      _
    $region31: #{tpu_custom_call.1} parent=1 // pred_check_branch
      %53 = sbr.rel (0) target = $region33
    $region32: #{tpu_custom_call.1} parent=1 // pred_region
      _
    $region33: #{tpu_custom_call.1} parent=1 // pred_fallthru
      _
    // Predicated region
    $region34: #{tpu_custom_call.1} parent=1 // pred_check
      _
    $region35: #{tpu_custom_call.1} parent=1 // pred_check_branch
      %55 = sbr.rel (0) target = $region37
    $region36: #{tpu_custom_call.1} parent=1 // pred_region
      _
    $region37: #{tpu_custom_call.1} parent=1 // pred_fallthru
      _
    // Predicated region
    $region38: #{tpu_custom_call.1} parent=1 // pred_check
      _
    $region39: #{tpu_custom_call.1} parent=1 // pred_check_branch
      %57 = sbr.rel (0) target = $region41
    $region40: #{tpu_custom_call.1} parent=1 // pred_region
      _
    $region41: #{tpu_custom_call.1} parent=1 // pred_fallthru
      _
    // Predicated region
    $region42: #{tpu_custom_call.1} parent=1 // pred_check
      _
    $region43: #{tpu_custom_call.1} parent=1 // pred_check_branch
      %59 = sbr.rel (0) target = $region45
    $region44: #{tpu_custom_call.1} parent=1 // pred_region
      _
    $region45: #{tpu_custom_call.1} parent=1 // pred_fallthru
      _
    // Predicated region
    $region46: #{tpu_custom_call.1} parent=1 // pred_check
      _
    $region47: #{tpu_custom_call.1} parent=1 // pred_check_branch
      %61 = sbr.rel (0) target = $region49
    $region48: #{tpu_custom_call.1} parent=1 // pred_region
      _
    $region49: #{tpu_custom_call.1} parent=1 // pred_fallthru
      _
    // Predicated region
    $region50: #{tpu_custom_call.1} parent=1 // pred_check
      _
    $region51: #{tpu_custom_call.1} parent=1 // pred_check_branch
      %63 = sbr.rel (0) target = $region53
    $region52: #{tpu_custom_call.1} parent=1 // pred_region
      _
    $region53: #{tpu_custom_call.1} parent=1 // pred_fallthru
      _
    // Predicated region
    $region54: #{tpu_custom_call.1} parent=1 // pred_check
      _
    $region55: #{tpu_custom_call.1} parent=1 // pred_check_branch
      %65 = sbr.rel (0) target = $region57
    $region56: #{tpu_custom_call.1} parent=1 // pred_region
      _
    $region57: #{tpu_custom_call.1} parent=1 // pred_fallthru
      _
    // Predicated region
    $region58: #{tpu_custom_call.1} parent=1 // pred_check
      _
    $region59: #{tpu_custom_call.1} parent=1 // pred_check_branch
      %67 = sbr.rel (0) target = $region61
    $region60: #{tpu_custom_call.1} parent=1 // pred_region
      _
    $region61: #{tpu_custom_call.1} parent=1 // pred_fallthru
      _
    // Predicated region
    $region62: #{tpu_custom_call.1} parent=1 // pred_check
      _
    $region63: #{tpu_custom_call.1} parent=1 // pred_check_branch
      %69 = sbr.rel (0) target = $region65
    $region64: #{tpu_custom_call.1} parent=1 // pred_region
      %70 = dma.done [#allocation7], 16
    $region65: #{tpu_custom_call.1} parent=1 // pred_fallthru
      _
    // Predicated region
    $region66: #{tpu_custom_call.1} parent=1 // pred_check
      _
    $region67: #{tpu_custom_call.1} parent=1 // pred_check_branch
      %72 = sbr.rel (0) target = $region69
    $region68: #{tpu_custom_call.1} parent=1 // pred_region
      %73 = dma.done [#allocation9], 16
    $region69: #{tpu_custom_call.1} parent=1 // pred_fallthru
      _
    %74 = sfence
    %s75 = sld [smem:[#allocation6]]
    %s76 = sld [smem:[#allocation8]]
    %s77 = scalar_lea.vmem %s2, %s75
    %v78 = vld [vmem:[%s77] sm:$0x1]
    %vm79 = vcmask 253952
    %80 = vst.msk [vmem:[#allocation2] sm:$0x1] %vm79, %v78
    %s81 = scalar_lea.vmem %s2, %s76
    %v82 = vld [vmem:[%s81] sm:$0x1]
    %83 = vst.msk [vmem:[#allocation3] sm:$0x1] %vm79, %v82
    %s84 = sld [smem:[#allocation6 + $0x1]]
    %s85 = sld [smem:[#allocation8 + $0x1]]
    %s86 = scalar_lea.vmem %s2, %s84
    %v87 = vld [vmem:[%s86] sm:$0x1]
    %88 = vst.msk [vmem:[#allocation2 + $0x1] sm:$0x1] %vm79, %v87
    %s89 = scalar_lea.vmem %s2, %s85
    %v90 = vld [vmem:[%s89] sm:$0x1]
    %91 = vst.msk [vmem:[#allocation3 + $0x1] sm:$0x1] %vm79, %v90
    %s92 = sld [smem:[#allocation6 + $0x2]]
    %s93 = sld [smem:[#allocation8 + $0x2]]
    %s94 = scalar_lea.vmem %s2, %s92
    %v95 = vld [vmem:[%s94] sm:$0x1]
    %96 = vst.msk [vmem:[#allocation2 + $0x2] sm:$0x1] %vm79, %v95
    %s97 = scalar_lea.vmem %s2, %s93
    %v98 = vld [vmem:[%s97] sm:$0x1]
    %99 = vst.msk [vmem:[#allocation3 + $0x2] sm:$0x1] %vm79, %v98
    %s100 = sld [smem:[#allocation6 + $0x3]]
    %s101 = sld [smem:[#allocation8 + $0x3]]
    %s102 = scalar_lea.vmem %s2, %s100
    %v103 = vld [vmem:[%s102] sm:$0x1]
    %104 = vst.msk [vmem:[#allocation2 + $0x3] sm:$0x1] %vm79, %v103
    %s105 = scalar_lea.vmem %s2, %s101
    %v106 = vld [vmem:[%s105] sm:$0x1]
    %107 = vst.msk [vmem:[#allocation3 + $0x3] sm:$0x1] %vm79, %v106
    %s108 = sld [smem:[#allocation6 + $0x4]]
    %s109 = sld [smem:[#allocation8 + $0x4]]
    %s110 = scalar_lea.vmem %s2, %s108
    %v111 = vld [vmem:[%s110] sm:$0x1]
    %112 = vst.msk [vmem:[#allocation2 + $0x4] sm:$0x1] %vm79, %v111
    %s113 = scalar_lea.vmem %s2, %s109
    %v114 = vld [vmem:[%s113] sm:$0x1]
    %115 = vst.msk [vmem:[#allocation3 + $0x4] sm:$0x1] %vm79, %v114
    %s116 = sld [smem:[#allocation6 + $0x5]]
    %s117 = sld [smem:[#allocation8 + $0x5]]
    %s118 = scalar_lea.vmem %s2, %s116
    %v119 = vld [vmem:[%s118] sm:$0x1]
    %120 = vst.msk [vmem:[#allocation2 + $0x5] sm:$0x1] %vm79, %v119
    %s121 = scalar_lea.vmem %s2, %s117
    %v122 = vld [vmem:[%s121] sm:$0x1]
    %123 = vst.msk [vmem:[#allocation3 + $0x5] sm:$0x1] %vm79, %v122
    %s124 = sld [smem:[#allocation6 + $0x6]]
    %s125 = sld [smem:[#allocation8 + $0x6]]
    %s126 = scalar_lea.vmem %s2, %s124
    %v127 = vld [vmem:[%s126] sm:$0x1]
    %128 = vst.msk [vmem:[#allocation2 + $0x6] sm:$0x1] %vm79, %v127
    %s129 = scalar_lea.vmem %s2, %s125
    %v130 = vld [vmem:[%s129] sm:$0x1]
    %131 = vst.msk [vmem:[#allocation3 + $0x6] sm:$0x1] %vm79, %v130
    %s132 = sld [smem:[#allocation6 + $0x7]]
    %s133 = sld [smem:[#allocation8 + $0x7]]
    %s134 = scalar_lea.vmem %s2, %s132
    %v135 = vld [vmem:[%s134] sm:$0x1]
    %136 = vst.msk [vmem:[#allocation2 + $0x7] sm:$0x1] %vm79, %v135
    %s137 = scalar_lea.vmem %s2, %s133
    %v138 = vld [vmem:[%s137] sm:$0x1]
    %139 = vst.msk [vmem:[#allocation3 + $0x7] sm:$0x1] %vm79, %v138
    %v140 = vld [vmem:[#allocation2] sm:$0xff]
    %v141 = vld [vmem:[%s3] sm:$0xff]
    %v142 = vld [vmem:[%s3 + $0x8] sm:$0xff]
    %v143 = vld [vmem:[%s3 + $0x10] sm:$0xff]
    %v144 = vld [vmem:[%s3 + $0x18] sm:$0xff]
    %v145 = vld [vmem:[#allocation3] sm:$0xff]
    %v146 = vld [vmem:[%s4] sm:$0xff]
    %v147 = vld [vmem:[%s4 + $0x8] sm:$0xff]
    %v148 = vld [vmem:[%s4 + $0x10] sm:$0xff]
    %v149 = vld [vmem:[%s4 + $0x18] sm:$0xff]
    %vm150 = vcmask 261120
    %v152 = vsel %vm150, %v145, 0
    %154 = vmatprep.subr.mxu0 0.0
    %155 = vmatpush1.msra.mxu0 0.0
    %156 = vmatprep.subr.mxu0 0.0
    %157 = vmatpush1.msra.mxu0 0.0
    %158 = vmatprep.subr.mxu0 0.0
    %159 = vmatpush1.msra.mxu0 0.0
    %160 = vmatprep.subr.mxu0 0.0
    %161 = vmatpush1.msra.mxu0 0.0
    %162 = vmatprep.subr.mxu0 0.0
    %163 = vmatpush1.msra.mxu0 0.0
    %164 = vmatprep.subr.mxu0 0.0
    %165 = vmatpush1.msra.mxu0 0.0
    %166 = vmatprep.subr.mxu0 0.0
    %167 = vmatpush1.msra.mxu0 0.0
    %168 = vmatprep.subr.mxu0 0.0
    %169 = vmatpush1.msra.mxu0 0.0
    %170 = vmatprep.subr.mxu0 0.0
    %171 = vmatpush1.msra.mxu0 0.0
    %172 = vmatprep.subr.mxu0 0.0
    %173 = vmatpush1.msra.mxu0 0.0
    %174 = vmatprep.subr.mxu0 0.0
    %175 = vmatpush1.msra.mxu0 0.0
    %176 = vmatprep.subr.mxu0 0.0
    %177 = vmatpush1.msra.mxu0 0.0
    %178 = vmatprep.subr.mxu0 0.0
    %179 = vmatpush1.msra.mxu0 %v149
    %180 = vmatprep.subr.mxu0 0.0
    %181 = vmatpush1.msra.mxu0 %v148
    %182 = vmatprep.subr.mxu0 0.0
    %183 = vmatpush1.msra.mxu0 %v147
    %184 = vmatprep.subr.mxu0 0.0
    %185 = vmatpush1.msra.mxu0 %v146
    %186 = vmatprep.subr.mxu0 0.0
    %187 = vmatpush2.msra.mxu0 0.0
    %188 = vmatprep.subr.mxu0 0.0
    %189 = vmatpush2.msra.mxu0 0.0
    %190 = vmatprep.subr.mxu0 0.0
    %191 = vmatpush2.msra.mxu0 0.0
    %192 = vmatprep.subr.mxu0 0.0
    %193 = vmatpush2.msra.mxu0 0.0
    %194 = vmatprep.subr.mxu0 0.0
    %195 = vmatpush2.msra.mxu0 0.0
    %196 = vmatprep.subr.mxu0 0.0
    %197 = vmatpush2.msra.mxu0 0.0
    %198 = vmatprep.subr.mxu0 0.0
    %199 = vmatpush2.msra.mxu0 0.0
    %200 = vmatprep.subr.mxu0 0.0
    %201 = vmatpush2.msra.mxu0 0.0
    %202 = vmatprep.subr.mxu0 0.0
    %203 = vmatpush2.msra.mxu0 0.0
    %204 = vmatprep.subr.mxu0 0.0
    %205 = vmatpush2.msra.mxu0 0.0
    %206 = vmatprep.subr.mxu0 0.0
    %207 = vmatpush2.msra.mxu0 0.0
    %208 = vmatprep.subr.mxu0 0.0
    %209 = vmatpush2.msra.mxu0 0.0
    %210 = vmatprep.subr.mxu0 0.0
    %211 = vmatpush2.msra.mxu0 0.0
    %212 = vmatprep.subr.mxu0 0.0
    %213 = vmatpush2.msra.mxu0 0.0
    %214 = vmatprep.subr.mxu0 0.0
    %215 = vmatpush2.msra.mxu0 0.0
    %216 = vmatprep.subr.mxu0 0.0
    %217 = vmatpush2.msra.mxu0 0.0
    %218 = vmatprep.mubr.f32.mxu0 0.0
    %219 = vmatmul.mubr.f32.gmra.mxu0 %v152
    %v220 = vpop.f32.mrf.mxu0
    %v221 = vadd.f32 0.0, %v220
    %v222 = vpop.f32.mrf.mxu0
    %223 = vdwg.mxu0
    %v225 = vsel %vm150, %v140, 0
    %227 = vmatprep.subr.mxu0 0.0
    %228 = vmatpush1.msra.mxu0 0.0
    %229 = vmatprep.subr.mxu0 0.0
    %230 = vmatpush1.msra.mxu0 0.0
    %231 = vmatprep.subr.mxu0 0.0
    %232 = vmatpush1.msra.mxu0 0.0
    %233 = vmatprep.subr.mxu0 0.0
    %234 = vmatpush1.msra.mxu0 0.0
    %235 = vmatprep.subr.mxu0 0.0
    %236 = vmatpush1.msra.mxu0 0.0
    %237 = vmatprep.subr.mxu0 0.0
    %238 = vmatpush1.msra.mxu0 0.0
    %239 = vmatprep.subr.mxu0 0.0
    %240 = vmatpush1.msra.mxu0 0.0
    %241 = vmatprep.subr.mxu0 0.0
    %242 = vmatpush1.msra.mxu0 0.0
    %243 = vmatprep.subr.mxu0 0.0
    %244 = vmatpush1.msra.mxu0 0.0
    %245 = vmatprep.subr.mxu0 0.0
    %246 = vmatpush1.msra.mxu0 0.0
    %247 = vmatprep.subr.mxu0 0.0
    %248 = vmatpush1.msra.mxu0 0.0
    %249 = vmatprep.subr.mxu0 0.0
    %250 = vmatpush1.msra.mxu0 0.0
    %251 = vmatprep.subr.mxu0 0.0
    %252 = vmatpush1.msra.mxu0 %v144
    %253 = vmatprep.subr.mxu0 0.0
    %254 = vmatpush1.msra.mxu0 %v143
    %255 = vmatprep.subr.mxu0 0.0
    %256 = vmatpush1.msra.mxu0 %v142
    %257 = vmatprep.subr.mxu0 0.0
    %258 = vmatpush1.msra.mxu0 %v141
    %259 = vmatprep.subr.mxu0 0.0
    %260 = vmatpush2.msra.mxu0 0.0
    %261 = vmatprep.subr.mxu0 0.0
    %262 = vmatpush2.msra.mxu0 0.0
    %263 = vmatprep.subr.mxu0 0.0
    %264 = vmatpush2.msra.mxu0 0.0
    %265 = vmatprep.subr.mxu0 0.0
    %266 = vmatpush2.msra.mxu0 0.0
    %267 = vmatprep.subr.mxu0 0.0
    %268 = vmatpush2.msra.mxu0 0.0
    %269 = vmatprep.subr.mxu0 0.0
    %270 = vmatpush2.msra.mxu0 0.0
    %271 = vmatprep.subr.mxu0 0.0
    %272 = vmatpush2.msra.mxu0 0.0
    %273 = vmatprep.subr.mxu0 0.0
    %274 = vmatpush2.msra.mxu0 0.0
    %275 = vmatprep.subr.mxu0 0.0
    %276 = vmatpush2.msra.mxu0 0.0
    %277 = vmatprep.subr.mxu0 0.0
    %278 = vmatpush2.msra.mxu0 0.0
    %279 = vmatprep.subr.mxu0 0.0
    %280 = vmatpush2.msra.mxu0 0.0
    %281 = vmatprep.subr.mxu0 0.0
    %282 = vmatpush2.msra.mxu0 0.0
    %283 = vmatprep.subr.mxu0 0.0
    %284 = vmatpush2.msra.mxu0 0.0
    %285 = vmatprep.subr.mxu0 0.0
    %286 = vmatpush2.msra.mxu0 0.0
    %287 = vmatprep.subr.mxu0 0.0
    %288 = vmatpush2.msra.mxu0 0.0
    %289 = vmatprep.subr.mxu0 0.0
    %290 = vmatpush2.msra.mxu0 0.0
    %291 = vmatprep.mubr.f32.mxu0 0.0
    %292 = vmatmul.mubr.f32.gmra.mxu0 %v225
    %v293 = vpop.f32.mrf.mxu0
    %v294 = vadd.f32 %v221, %v293
    %v295 = vpop.f32.mrf.mxu0
    %296 = vdwg.mxu0
    %v297 = vld [vmem:[%s6] sm:$0x1]
    %v299 = vlaneseq
    %v300 = vshrl.u32 %v299, 7
    %v301 = vsub.s32 0, %v300
    %v302 = vrot.slane %v297, %v301
    %v304 = vadd.f32 %v294, %v302
    %vm305 = vcmask 785408
    %306 = vst.msk [vmem:[#allocation4] sm:$0xff] %vm305, %v304
    %v307 = vld [vmem:[%s5] sm:$0xff]
    %v308 = vld [vmem:[%s5 + $0x8] sm:$0xff]
    %v309 = vld [vmem:[%s5 + $0x10] sm:$0xff]
    %v310 = vld [vmem:[%s5 + $0x18] sm:$0xff]
    %v311 = vld [vmem:[%s7] sm:$0x1]
    %v312 = vld [vmem:[%s8] sm:$0xff]
    %v313 = vld [vmem:[%s8 + $0x8] sm:$0xff]
    %v314 = vld [vmem:[%s8 + $0x10] sm:$0xff]
    %v315 = vld [vmem:[%s8 + $0x18] sm:$0xff]
    %v316 = vld [vmem:[%s9] sm:$0xff]
    %v317 = vld [vmem:[%s9 + $0x8] sm:$0xff]
    %v318 = vld [vmem:[%s9 + $0x10] sm:$0xff]
    %v319 = vld [vmem:[%s9 + $0x18] sm:$0xff]
    %v320 = vld [vmem:[%s10] sm:$0x1]
    %v321 = vld [vmem:[%s11] sm:$0x1]
    %v322 = vld [vmem:[%s12] sm:$0x1]
    %v323 = vld [vmem:[#allocation4] sm:$0x1]
    %v325 = vsel %vm150, 0.0, 0
    %327 = vmatprep.subr.mxu0 0.0
    %328 = vmatpush1.msra.mxu0 0.0
    %329 = vmatprep.subr.mxu0 0.0
    %330 = vmatpush1.msra.mxu0 0.0
    %331 = vmatprep.subr.mxu0 0.0
    %332 = vmatpush1.msra.mxu0 0.0
    %333 = vmatprep.subr.mxu0 0.0
    %334 = vmatpush1.msra.mxu0 0.0
    %335 = vmatprep.subr.mxu0 0.0
    %336 = vmatpush1.msra.mxu0 0.0
    %337 = vmatprep.subr.mxu0 0.0
    %338 = vmatpush1.msra.mxu0 0.0
    %339 = vmatprep.subr.mxu0 0.0
    %340 = vmatpush1.msra.mxu0 0.0
    %341 = vmatprep.subr.mxu0 0.0
    %342 = vmatpush1.msra.mxu0 0.0
    %343 = vmatprep.subr.mxu0 0.0
    %344 = vmatpush1.msra.mxu0 0.0
    %345 = vmatprep.subr.mxu0 0.0
    %346 = vmatpush1.msra.mxu0 0.0
    %347 = vmatprep.subr.mxu0 0.0
    %348 = vmatpush1.msra.mxu0 0.0
    %349 = vmatprep.subr.mxu0 0.0
    %350 = vmatpush1.msra.mxu0 0.0
    %351 = vmatprep.subr.mxu0 0.0
    %352 = vmatpush1.msra.mxu0 %v310
    %353 = vmatprep.subr.mxu0 0.0
    %354 = vmatpush1.msra.mxu0 %v309
    %355 = vmatprep.subr.mxu0 0.0
    %356 = vmatpush1.msra.mxu0 %v308
    %357 = vmatprep.subr.mxu0 0.0
    %358 = vmatpush1.msra.mxu0 %v307
    %359 = vmatprep.subr.mxu0 0.0
    %360 = vmatpush2.msra.mxu0 0.0
    %361 = vmatprep.subr.mxu0 0.0
    %362 = vmatpush2.msra.mxu0 0.0
    %363 = vmatprep.subr.mxu0 0.0
    %364 = vmatpush2.msra.mxu0 0.0
    %365 = vmatprep.subr.mxu0 0.0
    %366 = vmatpush2.msra.mxu0 0.0
    %367 = vmatprep.subr.mxu0 0.0
    %368 = vmatpush2.msra.mxu0 0.0
    %369 = vmatprep.subr.mxu0 0.0
    %370 = vmatpush2.msra.mxu0 0.0
    %371 = vmatprep.subr.mxu0 0.0
    %372 = vmatpush2.msra.mxu0 0.0
    %373 = vmatprep.subr.mxu0 0.0
    %374 = vmatpush2.msra.mxu0 0.0
    %375 = vmatprep.subr.mxu0 0.0
    %376 = vmatpush2.msra.mxu0 0.0
    %377 = vmatprep.subr.mxu0 0.0
    %378 = vmatpush2.msra.mxu0 0.0
    %379 = vmatprep.subr.mxu0 0.0
    %380 = vmatpush2.msra.mxu0 0.0
    %381 = vmatprep.subr.mxu0 0.0
    %382 = vmatpush2.msra.mxu0 0.0
    %383 = vmatprep.subr.mxu0 0.0
    %384 = vmatpush2.msra.mxu0 0.0
    %385 = vmatprep.subr.mxu0 0.0
    %386 = vmatpush2.msra.mxu0 0.0
    %387 = vmatprep.subr.mxu0 0.0
    %388 = vmatpush2.msra.mxu0 0.0
    %389 = vmatprep.subr.mxu0 0.0
    %390 = vmatpush2.msra.mxu0 0.0
    %391 = vmatprep.mubr.f32.mxu0 0.0
    %392 = vmatmul.mubr.f32.gmra.mxu0 %v325
    %v393 = vpop.f32.mrf.mxu0
    %v394 = vadd.f32 0.0, %v393
    %v395 = vpop.f32.mrf.mxu0
    %396 = vdwg.mxu0
    %v397 = vadd.f32 %v323, %v394
    %v398 = vxor.u32 %v397, 2147483648
    %v399 = vmul.f32 %v398, 1.442695
    %v400 = vpow.pop %v399
    %v401 = vadd.f32 %v400, 1.0
    %v402 = vrcp.pop %v401
    %v403 = vmul.f32 1.0, %v402
    %v405 = vlaneseq
    %v406 = vshrl.u32 %v405, 7
    %v407 = vsub.s32 0, %v406
    %v408 = vrot.slane %v311, %v407
    %409 = vrot.lane.b32.xlu0 %v408, 64
    %v410 = vpop.permute.xlu0 %409
    %v412 = vadd.f32 %v394, %v410
    %414 = vrot.lane.b32.xlu0 %v412, 64
    %v415 = vpop.permute.xlu0 %414
    %v417 = vmul.f32 %v403, %v415
    %419 = vrot.lane.b32.xlu0 %v417, 64
    %v420 = vpop.permute.xlu0 %419
    %v422 = vadd.f32 %v323, %v420
    %v423 = vtanh.pop %v422
    %v424 = vsub.f32 1.0, %v403
    %426 = vrot.lane.b32.xlu0 %v423, 96
    %v427 = vpop.permute.xlu0 %426
    %v429 = vmul.f32 %v424, %v427
    %v430 = vmul.f32 %v403, 0.0
    %v431 = vadd.f32 %v429, %v430
    %433 = vrot.lane.b32.xlu0 %v431, 96
    %v434 = vpop.permute.xlu0 %433
    %v435 = vsel %vm150, %v434, 0
    %437 = vmatprep.subr.mxu0 0.0
    %438 = vmatpush1.msra.mxu0 0.0
    %439 = vmatprep.subr.mxu0 0.0
    %440 = vmatpush1.msra.mxu0 0.0
    %441 = vmatprep.subr.mxu0 0.0
    %442 = vmatpush1.msra.mxu0 0.0
    %443 = vmatprep.subr.mxu0 0.0
    %444 = vmatpush1.msra.mxu0 0.0
    %445 = vmatprep.subr.mxu0 0.0
    %446 = vmatpush1.msra.mxu0 0.0
    %447 = vmatprep.subr.mxu0 0.0
    %448 = vmatpush1.msra.mxu0 0.0
    %449 = vmatprep.subr.mxu0 0.0
    %450 = vmatpush1.msra.mxu0 0.0
    %451 = vmatprep.subr.mxu0 0.0
    %452 = vmatpush1.msra.mxu0 0.0
    %453 = vmatprep.subr.mxu0 0.0
    %454 = vmatpush1.msra.mxu0 0.0
    %455 = vmatprep.subr.mxu0 0.0
    %456 = vmatpush1.msra.mxu0 0.0
    %457 = vmatprep.subr.mxu0 0.0
    %458 = vmatpush1.msra.mxu0 0.0
    %459 = vmatprep.subr.mxu0 0.0
    %460 = vmatpush1.msra.mxu0 0.0
    %461 = vmatprep.subr.mxu0 0.0
    %462 = vmatpush1.msra.mxu0 %v315
    %463 = vmatprep.subr.mxu0 0.0
    %464 = vmatpush1.msra.mxu0 %v314
    %465 = vmatprep.subr.mxu0 0.0
    %466 = vmatpush1.msra.mxu0 %v313
    %467 = vmatprep.subr.mxu0 0.0
    %468 = vmatpush1.msra.mxu0 %v312
    %469 = vmatprep.subr.mxu0 0.0
    %470 = vmatpush2.msra.mxu0 0.0
    %471 = vmatprep.subr.mxu0 0.0
    %472 = vmatpush2.msra.mxu0 0.0
    %473 = vmatprep.subr.mxu0 0.0
    %474 = vmatpush2.msra.mxu0 0.0
    %475 = vmatprep.subr.mxu0 0.0
    %476 = vmatpush2.msra.mxu0 0.0
    %477 = vmatprep.subr.mxu0 0.0
    %478 = vmatpush2.msra.mxu0 0.0
    %479 = vmatprep.subr.mxu0 0.0
    %480 = vmatpush2.msra.mxu0 0.0
    %481 = vmatprep.subr.mxu0 0.0
    %482 = vmatpush2.msra.mxu0 0.0
    %483 = vmatprep.subr.mxu0 0.0
    %484 = vmatpush2.msra.mxu0 0.0
    %485 = vmatprep.subr.mxu0 0.0
    %486 = vmatpush2.msra.mxu0 0.0
    %487 = vmatprep.subr.mxu0 0.0
    %488 = vmatpush2.msra.mxu0 0.0
    %489 = vmatprep.subr.mxu0 0.0
    %490 = vmatpush2.msra.mxu0 0.0
    %491 = vmatprep.subr.mxu0 0.0
    %492 = vmatpush2.msra.mxu0 0.0
    %493 = vmatprep.subr.mxu0 0.0
    %494 = vmatpush2.msra.mxu0 0.0
    %495 = vmatprep.subr.mxu0 0.0
    %496 = vmatpush2.msra.mxu0 0.0
    %497 = vmatprep.subr.mxu0 0.0
    %498 = vmatpush2.msra.mxu0 0.0
    %499 = vmatprep.subr.mxu0 0.0
    %500 = vmatpush2.msra.mxu0 0.0
    %501 = vmatprep.mubr.f32.mxu0 0.0
    %502 = vmatmul.mubr.f32.gmra.mxu0 %v435
    %v503 = vpop.f32.mrf.mxu0
    %v504 = vadd.f32 0.0, %v503
    %v505 = vpop.f32.mrf.mxu0
    %506 = vdwg.mxu0
    %507 = vmatprep.subr.mxu0 0.0
    %508 = vmatpush1.msra.mxu0 0.0
    %509 = vmatprep.subr.mxu0 0.0
    %510 = vmatpush1.msra.mxu0 0.0
    %511 = vmatprep.subr.mxu0 0.0
    %512 = vmatpush1.msra.mxu0 0.0
    %513 = vmatprep.subr.mxu0 0.0
    %514 = vmatpush1.msra.mxu0 0.0
    %515 = vmatprep.subr.mxu0 0.0
    %516 = vmatpush1.msra.mxu0 0.0
    %517 = vmatprep.subr.mxu0 0.0
    %518 = vmatpush1.msra.mxu0 0.0
    %519 = vmatprep.subr.mxu0 0.0
    %520 = vmatpush1.msra.mxu0 0.0
    %521 = vmatprep.subr.mxu0 0.0
    %522 = vmatpush1.msra.mxu0 0.0
    %523 = vmatprep.subr.mxu0 0.0
    %524 = vmatpush1.msra.mxu0 0.0
    %525 = vmatprep.subr.mxu0 0.0
    %526 = vmatpush1.msra.mxu0 0.0
    %527 = vmatprep.subr.mxu0 0.0
    %528 = vmatpush1.msra.mxu0 0.0
    %529 = vmatprep.subr.mxu0 0.0
    %530 = vmatpush1.msra.mxu0 0.0
    %531 = vmatprep.subr.mxu0 0.0
    %532 = vmatpush1.msra.mxu0 %v319
    %533 = vmatprep.subr.mxu0 0.0
    %534 = vmatpush1.msra.mxu0 %v318
    %535 = vmatprep.subr.mxu0 0.0
    %536 = vmatpush1.msra.mxu0 %v317
    %537 = vmatprep.subr.mxu0 0.0
    %538 = vmatpush1.msra.mxu0 %v316
    %539 = vmatprep.subr.mxu0 0.0
    %540 = vmatpush2.msra.mxu0 0.0
    %541 = vmatprep.subr.mxu0 0.0
    %542 = vmatpush2.msra.mxu0 0.0
    %543 = vmatprep.subr.mxu0 0.0
    %544 = vmatpush2.msra.mxu0 0.0
    %545 = vmatprep.subr.mxu0 0.0
    %546 = vmatpush2.msra.mxu0 0.0
    %547 = vmatprep.subr.mxu0 0.0
    %548 = vmatpush2.msra.mxu0 0.0
    %549 = vmatprep.subr.mxu0 0.0
    %550 = vmatpush2.msra.mxu0 0.0
    %551 = vmatprep.subr.mxu0 0.0
    %552 = vmatpush2.msra.mxu0 0.0
    %553 = vmatprep.subr.mxu0 0.0
    %554 = vmatpush2.msra.mxu0 0.0
    %555 = vmatprep.subr.mxu0 0.0
    %556 = vmatpush2.msra.mxu0 0.0
    %557 = vmatprep.subr.mxu0 0.0
    %558 = vmatpush2.msra.mxu0 0.0
    %559 = vmatprep.subr.mxu0 0.0
    %560 = vmatpush2.msra.mxu0 0.0
    %561 = vmatprep.subr.mxu0 0.0
    %562 = vmatpush2.msra.mxu0 0.0
    %563 = vmatprep.subr.mxu0 0.0
    %564 = vmatpush2.msra.mxu0 0.0
    %565 = vmatprep.subr.mxu0 0.0
    %566 = vmatpush2.msra.mxu0 0.0
    %567 = vmatprep.subr.mxu0 0.0
    %568 = vmatpush2.msra.mxu0 0.0
    %569 = vmatprep.subr.mxu0 0.0
    %570 = vmatpush2.msra.mxu0 0.0
    %571 = vmatprep.mubr.f32.mxu0 0.0
    %572 = vmatmul.mubr.f32.gmra.mxu0 %v325
    %v573 = vpop.f32.mrf.mxu0
    %v574 = vadd.f32 0.0, %v573
    %v575 = vpop.f32.mrf.mxu0
    %576 = vdwg.mxu0
    %v577 = vadd.f32 %v504, %v574
    %v578 = vadd.f32 %v577, %v320
    %v579 = vxor.u32 %v578, 2147483648
    %v580 = vmul.f32 %v579, 1.442695
    %v581 = vpow.pop %v580
    %v582 = vadd.f32 %v581, 1.0
    %v583 = vrcp.pop %v582
    %v584 = vmul.f32 1.0, %v583
    %v586 = vlaneseq
    %v587 = vshrl.u32 %v586, 7
    %v588 = vsub.s32 0, %v587
    %v589 = vrot.slane %v321, %v588
    %590 = vrot.lane.b32.xlu0 %v589, 64
    %v591 = vpop.permute.xlu0 %590
    %v593 = vadd.f32 %v504, %v591
    %v595 = vlaneseq
    %v596 = vshrl.u32 %v595, 7
    %v597 = vsub.s32 0, %v596
    %v598 = vrot.slane %v322, %v597
    %599 = vrot.lane.b32.xlu0 %v598, 64
    %v600 = vpop.permute.xlu0 %599
    %v602 = vadd.f32 %v574, %v600
    %604 = vrot.lane.b32.xlu0 %v602, 64
    %v605 = vpop.permute.xlu0 %604
    %v607 = vmul.f32 %v584, %v605
    %609 = vrot.lane.b32.xlu0 %v607, 64
    %v610 = vpop.permute.xlu0 %609
    %v612 = vadd.f32 %v593, %v610
    %v613 = vtanh.pop %v612
    %v614 = vsub.f32 1.0, %v584
    %616 = vrot.lane.b32.xlu0 %v613, 96
    %v617 = vpop.permute.xlu0 %616
    %v619 = vmul.f32 %v614, %v617
    %v620 = vmul.f32 %v584, 0.0
    %v621 = vadd.f32 %v619, %v620
    %623 = vrot.lane.b32.xlu0 %v621, 96
    %v624 = vpop.permute.xlu0 %623
    %626 = vst.msk [vmem:[#allocation5] sm:$0x1] %vm79, %v624
    %v627 = vld [vmem:[#allocation4 + $0x1] sm:$0x1]
    %628 = vmatprep.subr.mxu0 0.0
    %629 = vmatpush1.msra.mxu0 0.0
    %630 = vmatprep.subr.mxu0 0.0
    %631 = vmatpush1.msra.mxu0 0.0
    %632 = vmatprep.subr.mxu0 0.0
    %633 = vmatpush1.msra.mxu0 0.0
    %634 = vmatprep.subr.mxu0 0.0
    %635 = vmatpush1.msra.mxu0 0.0
    %636 = vmatprep.subr.mxu0 0.0
    %637 = vmatpush1.msra.mxu0 0.0
    %638 = vmatprep.subr.mxu0 0.0
    %639 = vmatpush1.msra.mxu0 0.0
    %640 = vmatprep.subr.mxu0 0.0
    %641 = vmatpush1.msra.mxu0 0.0
    %642 = vmatprep.subr.mxu0 0.0
    %643 = vmatpush1.msra.mxu0 0.0
    %644 = vmatprep.subr.mxu0 0.0
    %645 = vmatpush1.msra.mxu0 0.0
    %646 = vmatprep.subr.mxu0 0.0
    %647 = vmatpush1.msra.mxu0 0.0
    %648 = vmatprep.subr.mxu0 0.0
    %649 = vmatpush1.msra.mxu0 0.0
    %650 = vmatprep.subr.mxu0 0.0
    %651 = vmatpush1.msra.mxu0 0.0
    %652 = vmatprep.subr.mxu0 0.0
    %653 = vmatpush1.msra.mxu0 %v310
    %654 = vmatprep.subr.mxu0 0.0
    %655 = vmatpush1.msra.mxu0 %v309
    %656 = vmatprep.subr.mxu0 0.0
    %657 = vmatpush1.msra.mxu0 %v308
    %658 = vmatprep.subr.mxu0 0.0
    %659 = vmatpush1.msra.mxu0 %v307
    %660 = vmatprep.subr.mxu0 0.0
    %661 = vmatpush2.msra.mxu0 0.0
    %662 = vmatprep.subr.mxu0 0.0
    %663 = vmatpush2.msra.mxu0 0.0
    %664 = vmatprep.subr.mxu0 0.0
    %665 = vmatpush2.msra.mxu0 0.0
    %666 = vmatprep.subr.mxu0 0.0
    %667 = vmatpush2.msra.mxu0 0.0
    %668 = vmatprep.subr.mxu0 0.0
    %669 = vmatpush2.msra.mxu0 0.0
    %670 = vmatprep.subr.mxu0 0.0
    %671 = vmatpush2.msra.mxu0 0.0
    %672 = vmatprep.subr.mxu0 0.0
    %673 = vmatpush2.msra.mxu0 0.0
    %674 = vmatprep.subr.mxu0 0.0
    %675 = vmatpush2.msra.mxu0 0.0
    %676 = vmatprep.subr.mxu0 0.0
    %677 = vmatpush2.msra.mxu0 0.0
    %678 = vmatprep.subr.mxu0 0.0
    %679 = vmatpush2.msra.mxu0 0.0
    %680 = vmatprep.subr.mxu0 0.0
    %681 = vmatpush2.msra.mxu0 0.0
    %682 = vmatprep.subr.mxu0 0.0
    %683 = vmatpush2.msra.mxu0 0.0
    %684 = vmatprep.subr.mxu0 0.0
    %685 = vmatpush2.msra.mxu0 0.0
    %686 = vmatprep.subr.mxu0 0.0
    %687 = vmatpush2.msra.mxu0 0.0
    %688 = vmatprep.subr.mxu0 0.0
    %689 = vmatpush2.msra.mxu0 0.0
    %690 = vmatprep.subr.mxu0 0.0
    %691 = vmatpush2.msra.mxu0 0.0
    %692 = vmatprep.mubr.f32.mxu0 0.0
    %693 = vmatmul.mubr.f32.gmra.mxu0 %v435
    %v694 = vpop.f32.mrf.mxu0
    %v695 = vadd.f32 0.0, %v694
    %v696 = vpop.f32.mrf.mxu0
    %697 = vdwg.mxu0
    %v698 = vadd.f32 %v627, %v695
    %v699 = vxor.u32 %v698, 2147483648
    %v700 = vmul.f32 %v699, 1.442695
    %v701 = vpow.pop %v700
    %v702 = vadd.f32 %v701, 1.0
    %v703 = vrcp.pop %v702
    %v704 = vmul.f32 1.0, %v703
    %v705 = vadd.f32 %v695, %v410
    %707 = vrot.lane.b32.xlu0 %v705, 64
    %v708 = vpop.permute.xlu0 %707
    %v710 = vmul.f32 %v704, %v708
    %712 = vrot.lane.b32.xlu0 %v710, 64
    %v713 = vpop.permute.xlu0 %712
    %v715 = vadd.f32 %v627, %v713
    %v716 = vtanh.pop %v715
    %v717 = vsub.f32 1.0, %v704
    %719 = vrot.lane.b32.xlu0 %v716, 96
    %v720 = vpop.permute.xlu0 %719
    %v722 = vmul.f32 %v717, %v720
    %v723 = vmul.f32 %v704, %v431
    %v724 = vadd.f32 %v722, %v723
    %726 = vrot.lane.b32.xlu0 %v724, 96
    %v727 = vpop.permute.xlu0 %726
    %v728 = vsel %vm150, %v727, 0
    %730 = vmatprep.subr.mxu0 0.0
    %731 = vmatpush1.msra.mxu0 0.0
    %732 = vmatprep.subr.mxu0 0.0
    %733 = vmatpush1.msra.mxu0 0.0
    %734 = vmatprep.subr.mxu0 0.0
    %735 = vmatpush1.msra.mxu0 0.0
    %736 = vmatprep.subr.mxu0 0.0
    %737 = vmatpush1.msra.mxu0 0.0
    %738 = vmatprep.subr.mxu0 0.0
    %739 = vmatpush1.msra.mxu0 0.0
    %740 = vmatprep.subr.mxu0 0.0
    %741 = vmatpush1.msra.mxu0 0.0
    %742 = vmatprep.subr.mxu0 0.0
    %743 = vmatpush1.msra.mxu0 0.0
    %744 = vmatprep.subr.mxu0 0.0
    %745 = vmatpush1.msra.mxu0 0.0
    %746 = vmatprep.subr.mxu0 0.0
    %747 = vmatpush1.msra.mxu0 0.0
    %748 = vmatprep.subr.mxu0 0.0
    %749 = vmatpush1.msra.mxu0 0.0
    %750 = vmatprep.subr.mxu0 0.0
    %751 = vmatpush1.msra.mxu0 0.0
    %752 = vmatprep.subr.mxu0 0.0
    %753 = vmatpush1.msra.mxu0 0.0
    %754 = vmatprep.subr.mxu0 0.0
    %755 = vmatpush1.msra.mxu0 %v315
    %756 = vmatprep.subr.mxu0 0.0
    %757 = vmatpush1.msra.mxu0 %v314
    %758 = vmatprep.subr.mxu0 0.0
    %759 = vmatpush1.msra.mxu0 %v313
    %760 = vmatprep.subr.mxu0 0.0
    %761 = vmatpush1.msra.mxu0 %v312
    %762 = vmatprep.subr.mxu0 0.0
    %763 = vmatpush2.msra.mxu0 0.0
    %764 = vmatprep.subr.mxu0 0.0
    %765 = vmatpush2.msra.mxu0 0.0
    %766 = vmatprep.subr.mxu0 0.0
    %767 = vmatpush2.msra.mxu0 0.0
    %768 = vmatprep.subr.mxu0 0.0
    %769 = vmatpush2.msra.mxu0 0.0
    %770 = vmatprep.subr.mxu0 0.0
    %771 = vmatpush2.msra.mxu0 0.0
    %772 = vmatprep.subr.mxu0 0.0
    %773 = vmatpush2.msra.mxu0 0.0
    %774 = vmatprep.subr.mxu0 0.0
    %775 = vmatpush2.msra.mxu0 0.0
    %776 = vmatprep.subr.mxu0 0.0
    %777 = vmatpush2.msra.mxu0 0.0
    %778 = vmatprep.subr.mxu0 0.0
    %779 = vmatpush2.msra.mxu0 0.0
    %780 = vmatprep.subr.mxu0 0.0
    %781 = vmatpush2.msra.mxu0 0.0
    %782 = vmatprep.subr.mxu0 0.0
    %783 = vmatpush2.msra.mxu0 0.0
    %784 = vmatprep.subr.mxu0 0.0
    %785 = vmatpush2.msra.mxu0 0.0
    %786 = vmatprep.subr.mxu0 0.0
    %787 = vmatpush2.msra.mxu0 0.0
    %788 = vmatprep.subr.mxu0 0.0
    %789 = vmatpush2.msra.mxu0 0.0
    %790 = vmatprep.subr.mxu0 0.0
    %791 = vmatpush2.msra.mxu0 0.0
    %792 = vmatprep.subr.mxu0 0.0
    %793 = vmatpush2.msra.mxu0 0.0
    %794 = vmatprep.mubr.f32.mxu0 0.0
    %795 = vmatmul.mubr.f32.gmra.mxu0 %v728
    %v796 = vpop.f32.mrf.mxu0
    %v797 = vadd.f32 0.0, %v796
    %v798 = vpop.f32.mrf.mxu0
    %799 = vdwg.mxu0
    %v800 = vsel %vm150, %v624, 0
    %802 = vmatprep.subr.mxu0 0.0
    %803 = vmatpush1.msra.mxu0 0.0
    %804 = vmatprep.subr.mxu0 0.0
    %805 = vmatpush1.msra.mxu0 0.0
    %806 = vmatprep.subr.mxu0 0.0
    %807 = vmatpush1.msra.mxu0 0.0
    %808 = vmatprep.subr.mxu0 0.0
    %809 = vmatpush1.msra.mxu0 0.0
    %810 = vmatprep.subr.mxu0 0.0
    %811 = vmatpush1.msra.mxu0 0.0
    %812 = vmatprep.subr.mxu0 0.0
    %813 = vmatpush1.msra.mxu0 0.0
    %814 = vmatprep.subr.mxu0 0.0
    %815 = vmatpush1.msra.mxu0 0.0
    %816 = vmatprep.subr.mxu0 0.0
    %817 = vmatpush1.msra.mxu0 0.0
    %818 = vmatprep.subr.mxu0 0.0
    %819 = vmatpush1.msra.mxu0 0.0
    %820 = vmatprep.subr.mxu0 0.0
    %821 = vmatpush1.msra.mxu0 0.0
    %822 = vmatprep.subr.mxu0 0.0
    %823 = vmatpush1.msra.mxu0 0.0
    %824 = vmatprep.subr.mxu0 0.0
    %825 = vmatpush1.msra.mxu0 0.0
    %826 = vmatprep.subr.mxu0 0.0
    %827 = vmatpush1.msra.mxu0 %v319
    %828 = vmatprep.subr.mxu0 0.0
    %829 = vmatpush1.msra.mxu0 %v318
    %830 = vmatprep.subr.mxu0 0.0
    %831 = vmatpush1.msra.mxu0 %v317
    %832 = vmatprep.subr.mxu0 0.0
    %833 = vmatpush1.msra.mxu0 %v316
    %834 = vmatprep.subr.mxu0 0.0
    %835 = vmatpush2.msra.mxu0 0.0
    %836 = vmatprep.subr.mxu0 0.0
    %837 = vmatpush2.msra.mxu0 0.0
    %838 = vmatprep.subr.mxu0 0.0
    %839 = vmatpush2.msra.mxu0 0.0
    %840 = vmatprep.subr.mxu0 0.0
    %841 = vmatpush2.msra.mxu0 0.0
    %842 = vmatprep.subr.mxu0 0.0
    %843 = vmatpush2.msra.mxu0 0.0
    %844 = vmatprep.subr.mxu0 0.0
    %845 = vmatpush2.msra.mxu0 0.0
    %846 = vmatprep.subr.mxu0 0.0
    %847 = vmatpush2.msra.mxu0 0.0
    %848 = vmatprep.subr.mxu0 0.0
    %849 = vmatpush2.msra.mxu0 0.0
    %850 = vmatprep.subr.mxu0 0.0
    %851 = vmatpush2.msra.mxu0 0.0
    %852 = vmatprep.subr.mxu0 0.0
    %853 = vmatpush2.msra.mxu0 0.0
    %854 = vmatprep.subr.mxu0 0.0
    %855 = vmatpush2.msra.mxu0 0.0
    %856 = vmatprep.subr.mxu0 0.0
    %857 = vmatpush2.msra.mxu0 0.0
    %858 = vmatprep.subr.mxu0 0.0
    %859 = vmatpush2.msra.mxu0 0.0
    %860 = vmatprep.subr.mxu0 0.0
    %861 = vmatpush2.msra.mxu0 0.0
    %862 = vmatprep.subr.mxu0 0.0
    %863 = vmatpush2.msra.mxu0 0.0
    %864 = vmatprep.subr.mxu0 0.0
    %865 = vmatpush2.msra.mxu0 0.0
    %866 = vmatprep.mubr.f32.mxu0 0.0
    %867 = vmatmul.mubr.f32.gmra.mxu0 %v800
    %v868 = vpop.f32.mrf.mxu0
    %v869 = vadd.f32 0.0, %v868
    %v870 = vpop.f32.mrf.mxu0
    %871 = vdwg.mxu0
    %v872 = vadd.f32 %v797, %v869
    %v873 = vadd.f32 %v872, %v320
    %v874 = vxor.u32 %v873, 2147483648
    %v875 = vmul.f32 %v874, 1.442695
    %v876 = vpow.pop %v875
    %v877 = vadd.f32 %v876, 1.0
    %v878 = vrcp.pop %v877
    %v879 = vmul.f32 1.0, %v878
    %v880 = vadd.f32 %v797, %v591
    %v881 = vadd.f32 %v869, %v600
    %883 = vrot.lane.b32.xlu0 %v881, 64
    %v884 = vpop.permute.xlu0 %883
    %v886 = vmul.f32 %v879, %v884
    %888 = vrot.lane.b32.xlu0 %v886, 64
    %v889 = vpop.permute.xlu0 %888
    %v891 = vadd.f32 %v880, %v889
    %v892 = vtanh.pop %v891
    %v893 = vsub.f32 1.0, %v879
    %895 = vrot.lane.b32.xlu0 %v892, 96
    %v896 = vpop.permute.xlu0 %895
    %v898 = vmul.f32 %v893, %v896
    %v899 = vmul.f32 %v879, %v621
    %v900 = vadd.f32 %v898, %v899
    %902 = vrot.lane.b32.xlu0 %v900, 96
    %v903 = vpop.permute.xlu0 %902
    %905 = vst.msk [vmem:[#allocation5 + $0x1] sm:$0x1] %vm79, %v903
    %v906 = vld [vmem:[#allocation4 + $0x2] sm:$0x1]
    %907 = vmatprep.subr.mxu0 0.0
    %908 = vmatpush1.msra.mxu0 0.0
    %909 = vmatprep.subr.mxu0 0.0
    %910 = vmatpush1.msra.mxu0 0.0
    %911 = vmatprep.subr.mxu0 0.0
    %912 = vmatpush1.msra.mxu0 0.0
    %913 = vmatprep.subr.mxu0 0.0
    %914 = vmatpush1.msra.mxu0 0.0
    %915 = vmatprep.subr.mxu0 0.0
    %916 = vmatpush1.msra.mxu0 0.0
    %917 = vmatprep.subr.mxu0 0.0
    %918 = vmatpush1.msra.mxu0 0.0
    %919 = vmatprep.subr.mxu0 0.0
    %920 = vmatpush1.msra.mxu0 0.0
    %921 = vmatprep.subr.mxu0 0.0
    %922 = vmatpush1.msra.mxu0 0.0
    %923 = vmatprep.subr.mxu0 0.0
    %924 = vmatpush1.msra.mxu0 0.0
    %925 = vmatprep.subr.mxu0 0.0
    %926 = vmatpush1.msra.mxu0 0.0
    %927 = vmatprep.subr.mxu0 0.0
    %928 = vmatpush1.msra.mxu0 0.0
    %929 = vmatprep.subr.mxu0 0.0
    %930 = vmatpush1.msra.mxu0 0.0
    %931 = vmatprep.subr.mxu0 0.0
    %932 = vmatpush1.msra.mxu0 %v310
    %933 = vmatprep.subr.mxu0 0.0
    %934 = vmatpush1.msra.mxu0 %v309
    %935 = vmatprep.subr.mxu0 0.0
    %936 = vmatpush1.msra.mxu0 %v308
    %937 = vmatprep.subr.mxu0 0.0
    %938 = vmatpush1.msra.mxu0 %v307
    %939 = vmatprep.subr.mxu0 0.0
    %940 = vmatpush2.msra.mxu0 0.0
    %941 = vmatprep.subr.mxu0 0.0
    %942 = vmatpush2.msra.mxu0 0.0
    %943 = vmatprep.subr.mxu0 0.0
    %944 = vmatpush2.msra.mxu0 0.0
    %945 = vmatprep.subr.mxu0 0.0
    %946 = vmatpush2.msra.mxu0 0.0
    %947 = vmatprep.subr.mxu0 0.0
    %948 = vmatpush2.msra.mxu0 0.0
    %949 = vmatprep.subr.mxu0 0.0
    %950 = vmatpush2.msra.mxu0 0.0
    %951 = vmatprep.subr.mxu0 0.0
    %952 = vmatpush2.msra.mxu0 0.0
    %953 = vmatprep.subr.mxu0 0.0
    %954 = vmatpush2.msra.mxu0 0.0
    %955 = vmatprep.subr.mxu0 0.0
    %956 = vmatpush2.msra.mxu0 0.0
    %957 = vmatprep.subr.mxu0 0.0
    %958 = vmatpush2.msra.mxu0 0.0
    %959 = vmatprep.subr.mxu0 0.0
    %960 = vmatpush2.msra.mxu0 0.0
    %961 = vmatprep.subr.mxu0 0.0
    %962 = vmatpush2.msra.mxu0 0.0
    %963 = vmatprep.subr.mxu0 0.0
    %964 = vmatpush2.msra.mxu0 0.0
    %965 = vmatprep.subr.mxu0 0.0
    %966 = vmatpush2.msra.mxu0 0.0
    %967 = vmatprep.subr.mxu0 0.0
    %968 = vmatpush2.msra.mxu0 0.0
    %969 = vmatprep.subr.mxu0 0.0
    %970 = vmatpush2.msra.mxu0 0.0
    %971 = vmatprep.mubr.f32.mxu0 0.0
    %972 = vmatmul.mubr.f32.gmra.mxu0 %v728
    %v973 = vpop.f32.mrf.mxu0
    %v974 = vadd.f32 0.0, %v973
    %v975 = vpop.f32.mrf.mxu0
    %976 = vdwg.mxu0
    %v977 = vadd.f32 %v906, %v974
    %v978 = vxor.u32 %v977, 2147483648
    %v979 = vmul.f32 %v978, 1.442695
    %v980 = vpow.pop %v979
    %v981 = vadd.f32 %v980, 1.0
    %v982 = vrcp.pop %v981
    %v983 = vmul.f32 1.0, %v982
    %v984 = vadd.f32 %v974, %v410
    %986 = vrot.lane.b32.xlu0 %v984, 64
    %v987 = vpop.permute.xlu0 %986
    %v989 = vmul.f32 %v983, %v987
    %991 = vrot.lane.b32.xlu0 %v989, 64
    %v992 = vpop.permute.xlu0 %991
    %v994 = vadd.f32 %v906, %v992
    %v995 = vtanh.pop %v994
    %v996 = vsub.f32 1.0, %v983
    %998 = vrot.lane.b32.xlu0 %v995, 96
    %v999 = vpop.permute.xlu0 %998
    %v1001 = vmul.f32 %v996, %v999
    %v1002 = vmul.f32 %v983, %v724
    %v1003 = vadd.f32 %v1001, %v1002
    %1005 = vrot.lane.b32.xlu0 %v1003, 96
    %v1006 = vpop.permute.xlu0 %1005
    %v1007 = vsel %vm150, %v1006, 0
    %1009 = vmatprep.subr.mxu0 0.0
    %1010 = vmatpush1.msra.mxu0 0.0
    %1011 = vmatprep.subr.mxu0 0.0
    %1012 = vmatpush1.msra.mxu0 0.0
    %1013 = vmatprep.subr.mxu0 0.0
    %1014 = vmatpush1.msra.mxu0 0.0
    %1015 = vmatprep.subr.mxu0 0.0
    %1016 = vmatpush1.msra.mxu0 0.0
    %1017 = vmatprep.subr.mxu0 0.0
    %1018 = vmatpush1.msra.mxu0 0.0
    %1019 = vmatprep.subr.mxu0 0.0
    %1020 = vmatpush1.msra.mxu0 0.0
    %1021 = vmatprep.subr.mxu0 0.0
    %1022 = vmatpush1.msra.mxu0 0.0
    %1023 = vmatprep.subr.mxu0 0.0
    %1024 = vmatpush1.msra.mxu0 0.0
    %1025 = vmatprep.subr.mxu0 0.0
    %1026 = vmatpush1.msra.mxu0 0.0
    %1027 = vmatprep.subr.mxu0 0.0
    %1028 = vmatpush1.msra.mxu0 0.0
    %1029 = vmatprep.subr.mxu0 0.0
    %1030 = vmatpush1.msra.mxu0 0.0
    %1031 = vmatprep.subr.mxu0 0.0
    %1032 = vmatpush1.msra.mxu0 0.0
    %1033 = vmatprep.subr.mxu0 0.0
    %1034 = vmatpush1.msra.mxu0 %v315
    %1035 = vmatprep.subr.mxu0 0.0
    %1036 = vmatpush1.msra.mxu0 %v314
    %1037 = vmatprep.subr.mxu0 0.0
    %1038 = vmatpush1.msra.mxu0 %v313
    %1039 = vmatprep.subr.mxu0 0.0
    %1040 = vmatpush1.msra.mxu0 %v312
    %1041 = vmatprep.subr.mxu0 0.0
    %1042 = vmatpush2.msra.mxu0 0.0
    %1043 = vmatprep.subr.mxu0 0.0
    %1044 = vmatpush2.msra.mxu0 0.0
    %1045 = vmatprep.subr.mxu0 0.0
    %1046 = vmatpush2.msra.mxu0 0.0
    %1047 = vmatprep.subr.mxu0 0.0
    %1048 = vmatpush2.msra.mxu0 0.0
    %1049 = vmatprep.subr.mxu0 0.0
    %1050 = vmatpush2.msra.mxu0 0.0
    %1051 = vmatprep.subr.mxu0 0.0
    %1052 = vmatpush2.msra.mxu0 0.0
    %1053 = vmatprep.subr.mxu0 0.0
    %1054 = vmatpush2.msra.mxu0 0.0
    %1055 = vmatprep.subr.mxu0 0.0
    %1056 = vmatpush2.msra.mxu0 0.0
    %1057 = vmatprep.subr.mxu0 0.0
    %1058 = vmatpush2.msra.mxu0 0.0
    %1059 = vmatprep.subr.mxu0 0.0
    %1060 = vmatpush2.msra.mxu0 0.0
    %1061 = vmatprep.subr.mxu0 0.0
    %1062 = vmatpush2.msra.mxu0 0.0
    %1063 = vmatprep.subr.mxu0 0.0
    %1064 = vmatpush2.msra.mxu0 0.0
    %1065 = vmatprep.subr.mxu0 0.0
    %1066 = vmatpush2.msra.mxu0 0.0
    %1067 = vmatprep.subr.mxu0 0.0
    %1068 = vmatpush2.msra.mxu0 0.0
    %1069 = vmatprep.subr.mxu0 0.0
    %1070 = vmatpush2.msra.mxu0 0.0
    %1071 = vmatprep.subr.mxu0 0.0
    %1072 = vmatpush2.msra.mxu0 0.0
    %1073 = vmatprep.mubr.f32.mxu0 0.0
    %1074 = vmatmul.mubr.f32.gmra.mxu0 %v1007
    %v1075 = vpop.f32.mrf.mxu0
    %v1076 = vadd.f32 0.0, %v1075
    %v1077 = vpop.f32.mrf.mxu0
    %1078 = vdwg.mxu0
    %v1079 = vsel %vm150, %v903, 0
    %1081 = vmatprep.subr.mxu0 0.0
    %1082 = vmatpush1.msra.mxu0 0.0
    %1083 = vmatprep.subr.mxu0 0.0
    %1084 = vmatpush1.msra.mxu0 0.0
    %1085 = vmatprep.subr.mxu0 0.0
    %1086 = vmatpush1.msra.mxu0 0.0
    %1087 = vmatprep.subr.mxu0 0.0
    %1088 = vmatpush1.msra.mxu0 0.0
    %1089 = vmatprep.subr.mxu0 0.0
    %1090 = vmatpush1.msra.mxu0 0.0
    %1091 = vmatprep.subr.mxu0 0.0
    %1092 = vmatpush1.msra.mxu0 0.0
    %1093 = vmatprep.subr.mxu0 0.0
    %1094 = vmatpush1.msra.mxu0 0.0
    %1095 = vmatprep.subr.mxu0 0.0
    %1096 = vmatpush1.msra.mxu0 0.0
    %1097 = vmatprep.subr.mxu0 0.0
    %1098 = vmatpush1.msra.mxu0 0.0
    %1099 = vmatprep.subr.mxu0 0.0
    %1100 = vmatpush1.msra.mxu0 0.0
    %1101 = vmatprep.subr.mxu0 0.0
    %1102 = vmatpush1.msra.mxu0 0.0
    %1103 = vmatprep.subr.mxu0 0.0
    %1104 = vmatpush1.msra.mxu0 0.0
    %1105 = vmatprep.subr.mxu0 0.0
    %1106 = vmatpush1.msra.mxu0 %v319
    %1107 = vmatprep.subr.mxu0 0.0
    %1108 = vmatpush1.msra.mxu0 %v318
    %1109 = vmatprep.subr.mxu0 0.0
    %1110 = vmatpush1.msra.mxu0 %v317
    %1111 = vmatprep.subr.mxu0 0.0
    %1112 = vmatpush1.msra.mxu0 %v316
    %1113 = vmatprep.subr.mxu0 0.0
    %1114 = vmatpush2.msra.mxu0 0.0
    %1115 = vmatprep.subr.mxu0 0.0
    %1116 = vmatpush2.msra.mxu0 0.0
    %1117 = vmatprep.subr.mxu0 0.0
    %1118 = vmatpush2.msra.mxu0 0.0
    %1119 = vmatprep.subr.mxu0 0.0
    %1120 = vmatpush2.msra.mxu0 0.0
    %1121 = vmatprep.subr.mxu0 0.0
    %1122 = vmatpush2.msra.mxu0 0.0
    %1123 = vmatprep.subr.mxu0 0.0
    %1124 = vmatpush2.msra.mxu0 0.0
    %1125 = vmatprep.subr.mxu0 0.0
    %1126 = vmatpush2.msra.mxu0 0.0
    %1127 = vmatprep.subr.mxu0 0.0
    %1128 = vmatpush2.msra.mxu0 0.0
    %1129 = vmatprep.subr.mxu0 0.0
    %1130 = vmatpush2.msra.mxu0 0.0
    %1131 = vmatprep.subr.mxu0 0.0
    %1132 = vmatpush2.msra.mxu0 0.0
    %1133 = vmatprep.subr.mxu0 0.0
    %1134 = vmatpush2.msra.mxu0 0.0
    %1135 = vmatprep.subr.mxu0 0.0
    %1136 = vmatpush2.msra.mxu0 0.0
    %1137 = vmatprep.subr.mxu0 0.0
    %1138 = vmatpush2.msra.mxu0 0.0
    %1139 = vmatprep.subr.mxu0 0.0
    %1140 = vmatpush2.msra.mxu0 0.0
    %1141 = vmatprep.subr.mxu0 0.0
    %1142 = vmatpush2.msra.mxu0 0.0
    %1143 = vmatprep.subr.mxu0 0.0
    %1144 = vmatpush2.msra.mxu0 0.0
    %1145 = vmatprep.mubr.f32.mxu0 0.0
    %1146 = vmatmul.mubr.f32.gmra.mxu0 %v1079
    %v1147 = vpop.f32.mrf.mxu0
    %v1148 = vadd.f32 0.0, %v1147
    %v1149 = vpop.f32.mrf.mxu0
    %1150 = vdwg.mxu0
    %v1151 = vadd.f32 %v1076, %v1148
    %v1152 = vadd.f32 %v1151, %v320
    %v1153 = vxor.u32 %v1152, 2147483648
    %v1154 = vmul.f32 %v1153, 1.442695
    %v1155 = vpow.pop %v1154
    %v1156 = vadd.f32 %v1155, 1.0
    %v1157 = vrcp.pop %v1156
    %v1158 = vmul.f32 1.0, %v1157
    %v1159 = vadd.f32 %v1076, %v591
    %v1160 = vadd.f32 %v1148, %v600
    %1162 = vrot.lane.b32.xlu0 %v1160, 64
    %v1163 = vpop.permute.xlu0 %1162
    %v1165 = vmul.f32 %v1158, %v1163
    %1167 = vrot.lane.b32.xlu0 %v1165, 64
    %v1168 = vpop.permute.xlu0 %1167
    %v1170 = vadd.f32 %v1159, %v1168
    %v1171 = vtanh.pop %v1170
    %v1172 = vsub.f32 1.0, %v1158
    %1174 = vrot.lane.b32.xlu0 %v1171, 96
    %v1175 = vpop.permute.xlu0 %1174
    %v1177 = vmul.f32 %v1172, %v1175
    %v1178 = vmul.f32 %v1158, %v900
    %v1179 = vadd.f32 %v1177, %v1178
    %1181 = vrot.lane.b32.xlu0 %v1179, 96
    %v1182 = vpop.permute.xlu0 %1181
    %1184 = vst.msk [vmem:[#allocation5 + $0x2] sm:$0x1] %vm79, %v1182
    %v1185 = vld [vmem:[#allocation4 + $0x3] sm:$0x1]
    %1186 = vmatprep.subr.mxu0 0.0
    %1187 = vmatpush1.msra.mxu0 0.0
    %1188 = vmatprep.subr.mxu0 0.0
    %1189 = vmatpush1.msra.mxu0 0.0
    %1190 = vmatprep.subr.mxu0 0.0
    %1191 = vmatpush1.msra.mxu0 0.0
    %1192 = vmatprep.subr.mxu0 0.0
    %1193 = vmatpush1.msra.mxu0 0.0
    %1194 = vmatprep.subr.mxu0 0.0
    %1195 = vmatpush1.msra.mxu0 0.0
    %1196 = vmatprep.subr.mxu0 0.0
    %1197 = vmatpush1.msra.mxu0 0.0
    %1198 = vmatprep.subr.mxu0 0.0
    %1199 = vmatpush1.msra.mxu0 0.0
    %1200 = vmatprep.subr.mxu0 0.0
    %1201 = vmatpush1.msra.mxu0 0.0
    %1202 = vmatprep.subr.mxu0 0.0
    %1203 = vmatpush1.msra.mxu0 0.0
    %1204 = vmatprep.subr.mxu0 0.0
    %1205 = vmatpush1.msra.mxu0 0.0
    %1206 = vmatprep.subr.mxu0 0.0
    %1207 = vmatpush1.msra.mxu0 0.0
    %1208 = vmatprep.subr.mxu0 0.0
    %1209 = vmatpush1.msra.mxu0 0.0
    %1210 = vmatprep.subr.mxu0 0.0
    %1211 = vmatpush1.msra.mxu0 %v310
    %1212 = vmatprep.subr.mxu0 0.0
    %1213 = vmatpush1.msra.mxu0 %v309
    %1214 = vmatprep.subr.mxu0 0.0
    %1215 = vmatpush1.msra.mxu0 %v308
    %1216 = vmatprep.subr.mxu0 0.0
    %1217 = vmatpush1.msra.mxu0 %v307
    %1218 = vmatprep.subr.mxu0 0.0
    %1219 = vmatpush2.msra.mxu0 0.0
    %1220 = vmatprep.subr.mxu0 0.0
    %1221 = vmatpush2.msra.mxu0 0.0
    %1222 = vmatprep.subr.mxu0 0.0
    %1223 = vmatpush2.msra.mxu0 0.0
    %1224 = vmatprep.subr.mxu0 0.0
    %1225 = vmatpush2.msra.mxu0 0.0
    %1226 = vmatprep.subr.mxu0 0.0
    %1227 = vmatpush2.msra.mxu0 0.0
    %1228 = vmatprep.subr.mxu0 0.0
    %1229 = vmatpush2.msra.mxu0 0.0
    %1230 = vmatprep.subr.mxu0 0.0
    %1231 = vmatpush2.msra.mxu0 0.0
    %1232 = vmatprep.subr.mxu0 0.0
    %1233 = vmatpush2.msra.mxu0 0.0
    %1234 = vmatprep.subr.mxu0 0.0
    %1235 = vmatpush2.msra.mxu0 0.0
    %1236 = vmatprep.subr.mxu0 0.0
    %1237 = vmatpush2.msra.mxu0 0.0
    %1238 = vmatprep.subr.mxu0 0.0
    %1239 = vmatpush2.msra.mxu0 0.0
    %1240 = vmatprep.subr.mxu0 0.0
    %1241 = vmatpush2.msra.mxu0 0.0
    %1242 = vmatprep.subr.mxu0 0.0
    %1243 = vmatpush2.msra.mxu0 0.0
    %1244 = vmatprep.subr.mxu0 0.0
    %1245 = vmatpush2.msra.mxu0 0.0
    %1246 = vmatprep.subr.mxu0 0.0
    %1247 = vmatpush2.msra.mxu0 0.0
    %1248 = vmatprep.subr.mxu0 0.0
    %1249 = vmatpush2.msra.mxu0 0.0
    %1250 = vmatprep.mubr.f32.mxu0 0.0
    %1251 = vmatmul.mubr.f32.gmra.mxu0 %v1007
    %v1252 = vpop.f32.mrf.mxu0
    %v1253 = vadd.f32 0.0, %v1252
    %v1254 = vpop.f32.mrf.mxu0
    %1255 = vdwg.mxu0
    %v1256 = vadd.f32 %v1185, %v1253
    %v1257 = vxor.u32 %v1256, 2147483648
    %v1258 = vmul.f32 %v1257, 1.442695
    %v1259 = vpow.pop %v1258
    %v1260 = vadd.f32 %v1259, 1.0
    %v1261 = vrcp.pop %v1260
    %v1262 = vmul.f32 1.0, %v1261
    %v1263 = vadd.f32 %v1253, %v410
    %1265 = vrot.lane.b32.xlu0 %v1263, 64
    %v1266 = vpop.permute.xlu0 %1265
    %v1268 = vmul.f32 %v1262, %v1266
    %1270 = vrot.lane.b32.xlu0 %v1268, 64
    %v1271 = vpop.permute.xlu0 %1270
    %v1273 = vadd.f32 %v1185, %v1271
    %v1274 = vtanh.pop %v1273
    %v1275 = vsub.f32 1.0, %v1262
    %1277 = vrot.lane.b32.xlu0 %v1274, 96
    %v1278 = vpop.permute.xlu0 %1277
    %v1280 = vmul.f32 %v1275, %v1278
    %v1281 = vmul.f32 %v1262, %v1003
    %v1282 = vadd.f32 %v1280, %v1281
    %1284 = vrot.lane.b32.xlu0 %v1282, 96
    %v1285 = vpop.permute.xlu0 %1284
    %v1286 = vsel %vm150, %v1285, 0
    %1288 = vmatprep.subr.mxu0 0.0
    %1289 = vmatpush1.msra.mxu0 0.0
    %1290 = vmatprep.subr.mxu0 0.0
    %1291 = vmatpush1.msra.mxu0 0.0
    %1292 = vmatprep.subr.mxu0 0.0
    %1293 = vmatpush1.msra.mxu0 0.0
    %1294 = vmatprep.subr.mxu0 0.0
    %1295 = vmatpush1.msra.mxu0 0.0
    %1296 = vmatprep.subr.mxu0 0.0
    %1297 = vmatpush1.msra.mxu0 0.0
    %1298 = vmatprep.subr.mxu0 0.0
    %1299 = vmatpush1.msra.mxu0 0.0
    %1300 = vmatprep.subr.mxu0 0.0
    %1301 = vmatpush1.msra.mxu0 0.0
    %1302 = vmatprep.subr.mxu0 0.0
    %1303 = vmatpush1.msra.mxu0 0.0
    %1304 = vmatprep.subr.mxu0 0.0
    %1305 = vmatpush1.msra.mxu0 0.0
    %1306 = vmatprep.subr.mxu0 0.0
    %1307 = vmatpush1.msra.mxu0 0.0
    %1308 = vmatprep.subr.mxu0 0.0
    %1309 = vmatpush1.msra.mxu0 0.0
    %1310 = vmatprep.subr.mxu0 0.0
    %1311 = vmatpush1.msra.mxu0 0.0
    %1312 = vmatprep.subr.mxu0 0.0
    %1313 = vmatpush1.msra.mxu0 %v315
    %1314 = vmatprep.subr.mxu0 0.0
    %1315 = vmatpush1.msra.mxu0 %v314
    %1316 = vmatprep.subr.mxu0 0.0
    %1317 = vmatpush1.msra.mxu0 %v313
    %1318 = vmatprep.subr.mxu0 0.0
    %1319 = vmatpush1.msra.mxu0 %v312
    %1320 = vmatprep.subr.mxu0 0.0
    %1321 = vmatpush2.msra.mxu0 0.0
    %1322 = vmatprep.subr.mxu0 0.0
    %1323 = vmatpush2.msra.mxu0 0.0
    %1324 = vmatprep.subr.mxu0 0.0
    %1325 = vmatpush2.msra.mxu0 0.0
    %1326 = vmatprep.subr.mxu0 0.0
    %1327 = vmatpush2.msra.mxu0 0.0
    %1328 = vmatprep.subr.mxu0 0.0
    %1329 = vmatpush2.msra.mxu0 0.0
    %1330 = vmatprep.subr.mxu0 0.0
    %1331 = vmatpush2.msra.mxu0 0.0
    %1332 = vmatprep.subr.mxu0 0.0
    %1333 = vmatpush2.msra.mxu0 0.0
    %1334 = vmatprep.subr.mxu0 0.0
    %1335 = vmatpush2.msra.mxu0 0.0
    %1336 = vmatprep.subr.mxu0 0.0
    %1337 = vmatpush2.msra.mxu0 0.0
    %1338 = vmatprep.subr.mxu0 0.0
    %1339 = vmatpush2.msra.mxu0 0.0
    %1340 = vmatprep.subr.mxu0 0.0
    %1341 = vmatpush2.msra.mxu0 0.0
    %1342 = vmatprep.subr.mxu0 0.0
    %1343 = vmatpush2.msra.mxu0 0.0
    %1344 = vmatprep.subr.mxu0 0.0
    %1345 = vmatpush2.msra.mxu0 0.0
    %1346 = vmatprep.subr.mxu0 0.0
    %1347 = vmatpush2.msra.mxu0 0.0
    %1348 = vmatprep.subr.mxu0 0.0
    %1349 = vmatpush2.msra.mxu0 0.0
    %1350 = vmatprep.subr.mxu0 0.0
    %1351 = vmatpush2.msra.mxu0 0.0
    %1352 = vmatprep.mubr.f32.mxu0 0.0
    %1353 = vmatmul.mubr.f32.gmra.mxu0 %v1286
    %v1354 = vpop.f32.mrf.mxu0
    %v1355 = vadd.f32 0.0, %v1354
    %v1356 = vpop.f32.mrf.mxu0
    %1357 = vdwg.mxu0
    %v1358 = vsel %vm150, %v1182, 0
    %1360 = vmatprep.subr.mxu0 0.0
    %1361 = vmatpush1.msra.mxu0 0.0
    %1362 = vmatprep.subr.mxu0 0.0
    %1363 = vmatpush1.msra.mxu0 0.0
    %1364 = vmatprep.subr.mxu0 0.0
    %1365 = vmatpush1.msra.mxu0 0.0
    %1366 = vmatprep.subr.mxu0 0.0
    %1367 = vmatpush1.msra.mxu0 0.0
    %1368 = vmatprep.subr.mxu0 0.0
    %1369 = vmatpush1.msra.mxu0 0.0
    %1370 = vmatprep.subr.mxu0 0.0
    %1371 = vmatpush1.msra.mxu0 0.0
    %1372 = vmatprep.subr.mxu0 0.0
    %1373 = vmatpush1.msra.mxu0 0.0
    %1374 = vmatprep.subr.mxu0 0.0
    %1375 = vmatpush1.msra.mxu0 0.0
    %1376 = vmatprep.subr.mxu0 0.0
    %1377 = vmatpush1.msra.mxu0 0.0
    %1378 = vmatprep.subr.mxu0 0.0
    %1379 = vmatpush1.msra.mxu0 0.0
    %1380 = vmatprep.subr.mxu0 0.0
    %1381 = vmatpush1.msra.mxu0 0.0
    %1382 = vmatprep.subr.mxu0 0.0
    %1383 = vmatpush1.msra.mxu0 0.0
    %1384 = vmatprep.subr.mxu0 0.0
    %1385 = vmatpush1.msra.mxu0 %v319
    %1386 = vmatprep.subr.mxu0 0.0
    %1387 = vmatpush1.msra.mxu0 %v318
    %1388 = vmatprep.subr.mxu0 0.0
    %1389 = vmatpush1.msra.mxu0 %v317
    %1390 = vmatprep.subr.mxu0 0.0
    %1391 = vmatpush1.msra.mxu0 %v316
    %1392 = vmatprep.subr.mxu0 0.0
    %1393 = vmatpush2.msra.mxu0 0.0
    %1394 = vmatprep.subr.mxu0 0.0
    %1395 = vmatpush2.msra.mxu0 0.0
    %1396 = vmatprep.subr.mxu0 0.0
    %1397 = vmatpush2.msra.mxu0 0.0
    %1398 = vmatprep.subr.mxu0 0.0
    %1399 = vmatpush2.msra.mxu0 0.0
    %1400 = vmatprep.subr.mxu0 0.0
    %1401 = vmatpush2.msra.mxu0 0.0
    %1402 = vmatprep.subr.mxu0 0.0
    %1403 = vmatpush2.msra.mxu0 0.0
    %1404 = vmatprep.subr.mxu0 0.0
    %1405 = vmatpush2.msra.mxu0 0.0
    %1406 = vmatprep.subr.mxu0 0.0
    %1407 = vmatpush2.msra.mxu0 0.0
    %1408 = vmatprep.subr.mxu0 0.0
    %1409 = vmatpush2.msra.mxu0 0.0
    %1410 = vmatprep.subr.mxu0 0.0
    %1411 = vmatpush2.msra.mxu0 0.0
    %1412 = vmatprep.subr.mxu0 0.0
    %1413 = vmatpush2.msra.mxu0 0.0
    %1414 = vmatprep.subr.mxu0 0.0
    %1415 = vmatpush2.msra.mxu0 0.0
    %1416 = vmatprep.subr.mxu0 0.0
    %1417 = vmatpush2.msra.mxu0 0.0
    %1418 = vmatprep.subr.mxu0 0.0
    %1419 = vmatpush2.msra.mxu0 0.0
    %1420 = vmatprep.subr.mxu0 0.0
    %1421 = vmatpush2.msra.mxu0 0.0
    %1422 = vmatprep.subr.mxu0 0.0
    %1423 = vmatpush2.msra.mxu0 0.0
    %1424 = vmatprep.mubr.f32.mxu0 0.0
    %1425 = vmatmul.mubr.f32.gmra.mxu0 %v1358
    %v1426 = vpop.f32.mrf.mxu0
    %v1427 = vadd.f32 0.0, %v1426
    %v1428 = vpop.f32.mrf.mxu0
    %1429 = vdwg.mxu0
    %v1430 = vadd.f32 %v1355, %v1427
    %v1431 = vadd.f32 %v1430, %v320
    %v1432 = vxor.u32 %v1431, 2147483648
    %v1433 = vmul.f32 %v1432, 1.442695
    %v1434 = vpow.pop %v1433
    %v1435 = vadd.f32 %v1434, 1.0
    %v1436 = vrcp.pop %v1435
    %v1437 = vmul.f32 1.0, %v1436
    %v1438 = vadd.f32 %v1355, %v591
    %v1439 = vadd.f32 %v1427, %v600
    %1441 = vrot.lane.b32.xlu0 %v1439, 64
    %v1442 = vpop.permute.xlu0 %1441
    %v1444 = vmul.f32 %v1437, %v1442
    %1446 = vrot.lane.b32.xlu0 %v1444, 64
    %v1447 = vpop.permute.xlu0 %1446
    %v1449 = vadd.f32 %v1438, %v1447
    %v1450 = vtanh.pop %v1449
    %v1451 = vsub.f32 1.0, %v1437
    %1453 = vrot.lane.b32.xlu0 %v1450, 96
    %v1454 = vpop.permute.xlu0 %1453
    %v1456 = vmul.f32 %v1451, %v1454
    %v1457 = vmul.f32 %v1437, %v1179
    %v1458 = vadd.f32 %v1456, %v1457
    %1460 = vrot.lane.b32.xlu0 %v1458, 96
    %v1461 = vpop.permute.xlu0 %1460
    %1463 = vst.msk [vmem:[#allocation5 + $0x3] sm:$0x1] %vm79, %v1461
    %v1464 = vld [vmem:[#allocation4 + $0x4] sm:$0x1]
    %1465 = vmatprep.subr.mxu0 0.0
    %1466 = vmatpush1.msra.mxu0 0.0
    %1467 = vmatprep.subr.mxu0 0.0
    %1468 = vmatpush1.msra.mxu0 0.0
    %1469 = vmatprep.subr.mxu0 0.0
    %1470 = vmatpush1.msra.mxu0 0.0
    %1471 = vmatprep.subr.mxu0 0.0
    %1472 = vmatpush1.msra.mxu0 0.0
    %1473 = vmatprep.subr.mxu0 0.0
    %1474 = vmatpush1.msra.mxu0 0.0
    %1475 = vmatprep.subr.mxu0 0.0
    %1476 = vmatpush1.msra.mxu0 0.0
    %1477 = vmatprep.subr.mxu0 0.0
    %1478 = vmatpush1.msra.mxu0 0.0
    %1479 = vmatprep.subr.mxu0 0.0
    %1480 = vmatpush1.msra.mxu0 0.0
    %1481 = vmatprep.subr.mxu0 0.0
    %1482 = vmatpush1.msra.mxu0 0.0
    %1483 = vmatprep.subr.mxu0 0.0
    %1484 = vmatpush1.msra.mxu0 0.0
    %1485 = vmatprep.subr.mxu0 0.0
    %1486 = vmatpush1.msra.mxu0 0.0
    %1487 = vmatprep.subr.mxu0 0.0
    %1488 = vmatpush1.msra.mxu0 0.0
    %1489 = vmatprep.subr.mxu0 0.0
    %1490 = vmatpush1.msra.mxu0 %v310
    %1491 = vmatprep.subr.mxu0 0.0
    %1492 = vmatpush1.msra.mxu0 %v309
    %1493 = vmatprep.subr.mxu0 0.0
    %1494 = vmatpush1.msra.mxu0 %v308
    %1495 = vmatprep.subr.mxu0 0.0
    %1496 = vmatpush1.msra.mxu0 %v307
    %1497 = vmatprep.subr.mxu0 0.0
    %1498 = vmatpush2.msra.mxu0 0.0
    %1499 = vmatprep.subr.mxu0 0.0
    %1500 = vmatpush2.msra.mxu0 0.0
    %1501 = vmatprep.subr.mxu0 0.0
    %1502 = vmatpush2.msra.mxu0 0.0
    %1503 = vmatprep.subr.mxu0 0.0
    %1504 = vmatpush2.msra.mxu0 0.0
    %1505 = vmatprep.subr.mxu0 0.0
    %1506 = vmatpush2.msra.mxu0 0.0
    %1507 = vmatprep.subr.mxu0 0.0
    %1508 = vmatpush2.msra.mxu0 0.0
    %1509 = vmatprep.subr.mxu0 0.0
    %1510 = vmatpush2.msra.mxu0 0.0
    %1511 = vmatprep.subr.mxu0 0.0
    %1512 = vmatpush2.msra.mxu0 0.0
    %1513 = vmatprep.subr.mxu0 0.0
    %1514 = vmatpush2.msra.mxu0 0.0
    %1515 = vmatprep.subr.mxu0 0.0
    %1516 = vmatpush2.msra.mxu0 0.0
    %1517 = vmatprep.subr.mxu0 0.0
    %1518 = vmatpush2.msra.mxu0 0.0
    %1519 = vmatprep.subr.mxu0 0.0
    %1520 = vmatpush2.msra.mxu0 0.0
    %1521 = vmatprep.subr.mxu0 0.0
    %1522 = vmatpush2.msra.mxu0 0.0
    %1523 = vmatprep.subr.mxu0 0.0
    %1524 = vmatpush2.msra.mxu0 0.0
    %1525 = vmatprep.subr.mxu0 0.0
    %1526 = vmatpush2.msra.mxu0 0.0
    %1527 = vmatprep.subr.mxu0 0.0
    %1528 = vmatpush2.msra.mxu0 0.0
    %1529 = vmatprep.mubr.f32.mxu0 0.0
    %1530 = vmatmul.mubr.f32.gmra.mxu0 %v1286
    %v1531 = vpop.f32.mrf.mxu0
    %v1532 = vadd.f32 0.0, %v1531
    %v1533 = vpop.f32.mrf.mxu0
    %1534 = vdwg.mxu0
    %v1535 = vadd.f32 %v1464, %v1532
    %v1536 = vxor.u32 %v1535, 2147483648
    %v1537 = vmul.f32 %v1536, 1.442695
    %v1538 = vpow.pop %v1537
    %v1539 = vadd.f32 %v1538, 1.0
    %v1540 = vrcp.pop %v1539
    %v1541 = vmul.f32 1.0, %v1540
    %v1542 = vadd.f32 %v1532, %v410
    %1544 = vrot.lane.b32.xlu0 %v1542, 64
    %v1545 = vpop.permute.xlu0 %1544
    %v1547 = vmul.f32 %v1541, %v1545
    %1549 = vrot.lane.b32.xlu0 %v1547, 64
    %v1550 = vpop.permute.xlu0 %1549
    %v1552 = vadd.f32 %v1464, %v1550
    %v1553 = vtanh.pop %v1552
    %v1554 = vsub.f32 1.0, %v1541
    %1556 = vrot.lane.b32.xlu0 %v1553, 96
    %v1557 = vpop.permute.xlu0 %1556
    %v1559 = vmul.f32 %v1554, %v1557
    %v1560 = vmul.f32 %v1541, %v1282
    %v1561 = vadd.f32 %v1559, %v1560
    %1563 = vrot.lane.b32.xlu0 %v1561, 96
    %v1564 = vpop.permute.xlu0 %1563
    %v1565 = vsel %vm150, %v1564, 0
    %1567 = vmatprep.subr.mxu0 0.0
    %1568 = vmatpush1.msra.mxu0 0.0
    %1569 = vmatprep.subr.mxu0 0.0
    %1570 = vmatpush1.msra.mxu0 0.0
    %1571 = vmatprep.subr.mxu0 0.0
    %1572 = vmatpush1.msra.mxu0 0.0
    %1573 = vmatprep.subr.mxu0 0.0
    %1574 = vmatpush1.msra.mxu0 0.0
    %1575 = vmatprep.subr.mxu0 0.0
    %1576 = vmatpush1.msra.mxu0 0.0
    %1577 = vmatprep.subr.mxu0 0.0
    %1578 = vmatpush1.msra.mxu0 0.0
    %1579 = vmatprep.subr.mxu0 0.0
    %1580 = vmatpush1.msra.mxu0 0.0
    %1581 = vmatprep.subr.mxu0 0.0
    %1582 = vmatpush1.msra.mxu0 0.0
    %1583 = vmatprep.subr.mxu0 0.0
    %1584 = vmatpush1.msra.mxu0 0.0
    %1585 = vmatprep.subr.mxu0 0.0
    %1586 = vmatpush1.msra.mxu0 0.0
    %1587 = vmatprep.subr.mxu0 0.0
    %1588 = vmatpush1.msra.mxu0 0.0
    %1589 = vmatprep.subr.mxu0 0.0
    %1590 = vmatpush1.msra.mxu0 0.0
    %1591 = vmatprep.subr.mxu0 0.0
    %1592 = vmatpush1.msra.mxu0 %v315
    %1593 = vmatprep.subr.mxu0 0.0
    %1594 = vmatpush1.msra.mxu0 %v314
    %1595 = vmatprep.subr.mxu0 0.0
    %1596 = vmatpush1.msra.mxu0 %v313
    %1597 = vmatprep.subr.mxu0 0.0
    %1598 = vmatpush1.msra.mxu0 %v312
    %1599 = vmatprep.subr.mxu0 0.0
    %1600 = vmatpush2.msra.mxu0 0.0
    %1601 = vmatprep.subr.mxu0 0.0
    %1602 = vmatpush2.msra.mxu0 0.0
    %1603 = vmatprep.subr.mxu0 0.0
    %1604 = vmatpush2.msra.mxu0 0.0
    %1605 = vmatprep.subr.mxu0 0.0
    %1606 = vmatpush2.msra.mxu0 0.0
    %1607 = vmatprep.subr.mxu0 0.0
    %1608 = vmatpush2.msra.mxu0 0.0
    %1609 = vmatprep.subr.mxu0 0.0
    %1610 = vmatpush2.msra.mxu0 0.0
    %1611 = vmatprep.subr.mxu0 0.0
    %1612 = vmatpush2.msra.mxu0 0.0
    %1613 = vmatprep.subr.mxu0 0.0
    %1614 = vmatpush2.msra.mxu0 0.0
    %1615 = vmatprep.subr.mxu0 0.0
    %1616 = vmatpush2.msra.mxu0 0.0
    %1617 = vmatprep.subr.mxu0 0.0
    %1618 = vmatpush2.msra.mxu0 0.0
    %1619 = vmatprep.subr.mxu0 0.0
    %1620 = vmatpush2.msra.mxu0 0.0
    %1621 = vmatprep.subr.mxu0 0.0
    %1622 = vmatpush2.msra.mxu0 0.0
    %1623 = vmatprep.subr.mxu0 0.0
    %1624 = vmatpush2.msra.mxu0 0.0
    %1625 = vmatprep.subr.mxu0 0.0
    %1626 = vmatpush2.msra.mxu0 0.0
    %1627 = vmatprep.subr.mxu0 0.0
    %1628 = vmatpush2.msra.mxu0 0.0
    %1629 = vmatprep.subr.mxu0 0.0
    %1630 = vmatpush2.msra.mxu0 0.0
    %1631 = vmatprep.mubr.f32.mxu0 0.0
    %1632 = vmatmul.mubr.f32.gmra.mxu0 %v1565
    %v1633 = vpop.f32.mrf.mxu0
    %v1634 = vadd.f32 0.0, %v1633
    %v1635 = vpop.f32.mrf.mxu0
    %1636 = vdwg.mxu0
    %v1637 = vsel %vm150, %v1461, 0
    %1639 = vmatprep.subr.mxu0 0.0
    %1640 = vmatpush1.msra.mxu0 0.0
    %1641 = vmatprep.subr.mxu0 0.0
    %1642 = vmatpush1.msra.mxu0 0.0
    %1643 = vmatprep.subr.mxu0 0.0
    %1644 = vmatpush1.msra.mxu0 0.0
    %1645 = vmatprep.subr.mxu0 0.0
    %1646 = vmatpush1.msra.mxu0 0.0
    %1647 = vmatprep.subr.mxu0 0.0
    %1648 = vmatpush1.msra.mxu0 0.0
    %1649 = vmatprep.subr.mxu0 0.0
    %1650 = vmatpush1.msra.mxu0 0.0
    %1651 = vmatprep.subr.mxu0 0.0
    %1652 = vmatpush1.msra.mxu0 0.0
    %1653 = vmatprep.subr.mxu0 0.0
    %1654 = vmatpush1.msra.mxu0 0.0
    %1655 = vmatprep.subr.mxu0 0.0
    %1656 = vmatpush1.msra.mxu0 0.0
    %1657 = vmatprep.subr.mxu0 0.0
    %1658 = vmatpush1.msra.mxu0 0.0
    %1659 = vmatprep.subr.mxu0 0.0
    %1660 = vmatpush1.msra.mxu0 0.0
    %1661 = vmatprep.subr.mxu0 0.0
    %1662 = vmatpush1.msra.mxu0 0.0
    %1663 = vmatprep.subr.mxu0 0.0
    %1664 = vmatpush1.msra.mxu0 %v319
    %1665 = vmatprep.subr.mxu0 0.0
    %1666 = vmatpush1.msra.mxu0 %v318
    %1667 = vmatprep.subr.mxu0 0.0
    %1668 = vmatpush1.msra.mxu0 %v317
    %1669 = vmatprep.subr.mxu0 0.0
    %1670 = vmatpush1.msra.mxu0 %v316
    %1671 = vmatprep.subr.mxu0 0.0
    %1672 = vmatpush2.msra.mxu0 0.0
    %1673 = vmatprep.subr.mxu0 0.0
    %1674 = vmatpush2.msra.mxu0 0.0
    %1675 = vmatprep.subr.mxu0 0.0
    %1676 = vmatpush2.msra.mxu0 0.0
    %1677 = vmatprep.subr.mxu0 0.0
    %1678 = vmatpush2.msra.mxu0 0.0
    %1679 = vmatprep.subr.mxu0 0.0
    %1680 = vmatpush2.msra.mxu0 0.0
    %1681 = vmatprep.subr.mxu0 0.0
    %1682 = vmatpush2.msra.mxu0 0.0
    %1683 = vmatprep.subr.mxu0 0.0
    %1684 = vmatpush2.msra.mxu0 0.0
    %1685 = vmatprep.subr.mxu0 0.0
    %1686 = vmatpush2.msra.mxu0 0.0
    %1687 = vmatprep.subr.mxu0 0.0
    %1688 = vmatpush2.msra.mxu0 0.0
    %1689 = vmatprep.subr.mxu0 0.0
    %1690 = vmatpush2.msra.mxu0 0.0
    %1691 = vmatprep.subr.mxu0 0.0
    %1692 = vmatpush2.msra.mxu0 0.0
    %1693 = vmatprep.subr.mxu0 0.0
    %1694 = vmatpush2.msra.mxu0 0.0
    %1695 = vmatprep.subr.mxu0 0.0
    %1696 = vmatpush2.msra.mxu0 0.0
    %1697 = vmatprep.subr.mxu0 0.0
    %1698 = vmatpush2.msra.mxu0 0.0
    %1699 = vmatprep.subr.mxu0 0.0
    %1700 = vmatpush2.msra.mxu0 0.0
    %1701 = vmatprep.subr.mxu0 0.0
    %1702 = vmatpush2.msra.mxu0 0.0
    %1703 = vmatprep.mubr.f32.mxu0 0.0
    %1704 = vmatmul.mubr.f32.gmra.mxu0 %v1637
    %v1705 = vpop.f32.mrf.mxu0
    %v1706 = vadd.f32 0.0, %v1705
    %v1707 = vpop.f32.mrf.mxu0
    %1708 = vdwg.mxu0
    %v1709 = vadd.f32 %v1634, %v1706
    %v1710 = vadd.f32 %v1709, %v320
    %v1711 = vxor.u32 %v1710, 2147483648
    %v1712 = vmul.f32 %v1711, 1.442695
    %v1713 = vpow.pop %v1712
    %v1714 = vadd.f32 %v1713, 1.0
    %v1715 = vrcp.pop %v1714
    %v1716 = vmul.f32 1.0, %v1715
    %v1717 = vadd.f32 %v1634, %v591
    %v1718 = vadd.f32 %v1706, %v600
    %1720 = vrot.lane.b32.xlu0 %v1718, 64
    %v1721 = vpop.permute.xlu0 %1720
    %v1723 = vmul.f32 %v1716, %v1721
    %1725 = vrot.lane.b32.xlu0 %v1723, 64
    %v1726 = vpop.permute.xlu0 %1725
    %v1728 = vadd.f32 %v1717, %v1726
    %v1729 = vtanh.pop %v1728
    %v1730 = vsub.f32 1.0, %v1716
    %1732 = vrot.lane.b32.xlu0 %v1729, 96
    %v1733 = vpop.permute.xlu0 %1732
    %v1735 = vmul.f32 %v1730, %v1733
    %v1736 = vmul.f32 %v1716, %v1458
    %v1737 = vadd.f32 %v1735, %v1736
    %1739 = vrot.lane.b32.xlu0 %v1737, 96
    %v1740 = vpop.permute.xlu0 %1739
    %1742 = vst.msk [vmem:[#allocation5 + $0x4] sm:$0x1] %vm79, %v1740
    %v1743 = vld [vmem:[#allocation4 + $0x5] sm:$0x1]
    %1744 = vmatprep.subr.mxu0 0.0
    %1745 = vmatpush1.msra.mxu0 0.0
    %1746 = vmatprep.subr.mxu0 0.0
    %1747 = vmatpush1.msra.mxu0 0.0
    %1748 = vmatprep.subr.mxu0 0.0
    %1749 = vmatpush1.msra.mxu0 0.0
    %1750 = vmatprep.subr.mxu0 0.0
    %1751 = vmatpush1.msra.mxu0 0.0
    %1752 = vmatprep.subr.mxu0 0.0
    %1753 = vmatpush1.msra.mxu0 0.0
    %1754 = vmatprep.subr.mxu0 0.0
    %1755 = vmatpush1.msra.mxu0 0.0
    %1756 = vmatprep.subr.mxu0 0.0
    %1757 = vmatpush1.msra.mxu0 0.0
    %1758 = vmatprep.subr.mxu0 0.0
    %1759 = vmatpush1.msra.mxu0 0.0
    %1760 = vmatprep.subr.mxu0 0.0
    %1761 = vmatpush1.msra.mxu0 0.0
    %1762 = vmatprep.subr.mxu0 0.0
    %1763 = vmatpush1.msra.mxu0 0.0
    %1764 = vmatprep.subr.mxu0 0.0
    %1765 = vmatpush1.msra.mxu0 0.0
    %1766 = vmatprep.subr.mxu0 0.0
    %1767 = vmatpush1.msra.mxu0 0.0
    %1768 = vmatprep.subr.mxu0 0.0
    %1769 = vmatpush1.msra.mxu0 %v310
    %1770 = vmatprep.subr.mxu0 0.0
    %1771 = vmatpush1.msra.mxu0 %v309
    %1772 = vmatprep.subr.mxu0 0.0
    %1773 = vmatpush1.msra.mxu0 %v308
    %1774 = vmatprep.subr.mxu0 0.0
    %1775 = vmatpush1.msra.mxu0 %v307
    %1776 = vmatprep.subr.mxu0 0.0
    %1777 = vmatpush2.msra.mxu0 0.0
    %1778 = vmatprep.subr.mxu0 0.0
    %1779 = vmatpush2.msra.mxu0 0.0
    %1780 = vmatprep.subr.mxu0 0.0
    %1781 = vmatpush2.msra.mxu0 0.0
    %1782 = vmatprep.subr.mxu0 0.0
    %1783 = vmatpush2.msra.mxu0 0.0
    %1784 = vmatprep.subr.mxu0 0.0
    %1785 = vmatpush2.msra.mxu0 0.0
    %1786 = vmatprep.subr.mxu0 0.0
    %1787 = vmatpush2.msra.mxu0 0.0
    %1788 = vmatprep.subr.mxu0 0.0
    %1789 = vmatpush2.msra.mxu0 0.0
    %1790 = vmatprep.subr.mxu0 0.0
    %1791 = vmatpush2.msra.mxu0 0.0
    %1792 = vmatprep.subr.mxu0 0.0
    %1793 = vmatpush2.msra.mxu0 0.0
    %1794 = vmatprep.subr.mxu0 0.0
    %1795 = vmatpush2.msra.mxu0 0.0
    %1796 = vmatprep.subr.mxu0 0.0
    %1797 = vmatpush2.msra.mxu0 0.0
    %1798 = vmatprep.subr.mxu0 0.0
    %1799 = vmatpush2.msra.mxu0 0.0
    %1800 = vmatprep.subr.mxu0 0.0
    %1801 = vmatpush2.msra.mxu0 0.0
    %1802 = vmatprep.subr.mxu0 0.0
    %1803 = vmatpush2.msra.mxu0 0.0
    %1804 = vmatprep.subr.mxu0 0.0
    %1805 = vmatpush2.msra.mxu0 0.0
    %1806 = vmatprep.subr.mxu0 0.0
    %1807 = vmatpush2.msra.mxu0 0.0
    %1808 = vmatprep.mubr.f32.mxu0 0.0
    %1809 = vmatmul.mubr.f32.gmra.mxu0 %v1565
    %v1810 = vpop.f32.mrf.mxu0
    %v1811 = vadd.f32 0.0, %v1810
    %v1812 = vpop.f32.mrf.mxu0
    %1813 = vdwg.mxu0
    %v1814 = vadd.f32 %v1743, %v1811
    %v1815 = vxor.u32 %v1814, 2147483648
    %v1816 = vmul.f32 %v1815, 1.442695
    %v1817 = vpow.pop %v1816
    %v1818 = vadd.f32 %v1817, 1.0
    %v1819 = vrcp.pop %v1818
    %v1820 = vmul.f32 1.0, %v1819
    %v1821 = vadd.f32 %v1811, %v410
    %1823 = vrot.lane.b32.xlu0 %v1821, 64
    %v1824 = vpop.permute.xlu0 %1823
    %v1826 = vmul.f32 %v1820, %v1824
    %1828 = vrot.lane.b32.xlu0 %v1826, 64
    %v1829 = vpop.permute.xlu0 %1828
    %v1831 = vadd.f32 %v1743, %v1829
    %v1832 = vtanh.pop %v1831
    %v1833 = vsub.f32 1.0, %v1820
    %1835 = vrot.lane.b32.xlu0 %v1832, 96
    %v1836 = vpop.permute.xlu0 %1835
    %v1838 = vmul.f32 %v1833, %v1836
    %v1839 = vmul.f32 %v1820, %v1561
    %v1840 = vadd.f32 %v1838, %v1839
    %1842 = vrot.lane.b32.xlu0 %v1840, 96
    %v1843 = vpop.permute.xlu0 %1842
    %v1844 = vsel %vm150, %v1843, 0
    %1846 = vmatprep.subr.mxu0 0.0
    %1847 = vmatpush1.msra.mxu0 0.0
    %1848 = vmatprep.subr.mxu0 0.0
    %1849 = vmatpush1.msra.mxu0 0.0
    %1850 = vmatprep.subr.mxu0 0.0
    %1851 = vmatpush1.msra.mxu0 0.0
    %1852 = vmatprep.subr.mxu0 0.0
    %1853 = vmatpush1.msra.mxu0 0.0
    %1854 = vmatprep.subr.mxu0 0.0
    %1855 = vmatpush1.msra.mxu0 0.0
    %1856 = vmatprep.subr.mxu0 0.0
    %1857 = vmatpush1.msra.mxu0 0.0
    %1858 = vmatprep.subr.mxu0 0.0
    %1859 = vmatpush1.msra.mxu0 0.0
    %1860 = vmatprep.subr.mxu0 0.0
    %1861 = vmatpush1.msra.mxu0 0.0
    %1862 = vmatprep.subr.mxu0 0.0
    %1863 = vmatpush1.msra.mxu0 0.0
    %1864 = vmatprep.subr.mxu0 0.0
    %1865 = vmatpush1.msra.mxu0 0.0
    %1866 = vmatprep.subr.mxu0 0.0
    %1867 = vmatpush1.msra.mxu0 0.0
    %1868 = vmatprep.subr.mxu0 0.0
    %1869 = vmatpush1.msra.mxu0 0.0
    %1870 = vmatprep.subr.mxu0 0.0
    %1871 = vmatpush1.msra.mxu0 %v315
    %1872 = vmatprep.subr.mxu0 0.0
    %1873 = vmatpush1.msra.mxu0 %v314
    %1874 = vmatprep.subr.mxu0 0.0
    %1875 = vmatpush1.msra.mxu0 %v313
    %1876 = vmatprep.subr.mxu0 0.0
    %1877 = vmatpush1.msra.mxu0 %v312
    %1878 = vmatprep.subr.mxu0 0.0
    %1879 = vmatpush2.msra.mxu0 0.0
    %1880 = vmatprep.subr.mxu0 0.0
    %1881 = vmatpush2.msra.mxu0 0.0
    %1882 = vmatprep.subr.mxu0 0.0
    %1883 = vmatpush2.msra.mxu0 0.0
    %1884 = vmatprep.subr.mxu0 0.0
    %1885 = vmatpush2.msra.mxu0 0.0
    %1886 = vmatprep.subr.mxu0 0.0
    %1887 = vmatpush2.msra.mxu0 0.0
    %1888 = vmatprep.subr.mxu0 0.0
    %1889 = vmatpush2.msra.mxu0 0.0
    %1890 = vmatprep.subr.mxu0 0.0
    %1891 = vmatpush2.msra.mxu0 0.0
    %1892 = vmatprep.subr.mxu0 0.0
    %1893 = vmatpush2.msra.mxu0 0.0
    %1894 = vmatprep.subr.mxu0 0.0
    %1895 = vmatpush2.msra.mxu0 0.0
    %1896 = vmatprep.subr.mxu0 0.0
    %1897 = vmatpush2.msra.mxu0 0.0
    %1898 = vmatprep.subr.mxu0 0.0
    %1899 = vmatpush2.msra.mxu0 0.0
    %1900 = vmatprep.subr.mxu0 0.0
    %1901 = vmatpush2.msra.mxu0 0.0
    %1902 = vmatprep.subr.mxu0 0.0
    %1903 = vmatpush2.msra.mxu0 0.0
    %1904 = vmatprep.subr.mxu0 0.0
    %1905 = vmatpush2.msra.mxu0 0.0
    %1906 = vmatprep.subr.mxu0 0.0
    %1907 = vmatpush2.msra.mxu0 0.0
    %1908 = vmatprep.subr.mxu0 0.0
    %1909 = vmatpush2.msra.mxu0 0.0
    %1910 = vmatprep.mubr.f32.mxu0 0.0
    %1911 = vmatmul.mubr.f32.gmra.mxu0 %v1844
    %v1912 = vpop.f32.mrf.mxu0
    %v1913 = vadd.f32 0.0, %v1912
    %v1914 = vpop.f32.mrf.mxu0
    %1915 = vdwg.mxu0
    %v1916 = vsel %vm150, %v1740, 0
    %1918 = vmatprep.subr.mxu0 0.0
    %1919 = vmatpush1.msra.mxu0 0.0
    %1920 = vmatprep.subr.mxu0 0.0
    %1921 = vmatpush1.msra.mxu0 0.0
    %1922 = vmatprep.subr.mxu0 0.0
    %1923 = vmatpush1.msra.mxu0 0.0
    %1924 = vmatprep.subr.mxu0 0.0
    %1925 = vmatpush1.msra.mxu0 0.0
    %1926 = vmatprep.subr.mxu0 0.0
    %1927 = vmatpush1.msra.mxu0 0.0
    %1928 = vmatprep.subr.mxu0 0.0
    %1929 = vmatpush1.msra.mxu0 0.0
    %1930 = vmatprep.subr.mxu0 0.0
    %1931 = vmatpush1.msra.mxu0 0.0
    %1932 = vmatprep.subr.mxu0 0.0
    %1933 = vmatpush1.msra.mxu0 0.0
    %1934 = vmatprep.subr.mxu0 0.0
    %1935 = vmatpush1.msra.mxu0 0.0
    %1936 = vmatprep.subr.mxu0 0.0
    %1937 = vmatpush1.msra.mxu0 0.0
    %1938 = vmatprep.subr.mxu0 0.0
    %1939 = vmatpush1.msra.mxu0 0.0
    %1940 = vmatprep.subr.mxu0 0.0
    %1941 = vmatpush1.msra.mxu0 0.0
    %1942 = vmatprep.subr.mxu0 0.0
    %1943 = vmatpush1.msra.mxu0 %v319
    %1944 = vmatprep.subr.mxu0 0.0
    %1945 = vmatpush1.msra.mxu0 %v318
    %1946 = vmatprep.subr.mxu0 0.0
    %1947 = vmatpush1.msra.mxu0 %v317
    %1948 = vmatprep.subr.mxu0 0.0
    %1949 = vmatpush1.msra.mxu0 %v316
    %1950 = vmatprep.subr.mxu0 0.0
    %1951 = vmatpush2.msra.mxu0 0.0
    %1952 = vmatprep.subr.mxu0 0.0
    %1953 = vmatpush2.msra.mxu0 0.0
    %1954 = vmatprep.subr.mxu0 0.0
    %1955 = vmatpush2.msra.mxu0 0.0
    %1956 = vmatprep.subr.mxu0 0.0
    %1957 = vmatpush2.msra.mxu0 0.0
    %1958 = vmatprep.subr.mxu0 0.0
    %1959 = vmatpush2.msra.mxu0 0.0
    %1960 = vmatprep.subr.mxu0 0.0
    %1961 = vmatpush2.msra.mxu0 0.0
    %1962 = vmatprep.subr.mxu0 0.0
    %1963 = vmatpush2.msra.mxu0 0.0
    %1964 = vmatprep.subr.mxu0 0.0
    %1965 = vmatpush2.msra.mxu0 0.0
    %1966 = vmatprep.subr.mxu0 0.0
    %1967 = vmatpush2.msra.mxu0 0.0
    %1968 = vmatprep.subr.mxu0 0.0
    %1969 = vmatpush2.msra.mxu0 0.0
    %1970 = vmatprep.subr.mxu0 0.0
    %1971 = vmatpush2.msra.mxu0 0.0
    %1972 = vmatprep.subr.mxu0 0.0
    %1973 = vmatpush2.msra.mxu0 0.0
    %1974 = vmatprep.subr.mxu0 0.0
    %1975 = vmatpush2.msra.mxu0 0.0
    %1976 = vmatprep.subr.mxu0 0.0
    %1977 = vmatpush2.msra.mxu0 0.0
    %1978 = vmatprep.subr.mxu0 0.0
    %1979 = vmatpush2.msra.mxu0 0.0
    %1980 = vmatprep.subr.mxu0 0.0
    %1981 = vmatpush2.msra.mxu0 0.0
    %1982 = vmatprep.mubr.f32.mxu0 0.0
    %1983 = vmatmul.mubr.f32.gmra.mxu0 %v1916
    %v1984 = vpop.f32.mrf.mxu0
    %v1985 = vadd.f32 0.0, %v1984
    %v1986 = vpop.f32.mrf.mxu0
    %1987 = vdwg.mxu0
    %v1988 = vadd.f32 %v1913, %v1985
    %v1989 = vadd.f32 %v1988, %v320
    %v1990 = vxor.u32 %v1989, 2147483648
    %v1991 = vmul.f32 %v1990, 1.442695
    %v1992 = vpow.pop %v1991
    %v1993 = vadd.f32 %v1992, 1.0
    %v1994 = vrcp.pop %v1993
    %v1995 = vmul.f32 1.0, %v1994
    %v1996 = vadd.f32 %v1913, %v591
    %v1997 = vadd.f32 %v1985, %v600
    %1999 = vrot.lane.b32.xlu0 %v1997, 64
    %v2000 = vpop.permute.xlu0 %1999
    %v2002 = vmul.f32 %v1995, %v2000
    %2004 = vrot.lane.b32.xlu0 %v2002, 64
    %v2005 = vpop.permute.xlu0 %2004
    %v2007 = vadd.f32 %v1996, %v2005
    %v2008 = vtanh.pop %v2007
    %v2009 = vsub.f32 1.0, %v1995
    %2011 = vrot.lane.b32.xlu0 %v2008, 96
    %v2012 = vpop.permute.xlu0 %2011
    %v2014 = vmul.f32 %v2009, %v2012
    %v2015 = vmul.f32 %v1995, %v1737
    %v2016 = vadd.f32 %v2014, %v2015
    %2018 = vrot.lane.b32.xlu0 %v2016, 96
    %v2019 = vpop.permute.xlu0 %2018
    %2021 = vst.msk [vmem:[#allocation5 + $0x5] sm:$0x1] %vm79, %v2019
    %v2022 = vld [vmem:[#allocation4 + $0x6] sm:$0x1]
    %2023 = vmatprep.subr.mxu0 0.0
    %2024 = vmatpush1.msra.mxu0 0.0
    %2025 = vmatprep.subr.mxu0 0.0
    %2026 = vmatpush1.msra.mxu0 0.0
    %2027 = vmatprep.subr.mxu0 0.0
    %2028 = vmatpush1.msra.mxu0 0.0
    %2029 = vmatprep.subr.mxu0 0.0
    %2030 = vmatpush1.msra.mxu0 0.0
    %2031 = vmatprep.subr.mxu0 0.0
    %2032 = vmatpush1.msra.mxu0 0.0
    %2033 = vmatprep.subr.mxu0 0.0
    %2034 = vmatpush1.msra.mxu0 0.0
    %2035 = vmatprep.subr.mxu0 0.0
    %2036 = vmatpush1.msra.mxu0 0.0
    %2037 = vmatprep.subr.mxu0 0.0
    %2038 = vmatpush1.msra.mxu0 0.0
    %2039 = vmatprep.subr.mxu0 0.0
    %2040 = vmatpush1.msra.mxu0 0.0
    %2041 = vmatprep.subr.mxu0 0.0
    %2042 = vmatpush1.msra.mxu0 0.0
    %2043 = vmatprep.subr.mxu0 0.0
    %2044 = vmatpush1.msra.mxu0 0.0
    %2045 = vmatprep.subr.mxu0 0.0
    %2046 = vmatpush1.msra.mxu0 0.0
    %2047 = vmatprep.subr.mxu0 0.0
    %2048 = vmatpush1.msra.mxu0 %v310
    %2049 = vmatprep.subr.mxu0 0.0
    %2050 = vmatpush1.msra.mxu0 %v309
    %2051 = vmatprep.subr.mxu0 0.0
    %2052 = vmatpush1.msra.mxu0 %v308
    %2053 = vmatprep.subr.mxu0 0.0
    %2054 = vmatpush1.msra.mxu0 %v307
    %2055 = vmatprep.subr.mxu0 0.0
    %2056 = vmatpush2.msra.mxu0 0.0
    %2057 = vmatprep.subr.mxu0 0.0
    %2058 = vmatpush2.msra.mxu0 0.0
    %2059 = vmatprep.subr.mxu0 0.0
    %2060 = vmatpush2.msra.mxu0 0.0
    %2061 = vmatprep.subr.mxu0 0.0
    %2062 = vmatpush2.msra.mxu0 0.0
    %2063 = vmatprep.subr.mxu0 0.0
    %2064 = vmatpush2.msra.mxu0 0.0
    %2065 = vmatprep.subr.mxu0 0.0
    %2066 = vmatpush2.msra.mxu0 0.0
    %2067 = vmatprep.subr.mxu0 0.0
    %2068 = vmatpush2.msra.mxu0 0.0
    %2069 = vmatprep.subr.mxu0 0.0
    %2070 = vmatpush2.msra.mxu0 0.0
    %2071 = vmatprep.subr.mxu0 0.0
    %2072 = vmatpush2.msra.mxu0 0.0
    %2073 = vmatprep.subr.mxu0 0.0
    %2074 = vmatpush2.msra.mxu0 0.0
    %2075 = vmatprep.subr.mxu0 0.0
    %2076 = vmatpush2.msra.mxu0 0.0
    %2077 = vmatprep.subr.mxu0 0.0
    %2078 = vmatpush2.msra.mxu0 0.0
    %2079 = vmatprep.subr.mxu0 0.0
    %2080 = vmatpush2.msra.mxu0 0.0
    %2081 = vmatprep.subr.mxu0 0.0
    %2082 = vmatpush2.msra.mxu0 0.0
    %2083 = vmatprep.subr.mxu0 0.0
    %2084 = vmatpush2.msra.mxu0 0.0
    %2085 = vmatprep.subr.mxu0 0.0
    %2086 = vmatpush2.msra.mxu0 0.0
    %2087 = vmatprep.mubr.f32.mxu0 0.0
    %2088 = vmatmul.mubr.f32.gmra.mxu0 %v1844
    %v2089 = vpop.f32.mrf.mxu0
    %v2090 = vadd.f32 0.0, %v2089
    %v2091 = vpop.f32.mrf.mxu0
    %2092 = vdwg.mxu0
    %v2093 = vadd.f32 %v2022, %v2090
    %v2094 = vxor.u32 %v2093, 2147483648
    %v2095 = vmul.f32 %v2094, 1.442695
    %v2096 = vpow.pop %v2095
    %v2097 = vadd.f32 %v2096, 1.0
    %v2098 = vrcp.pop %v2097
    %v2099 = vmul.f32 1.0, %v2098
    %v2100 = vadd.f32 %v2090, %v410
    %2102 = vrot.lane.b32.xlu0 %v2100, 64
    %v2103 = vpop.permute.xlu0 %2102
    %v2105 = vmul.f32 %v2099, %v2103
    %2107 = vrot.lane.b32.xlu0 %v2105, 64
    %v2108 = vpop.permute.xlu0 %2107
    %v2110 = vadd.f32 %v2022, %v2108
    %v2111 = vtanh.pop %v2110
    %v2112 = vsub.f32 1.0, %v2099
    %2114 = vrot.lane.b32.xlu0 %v2111, 96
    %v2115 = vpop.permute.xlu0 %2114
    %v2117 = vmul.f32 %v2112, %v2115
    %v2118 = vmul.f32 %v2099, %v1840
    %v2119 = vadd.f32 %v2117, %v2118
    %2121 = vrot.lane.b32.xlu0 %v2119, 96
    %v2122 = vpop.permute.xlu0 %2121
    %v2123 = vsel %vm150, %v2122, 0
    %2125 = vmatprep.subr.mxu0 0.0
    %2126 = vmatpush1.msra.mxu0 0.0
    %2127 = vmatprep.subr.mxu0 0.0
    %2128 = vmatpush1.msra.mxu0 0.0
    %2129 = vmatprep.subr.mxu0 0.0
    %2130 = vmatpush1.msra.mxu0 0.0
    %2131 = vmatprep.subr.mxu0 0.0
    %2132 = vmatpush1.msra.mxu0 0.0
    %2133 = vmatprep.subr.mxu0 0.0
    %2134 = vmatpush1.msra.mxu0 0.0
    %2135 = vmatprep.subr.mxu0 0.0
    %2136 = vmatpush1.msra.mxu0 0.0
    %2137 = vmatprep.subr.mxu0 0.0
    %2138 = vmatpush1.msra.mxu0 0.0
    %2139 = vmatprep.subr.mxu0 0.0
    %2140 = vmatpush1.msra.mxu0 0.0
    %2141 = vmatprep.subr.mxu0 0.0
    %2142 = vmatpush1.msra.mxu0 0.0
    %2143 = vmatprep.subr.mxu0 0.0
    %2144 = vmatpush1.msra.mxu0 0.0
    %2145 = vmatprep.subr.mxu0 0.0
    %2146 = vmatpush1.msra.mxu0 0.0
    %2147 = vmatprep.subr.mxu0 0.0
    %2148 = vmatpush1.msra.mxu0 0.0
    %2149 = vmatprep.subr.mxu0 0.0
    %2150 = vmatpush1.msra.mxu0 %v315
    %2151 = vmatprep.subr.mxu0 0.0
    %2152 = vmatpush1.msra.mxu0 %v314
    %2153 = vmatprep.subr.mxu0 0.0
    %2154 = vmatpush1.msra.mxu0 %v313
    %2155 = vmatprep.subr.mxu0 0.0
    %2156 = vmatpush1.msra.mxu0 %v312
    %2157 = vmatprep.subr.mxu0 0.0
    %2158 = vmatpush2.msra.mxu0 0.0
    %2159 = vmatprep.subr.mxu0 0.0
    %2160 = vmatpush2.msra.mxu0 0.0
    %2161 = vmatprep.subr.mxu0 0.0
    %2162 = vmatpush2.msra.mxu0 0.0
    %2163 = vmatprep.subr.mxu0 0.0
    %2164 = vmatpush2.msra.mxu0 0.0
    %2165 = vmatprep.subr.mxu0 0.0
    %2166 = vmatpush2.msra.mxu0 0.0
    %2167 = vmatprep.subr.mxu0 0.0
    %2168 = vmatpush2.msra.mxu0 0.0
    %2169 = vmatprep.subr.mxu0 0.0
    %2170 = vmatpush2.msra.mxu0 0.0
    %2171 = vmatprep.subr.mxu0 0.0
    %2172 = vmatpush2.msra.mxu0 0.0
    %2173 = vmatprep.subr.mxu0 0.0
    %2174 = vmatpush2.msra.mxu0 0.0
    %2175 = vmatprep.subr.mxu0 0.0
    %2176 = vmatpush2.msra.mxu0 0.0
    %2177 = vmatprep.subr.mxu0 0.0
    %2178 = vmatpush2.msra.mxu0 0.0
    %2179 = vmatprep.subr.mxu0 0.0
    %2180 = vmatpush2.msra.mxu0 0.0
    %2181 = vmatprep.subr.mxu0 0.0
    %2182 = vmatpush2.msra.mxu0 0.0
    %2183 = vmatprep.subr.mxu0 0.0
    %2184 = vmatpush2.msra.mxu0 0.0
    %2185 = vmatprep.subr.mxu0 0.0
    %2186 = vmatpush2.msra.mxu0 0.0
    %2187 = vmatprep.subr.mxu0 0.0
    %2188 = vmatpush2.msra.mxu0 0.0
    %2189 = vmatprep.mubr.f32.mxu0 0.0
    %2190 = vmatmul.mubr.f32.gmra.mxu0 %v2123
    %v2191 = vpop.f32.mrf.mxu0
    %v2192 = vadd.f32 0.0, %v2191
    %v2193 = vpop.f32.mrf.mxu0
    %2194 = vdwg.mxu0
    %v2195 = vsel %vm150, %v2019, 0
    %2197 = vmatprep.subr.mxu0 0.0
    %2198 = vmatpush1.msra.mxu0 0.0
    %2199 = vmatprep.subr.mxu0 0.0
    %2200 = vmatpush1.msra.mxu0 0.0
    %2201 = vmatprep.subr.mxu0 0.0
    %2202 = vmatpush1.msra.mxu0 0.0
    %2203 = vmatprep.subr.mxu0 0.0
    %2204 = vmatpush1.msra.mxu0 0.0
    %2205 = vmatprep.subr.mxu0 0.0
    %2206 = vmatpush1.msra.mxu0 0.0
    %2207 = vmatprep.subr.mxu0 0.0
    %2208 = vmatpush1.msra.mxu0 0.0
    %2209 = vmatprep.subr.mxu0 0.0
    %2210 = vmatpush1.msra.mxu0 0.0
    %2211 = vmatprep.subr.mxu0 0.0
    %2212 = vmatpush1.msra.mxu0 0.0
    %2213 = vmatprep.subr.mxu0 0.0
    %2214 = vmatpush1.msra.mxu0 0.0
    %2215 = vmatprep.subr.mxu0 0.0
    %2216 = vmatpush1.msra.mxu0 0.0
    %2217 = vmatprep.subr.mxu0 0.0
    %2218 = vmatpush1.msra.mxu0 0.0
    %2219 = vmatprep.subr.mxu0 0.0
    %2220 = vmatpush1.msra.mxu0 0.0
    %2221 = vmatprep.subr.mxu0 0.0
    %2222 = vmatpush1.msra.mxu0 %v319
    %2223 = vmatprep.subr.mxu0 0.0
    %2224 = vmatpush1.msra.mxu0 %v318
    %2225 = vmatprep.subr.mxu0 0.0
    %2226 = vmatpush1.msra.mxu0 %v317
    %2227 = vmatprep.subr.mxu0 0.0
    %2228 = vmatpush1.msra.mxu0 %v316
    %2229 = vmatprep.subr.mxu0 0.0
    %2230 = vmatpush2.msra.mxu0 0.0
    %2231 = vmatprep.subr.mxu0 0.0
    %2232 = vmatpush2.msra.mxu0 0.0
    %2233 = vmatprep.subr.mxu0 0.0
    %2234 = vmatpush2.msra.mxu0 0.0
    %2235 = vmatprep.subr.mxu0 0.0
    %2236 = vmatpush2.msra.mxu0 0.0
    %2237 = vmatprep.subr.mxu0 0.0
    %2238 = vmatpush2.msra.mxu0 0.0
    %2239 = vmatprep.subr.mxu0 0.0
    %2240 = vmatpush2.msra.mxu0 0.0
    %2241 = vmatprep.subr.mxu0 0.0
    %2242 = vmatpush2.msra.mxu0 0.0
    %2243 = vmatprep.subr.mxu0 0.0
    %2244 = vmatpush2.msra.mxu0 0.0
    %2245 = vmatprep.subr.mxu0 0.0
    %2246 = vmatpush2.msra.mxu0 0.0
    %2247 = vmatprep.subr.mxu0 0.0
    %2248 = vmatpush2.msra.mxu0 0.0
    %2249 = vmatprep.subr.mxu0 0.0
    %2250 = vmatpush2.msra.mxu0 0.0
    %2251 = vmatprep.subr.mxu0 0.0
    %2252 = vmatpush2.msra.mxu0 0.0
    %2253 = vmatprep.subr.mxu0 0.0
    %2254 = vmatpush2.msra.mxu0 0.0
    %2255 = vmatprep.subr.mxu0 0.0
    %2256 = vmatpush2.msra.mxu0 0.0
    %2257 = vmatprep.subr.mxu0 0.0
    %2258 = vmatpush2.msra.mxu0 0.0
    %2259 = vmatprep.subr.mxu0 0.0
    %2260 = vmatpush2.msra.mxu0 0.0
    %2261 = vmatprep.mubr.f32.mxu0 0.0
    %2262 = vmatmul.mubr.f32.gmra.mxu0 %v2195
    %v2263 = vpop.f32.mrf.mxu0
    %v2264 = vadd.f32 0.0, %v2263
    %v2265 = vpop.f32.mrf.mxu0
    %2266 = vdwg.mxu0
    %v2267 = vadd.f32 %v2192, %v2264
    %v2268 = vadd.f32 %v2267, %v320
    %v2269 = vxor.u32 %v2268, 2147483648
    %v2270 = vmul.f32 %v2269, 1.442695
    %v2271 = vpow.pop %v2270
    %v2272 = vadd.f32 %v2271, 1.0
    %v2273 = vrcp.pop %v2272
    %v2274 = vmul.f32 1.0, %v2273
    %v2275 = vadd.f32 %v2192, %v591
    %v2276 = vadd.f32 %v2264, %v600
    %2278 = vrot.lane.b32.xlu0 %v2276, 64
    %v2279 = vpop.permute.xlu0 %2278
    %v2281 = vmul.f32 %v2274, %v2279
    %2283 = vrot.lane.b32.xlu0 %v2281, 64
    %v2284 = vpop.permute.xlu0 %2283
    %v2286 = vadd.f32 %v2275, %v2284
    %v2287 = vtanh.pop %v2286
    %v2288 = vsub.f32 1.0, %v2274
    %2290 = vrot.lane.b32.xlu0 %v2287, 96
    %v2291 = vpop.permute.xlu0 %2290
    %v2293 = vmul.f32 %v2288, %v2291
    %v2294 = vmul.f32 %v2274, %v2016
    %v2295 = vadd.f32 %v2293, %v2294
    %2297 = vrot.lane.b32.xlu0 %v2295, 96
    %v2298 = vpop.permute.xlu0 %2297
    %2300 = vst.msk [vmem:[#allocation5 + $0x6] sm:$0x1] %vm79, %v2298
    %v2301 = vld [vmem:[#allocation4 + $0x7] sm:$0x1]
    %2302 = vmatprep.subr.mxu0 0.0
    %2303 = vmatpush1.msra.mxu0 0.0
    %2304 = vmatprep.subr.mxu0 0.0
    %2305 = vmatpush1.msra.mxu0 0.0
    %2306 = vmatprep.subr.mxu0 0.0
    %2307 = vmatpush1.msra.mxu0 0.0
    %2308 = vmatprep.subr.mxu0 0.0
    %2309 = vmatpush1.msra.mxu0 0.0
    %2310 = vmatprep.subr.mxu0 0.0
    %2311 = vmatpush1.msra.mxu0 0.0
    %2312 = vmatprep.subr.mxu0 0.0
    %2313 = vmatpush1.msra.mxu0 0.0
    %2314 = vmatprep.subr.mxu0 0.0
    %2315 = vmatpush1.msra.mxu0 0.0
    %2316 = vmatprep.subr.mxu0 0.0
    %2317 = vmatpush1.msra.mxu0 0.0
    %2318 = vmatprep.subr.mxu0 0.0
    %2319 = vmatpush1.msra.mxu0 0.0
    %2320 = vmatprep.subr.mxu0 0.0
    %2321 = vmatpush1.msra.mxu0 0.0
    %2322 = vmatprep.subr.mxu0 0.0
    %2323 = vmatpush1.msra.mxu0 0.0
    %2324 = vmatprep.subr.mxu0 0.0
    %2325 = vmatpush1.msra.mxu0 0.0
    %2326 = vmatprep.subr.mxu0 0.0
    %2327 = vmatpush1.msra.mxu0 %v310
    %2328 = vmatprep.subr.mxu0 0.0
    %2329 = vmatpush1.msra.mxu0 %v309
    %2330 = vmatprep.subr.mxu0 0.0
    %2331 = vmatpush1.msra.mxu0 %v308
    %2332 = vmatprep.subr.mxu0 0.0
    %2333 = vmatpush1.msra.mxu0 %v307
    %2334 = vmatprep.subr.mxu0 0.0
    %2335 = vmatpush2.msra.mxu0 0.0
    %2336 = vmatprep.subr.mxu0 0.0
    %2337 = vmatpush2.msra.mxu0 0.0
    %2338 = vmatprep.subr.mxu0 0.0
    %2339 = vmatpush2.msra.mxu0 0.0
    %2340 = vmatprep.subr.mxu0 0.0
    %2341 = vmatpush2.msra.mxu0 0.0
    %2342 = vmatprep.subr.mxu0 0.0
    %2343 = vmatpush2.msra.mxu0 0.0
    %2344 = vmatprep.subr.mxu0 0.0
    %2345 = vmatpush2.msra.mxu0 0.0
    %2346 = vmatprep.subr.mxu0 0.0
    %2347 = vmatpush2.msra.mxu0 0.0
    %2348 = vmatprep.subr.mxu0 0.0
    %2349 = vmatpush2.msra.mxu0 0.0
    %2350 = vmatprep.subr.mxu0 0.0
    %2351 = vmatpush2.msra.mxu0 0.0
    %2352 = vmatprep.subr.mxu0 0.0
    %2353 = vmatpush2.msra.mxu0 0.0
    %2354 = vmatprep.subr.mxu0 0.0
    %2355 = vmatpush2.msra.mxu0 0.0
    %2356 = vmatprep.subr.mxu0 0.0
    %2357 = vmatpush2.msra.mxu0 0.0
    %2358 = vmatprep.subr.mxu0 0.0
    %2359 = vmatpush2.msra.mxu0 0.0
    %2360 = vmatprep.subr.mxu0 0.0
    %2361 = vmatpush2.msra.mxu0 0.0
    %2362 = vmatprep.subr.mxu0 0.0
    %2363 = vmatpush2.msra.mxu0 0.0
    %2364 = vmatprep.subr.mxu0 0.0
    %2365 = vmatpush2.msra.mxu0 0.0
    %2366 = vmatprep.mubr.f32.mxu0 0.0
    %2367 = vmatmul.mubr.f32.gmra.mxu0 %v2123
    %v2368 = vpop.f32.mrf.mxu0
    %v2369 = vadd.f32 0.0, %v2368
    %v2370 = vpop.f32.mrf.mxu0
    %2371 = vdwg.mxu0
    %v2372 = vadd.f32 %v2301, %v2369
    %v2373 = vxor.u32 %v2372, 2147483648
    %v2374 = vmul.f32 %v2373, 1.442695
    %v2375 = vpow.pop %v2374
    %v2376 = vadd.f32 %v2375, 1.0
    %v2377 = vrcp.pop %v2376
    %v2378 = vmul.f32 1.0, %v2377
    %v2379 = vadd.f32 %v2369, %v410
    %2381 = vrot.lane.b32.xlu0 %v2379, 64
    %v2382 = vpop.permute.xlu0 %2381
    %v2384 = vmul.f32 %v2378, %v2382
    %2386 = vrot.lane.b32.xlu0 %v2384, 64
    %v2387 = vpop.permute.xlu0 %2386
    %v2389 = vadd.f32 %v2301, %v2387
    %v2390 = vtanh.pop %v2389
    %v2391 = vsub.f32 1.0, %v2378
    %2393 = vrot.lane.b32.xlu0 %v2390, 96
    %v2394 = vpop.permute.xlu0 %2393
    %v2396 = vmul.f32 %v2391, %v2394
    %v2397 = vmul.f32 %v2378, %v2119
    %v2398 = vadd.f32 %v2396, %v2397
    %2400 = vrot.lane.b32.xlu0 %v2398, 96
    %v2401 = vpop.permute.xlu0 %2400
    %v2402 = vsel %vm150, %v2401, 0
    %2404 = vmatprep.subr.mxu0 0.0
    %2405 = vmatpush1.msra.mxu0 0.0
    %2406 = vmatprep.subr.mxu0 0.0
    %2407 = vmatpush1.msra.mxu0 0.0
    %2408 = vmatprep.subr.mxu0 0.0
    %2409 = vmatpush1.msra.mxu0 0.0
    %2410 = vmatprep.subr.mxu0 0.0
    %2411 = vmatpush1.msra.mxu0 0.0
    %2412 = vmatprep.subr.mxu0 0.0
    %2413 = vmatpush1.msra.mxu0 0.0
    %2414 = vmatprep.subr.mxu0 0.0
    %2415 = vmatpush1.msra.mxu0 0.0
    %2416 = vmatprep.subr.mxu0 0.0
    %2417 = vmatpush1.msra.mxu0 0.0
    %2418 = vmatprep.subr.mxu0 0.0
    %2419 = vmatpush1.msra.mxu0 0.0
    %2420 = vmatprep.subr.mxu0 0.0
    %2421 = vmatpush1.msra.mxu0 0.0
    %2422 = vmatprep.subr.mxu0 0.0
    %2423 = vmatpush1.msra.mxu0 0.0
    %2424 = vmatprep.subr.mxu0 0.0
    %2425 = vmatpush1.msra.mxu0 0.0
    %2426 = vmatprep.subr.mxu0 0.0
    %2427 = vmatpush1.msra.mxu0 0.0
    %2428 = vmatprep.subr.mxu0 0.0
    %2429 = vmatpush1.msra.mxu0 %v315
    %2430 = vmatprep.subr.mxu0 0.0
    %2431 = vmatpush1.msra.mxu0 %v314
    %2432 = vmatprep.subr.mxu0 0.0
    %2433 = vmatpush1.msra.mxu0 %v313
    %2434 = vmatprep.subr.mxu0 0.0
    %2435 = vmatpush1.msra.mxu0 %v312
    %2436 = vmatprep.subr.mxu0 0.0
    %2437 = vmatpush2.msra.mxu0 0.0
    %2438 = vmatprep.subr.mxu0 0.0
    %2439 = vmatpush2.msra.mxu0 0.0
    %2440 = vmatprep.subr.mxu0 0.0
    %2441 = vmatpush2.msra.mxu0 0.0
    %2442 = vmatprep.subr.mxu0 0.0
    %2443 = vmatpush2.msra.mxu0 0.0
    %2444 = vmatprep.subr.mxu0 0.0
    %2445 = vmatpush2.msra.mxu0 0.0
    %2446 = vmatprep.subr.mxu0 0.0
    %2447 = vmatpush2.msra.mxu0 0.0
    %2448 = vmatprep.subr.mxu0 0.0
    %2449 = vmatpush2.msra.mxu0 0.0
    %2450 = vmatprep.subr.mxu0 0.0
    %2451 = vmatpush2.msra.mxu0 0.0
    %2452 = vmatprep.subr.mxu0 0.0
    %2453 = vmatpush2.msra.mxu0 0.0
    %2454 = vmatprep.subr.mxu0 0.0
    %2455 = vmatpush2.msra.mxu0 0.0
    %2456 = vmatprep.subr.mxu0 0.0
    %2457 = vmatpush2.msra.mxu0 0.0
    %2458 = vmatprep.subr.mxu0 0.0
    %2459 = vmatpush2.msra.mxu0 0.0
    %2460 = vmatprep.subr.mxu0 0.0
    %2461 = vmatpush2.msra.mxu0 0.0
    %2462 = vmatprep.subr.mxu0 0.0
    %2463 = vmatpush2.msra.mxu0 0.0
    %2464 = vmatprep.subr.mxu0 0.0
    %2465 = vmatpush2.msra.mxu0 0.0
    %2466 = vmatprep.subr.mxu0 0.0
    %2467 = vmatpush2.msra.mxu0 0.0
    %2468 = vmatprep.mubr.f32.mxu0 0.0
    %2469 = vmatmul.mubr.f32.gmra.mxu0 %v2402
    %v2470 = vpop.f32.mrf.mxu0
    %v2471 = vadd.f32 0.0, %v2470
    %v2472 = vpop.f32.mrf.mxu0
    %2473 = vdwg.mxu0
    %v2474 = vsel %vm150, %v2298, 0
    %2476 = vmatprep.subr.mxu0 0.0
    %2477 = vmatpush1.msra.mxu0 0.0
    %2478 = vmatprep.subr.mxu0 0.0
    %2479 = vmatpush1.msra.mxu0 0.0
    %2480 = vmatprep.subr.mxu0 0.0
    %2481 = vmatpush1.msra.mxu0 0.0
    %2482 = vmatprep.subr.mxu0 0.0
    %2483 = vmatpush1.msra.mxu0 0.0
    %2484 = vmatprep.subr.mxu0 0.0
    %2485 = vmatpush1.msra.mxu0 0.0
    %2486 = vmatprep.subr.mxu0 0.0
    %2487 = vmatpush1.msra.mxu0 0.0
    %2488 = vmatprep.subr.mxu0 0.0
    %2489 = vmatpush1.msra.mxu0 0.0
    %2490 = vmatprep.subr.mxu0 0.0
    %2491 = vmatpush1.msra.mxu0 0.0
    %2492 = vmatprep.subr.mxu0 0.0
    %2493 = vmatpush1.msra.mxu0 0.0
    %2494 = vmatprep.subr.mxu0 0.0
    %2495 = vmatpush1.msra.mxu0 0.0
    %2496 = vmatprep.subr.mxu0 0.0
    %2497 = vmatpush1.msra.mxu0 0.0
    %2498 = vmatprep.subr.mxu0 0.0
    %2499 = vmatpush1.msra.mxu0 0.0
    %2500 = vmatprep.subr.mxu0 0.0
    %2501 = vmatpush1.msra.mxu0 %v319
    %2502 = vmatprep.subr.mxu0 0.0
    %2503 = vmatpush1.msra.mxu0 %v318
    %2504 = vmatprep.subr.mxu0 0.0
    %2505 = vmatpush1.msra.mxu0 %v317
    %2506 = vmatprep.subr.mxu0 0.0
    %2507 = vmatpush1.msra.mxu0 %v316
    %2508 = vmatprep.subr.mxu0 0.0
    %2509 = vmatpush2.msra.mxu0 0.0
    %2510 = vmatprep.subr.mxu0 0.0
    %2511 = vmatpush2.msra.mxu0 0.0
    %2512 = vmatprep.subr.mxu0 0.0
    %2513 = vmatpush2.msra.mxu0 0.0
    %2514 = vmatprep.subr.mxu0 0.0
    %2515 = vmatpush2.msra.mxu0 0.0
    %2516 = vmatprep.subr.mxu0 0.0
    %2517 = vmatpush2.msra.mxu0 0.0
    %2518 = vmatprep.subr.mxu0 0.0
    %2519 = vmatpush2.msra.mxu0 0.0
    %2520 = vmatprep.subr.mxu0 0.0
    %2521 = vmatpush2.msra.mxu0 0.0
    %2522 = vmatprep.subr.mxu0 0.0
    %2523 = vmatpush2.msra.mxu0 0.0
    %2524 = vmatprep.subr.mxu0 0.0
    %2525 = vmatpush2.msra.mxu0 0.0
    %2526 = vmatprep.subr.mxu0 0.0
    %2527 = vmatpush2.msra.mxu0 0.0
    %2528 = vmatprep.subr.mxu0 0.0
    %2529 = vmatpush2.msra.mxu0 0.0
    %2530 = vmatprep.subr.mxu0 0.0
    %2531 = vmatpush2.msra.mxu0 0.0
    %2532 = vmatprep.subr.mxu0 0.0
    %2533 = vmatpush2.msra.mxu0 0.0
    %2534 = vmatprep.subr.mxu0 0.0
    %2535 = vmatpush2.msra.mxu0 0.0
    %2536 = vmatprep.subr.mxu0 0.0
    %2537 = vmatpush2.msra.mxu0 0.0
    %2538 = vmatprep.subr.mxu0 0.0
    %2539 = vmatpush2.msra.mxu0 0.0
    %2540 = vmatprep.mubr.f32.mxu0 0.0
    %2541 = vmatmul.mubr.f32.gmra.mxu0 %v2474
    %v2542 = vpop.f32.mrf.mxu0
    %v2543 = vadd.f32 0.0, %v2542
    %v2544 = vpop.f32.mrf.mxu0
    %2545 = vdwg.mxu0
    %v2546 = vadd.f32 %v2471, %v2543
    %v2547 = vadd.f32 %v2546, %v320
    %v2548 = vxor.u32 %v2547, 2147483648
    %v2549 = vmul.f32 %v2548, 1.442695
    %v2550 = vpow.pop %v2549
    %v2551 = vadd.f32 %v2550, 1.0
    %v2552 = vrcp.pop %v2551
    %v2553 = vmul.f32 1.0, %v2552
    %v2554 = vadd.f32 %v2471, %v591
    %v2555 = vadd.f32 %v2543, %v600
    %2557 = vrot.lane.b32.xlu0 %v2555, 64
    %v2558 = vpop.permute.xlu0 %2557
    %v2560 = vmul.f32 %v2553, %v2558
    %2562 = vrot.lane.b32.xlu0 %v2560, 64
    %v2563 = vpop.permute.xlu0 %2562
    %v2565 = vadd.f32 %v2554, %v2563
    %v2566 = vtanh.pop %v2565
    %v2567 = vsub.f32 1.0, %v2553
    %2569 = vrot.lane.b32.xlu0 %v2566, 96
    %v2570 = vpop.permute.xlu0 %2569
    %v2572 = vmul.f32 %v2567, %v2570
    %v2573 = vmul.f32 %v2553, %v2295
    %v2574 = vadd.f32 %v2572, %v2573
    %2576 = vrot.lane.b32.xlu0 %v2574, 96
    %v2577 = vpop.permute.xlu0 %2576
    %2579 = vst.msk [vmem:[#allocation5 + $0x7] sm:$0x1] %vm79, %v2577
    %v2580 = vld [vmem:[#allocation5] sm:$0xff]
    %v2581 = vld [vmem:[%s13] sm:$0xff]
    %v2582 = vld [vmem:[%s13 + $0x8] sm:$0xff]
    %v2583 = vld [vmem:[%s13 + $0x10] sm:$0xff]
    %v2584 = vld [vmem:[%s13 + $0x18] sm:$0xff]
    %v2585 = vld [vmem:[%s14] sm:$0x1]
    %v2587 = vlaneseq
    %v2588 = vshrl.u32 %v2587, 7
    %v2589 = vsub.s32 0, %v2588
    %v2590 = vrot.slane %v2585, %v2589
    %v2593 = vsel %vm150, %v2580, 0
    %2595 = vmatprep.subr.mxu0 0.0
    %2596 = vmatpush1.msra.mxu0 0.0
    %2597 = vmatprep.subr.mxu0 0.0
    %2598 = vmatpush1.msra.mxu0 0.0
    %2599 = vmatprep.subr.mxu0 0.0
    %2600 = vmatpush1.msra.mxu0 0.0
    %2601 = vmatprep.subr.mxu0 0.0
    %2602 = vmatpush1.msra.mxu0 0.0
    %2603 = vmatprep.subr.mxu0 0.0
    %2604 = vmatpush1.msra.mxu0 0.0
    %2605 = vmatprep.subr.mxu0 0.0
    %2606 = vmatpush1.msra.mxu0 0.0
    %2607 = vmatprep.subr.mxu0 0.0
    %2608 = vmatpush1.msra.mxu0 0.0
    %2609 = vmatprep.subr.mxu0 0.0
    %2610 = vmatpush1.msra.mxu0 0.0
    %2611 = vmatprep.subr.mxu0 0.0
    %2612 = vmatpush1.msra.mxu0 0.0
    %2613 = vmatprep.subr.mxu0 0.0
    %2614 = vmatpush1.msra.mxu0 0.0
    %2615 = vmatprep.subr.mxu0 0.0
    %2616 = vmatpush1.msra.mxu0 0.0
    %2617 = vmatprep.subr.mxu0 0.0
    %2618 = vmatpush1.msra.mxu0 0.0
    %2619 = vmatprep.subr.mxu0 0.0
    %2620 = vmatpush1.msra.mxu0 %v2584
    %2621 = vmatprep.subr.mxu0 0.0
    %2622 = vmatpush1.msra.mxu0 %v2583
    %2623 = vmatprep.subr.mxu0 0.0
    %2624 = vmatpush1.msra.mxu0 %v2582
    %2625 = vmatprep.subr.mxu0 0.0
    %2626 = vmatpush1.msra.mxu0 %v2581
    %2627 = vmatprep.subr.mxu0 0.0
    %2628 = vmatpush2.msra.mxu0 0.0
    %2629 = vmatprep.subr.mxu0 0.0
    %2630 = vmatpush2.msra.mxu0 0.0
    %2631 = vmatprep.subr.mxu0 0.0
    %2632 = vmatpush2.msra.mxu0 0.0
    %2633 = vmatprep.subr.mxu0 0.0
    %2634 = vmatpush2.msra.mxu0 0.0
    %2635 = vmatprep.subr.mxu0 0.0
    %2636 = vmatpush2.msra.mxu0 0.0
    %2637 = vmatprep.subr.mxu0 0.0
    %2638 = vmatpush2.msra.mxu0 0.0
    %2639 = vmatprep.subr.mxu0 0.0
    %2640 = vmatpush2.msra.mxu0 0.0
    %2641 = vmatprep.subr.mxu0 0.0
    %2642 = vmatpush2.msra.mxu0 0.0
    %2643 = vmatprep.subr.mxu0 0.0
    %2644 = vmatpush2.msra.mxu0 0.0
    %2645 = vmatprep.subr.mxu0 0.0
    %2646 = vmatpush2.msra.mxu0 0.0
    %2647 = vmatprep.subr.mxu0 0.0
    %2648 = vmatpush2.msra.mxu0 0.0
    %2649 = vmatprep.subr.mxu0 0.0
    %2650 = vmatpush2.msra.mxu0 0.0
    %2651 = vmatprep.subr.mxu0 0.0
    %2652 = vmatpush2.msra.mxu0 0.0
    %2653 = vmatprep.subr.mxu0 0.0
    %2654 = vmatpush2.msra.mxu0 0.0
    %2655 = vmatprep.subr.mxu0 0.0
    %2656 = vmatpush2.msra.mxu0 0.0
    %2657 = vmatprep.subr.mxu0 0.0
    %2658 = vmatpush2.msra.mxu0 0.0
    %2659 = vmatprep.mubr.f32.mxu0 0.0
    %2660 = vmatmul.mubr.f32.gmra.mxu0 %v2593
    %v2661 = vpop.f32.mrf.mxu0
    %v2662 = vadd.f32 %v2590, %v2661
    %v2663 = vpop.f32.mrf.mxu0
    %2664 = vdwg.mxu0
    %vm2665 = vcmask 15360
    %v2666 = vsel %vm2665, %v2662, -inf
    %2667 = vmax.xlane.f32.xlu0 %v2666
    %v2668 = vpop.xlane.xlu0 %2667
    %v2669 = vsub.f32 %v2662, %v2668
    %v2670 = vmul.f32 %v2669, 1.442695
    %v2671 = vpow.pop %v2670
    %v2672 = vsel %vm2665, %v2671, 0.0
    %2673 = vadd.xlane.f32.xlu0 %v2672
    %v2674 = vpop.xlane.xlu0 %2673
    %v2675 = vlog2.pop %v2674
    %v2676 = vmul.f32 %v2675, 0.6931472
    %v2677 = vadd.f32 %v2668, %v2676
    %v2678 = vsub.f32 %v2662, %v2677
    %2679 = vst.msk [vmem:[%s15] sm:$0xff] %vm2665, %v2678
    // Predicated region
    $region70: #{tpu_custom_call.1} parent=1 // pred_check
      _
    $region71: #{tpu_custom_call.1} parent=1 // pred_check_branch
      %2681 = sbr.rel (0) target = $region73
    $region72: #{tpu_custom_call.1} parent=1 // pred_region
      _
    $region73: #{tpu_custom_call.1} parent=1 // pred_fallthru
      _
    // Predicated region
    $region74: #{tpu_custom_call.1} parent=1 // pred_check
      _
    $region75: #{tpu_custom_call.1} parent=1 // pred_check_branch
      %2683 = sbr.rel (0) target = $region77
    $region76: #{tpu_custom_call.1} parent=1 // pred_region
      _
    $region77: #{tpu_custom_call.1} parent=1 // pred_fallthru
      _
    %2684 = vsyncpa [#allocation7], 1
    %2685 = vsyncpa [#allocation9], 1

</llo_original>
